<compile_context>
chip_gen: v7x
topology: tpu7x:2x2x1
jax: 0.10.0
libtpu: 0.0.40
codegen_flags: <defaults>
</compile_context>

<pallas_src>
import functools

import jax
import jax.numpy as jnp
from jax.experimental import pallas as pl
from jax.experimental.pallas import tpu as pltpu


def residual_kernel(x_ref, y_ref, w_in_ref, b_in_ref, gamma_ref, beta_ref,
                    w1_ref, b1_ref, w2_ref, b2_ref, out_ref,
                    x1_scr, h_scr, acc_scr):
    """Grid = (row blocks, hidden chunks); hidden-chunk axis is last/'arbitrary'."""
    f32 = jnp.float32
    hk = pl.program_id(1)

    @pl.when(hk == 0)
    def _init():
        # x1 = x + in_proj(y)   (dropout with p = 0 is identity)
        x1 = (x_ref[...].astype(f32)
              + jnp.dot(y_ref[...], w_in_ref[...], preferred_element_type=f32)
              + b_in_ref[...].astype(f32))

        # LayerNorm, eps = 1e-5 (PyTorch default). One-pass stats: E[x] and
        # E[x^2] are two independent cross-lane reductions (f32 throughout).
        inv_d = 1.0 / x1.shape[-1]
        mean = jnp.sum(x1, axis=-1, keepdims=True) * inv_d
        ex2 = jnp.sum(x1 * x1, axis=-1, keepdims=True) * inv_d
        var = ex2 - mean * mean
        h = ((x1 - mean) * jax.lax.rsqrt(var + 1e-5)
             * gamma_ref[...].astype(f32) + beta_ref[...].astype(f32))

        # Keep only what later hidden chunks need: LN output in the weight
        # dtype (native MXU operand) and a low-precision copy of x1 for the
        # final residual add.
        x1_scr[...] = x1.astype(x1_scr.dtype)
        h_scr[...] = h.astype(h_scr.dtype)
        acc_scr[...] = jnp.zeros_like(acc_scr)

    # FFN hidden chunk: relu(h @ W1_chunk + b1_chunk) @ W2_chunk, accumulated
    # in f32. relu + down-cast fused so the largest live f32 tile is
    # (tile_n, tile_h) only.
    h1 = jnp.maximum(
        jnp.dot(h_scr[...], w1_ref[...], preferred_element_type=f32)
        + b1_ref[...].astype(f32), 0.0).astype(w2_ref.dtype)
    acc_scr[...] += jnp.dot(h1, w2_ref[...], preferred_element_type=f32)

    @pl.when(hk == pl.num_programs(1) - 1)
    def _finalize():
        # TODO(synk): training-mode dropout (feat_drop > 0) not implemented.
        out_ref[...] = (x1_scr[...].astype(f32) + acc_scr[...]
                        + b2_ref[...].astype(f32)).astype(out_ref.dtype)


def _usable_vmem_bytes():
    """Per-core VMEM budget with ~25% headroom for compiler/pipeline scratch."""
    try:
        cap = int(pltpu.get_tpu_info().vmem_capacity_bytes)
    except Exception:
        cap = 64 * 1024 * 1024          # assume the smallest (v7x: 64 MiB / TC)
    return (cap * 3) // 4               # ~96 MiB on v5e/v6e, ~48 MiB on v7x


def _vmem_need_bytes(tile_n, tile_h, D, H, in_bytes, w_bytes, out_bytes):
    """Rough resident-VMEM estimate for one grid step (single-buffered params)."""
    const_params = (D * D + 4 * D) * w_bytes                  # w_in + 4 vectors
    chunk_bufs = 1 if tile_h == H else 2                      # w1/b1/w2 chunks
    chunk_params = (2 * D * tile_h + tile_h) * w_bytes * chunk_bufs
    io_blocks = 2 * tile_n * D * (2 * in_bytes + out_bytes)   # x, y, out (x2 bufs)
    scratch = tile_n * D * (out_bytes + w_bytes + 4)          # x1, h, accumulator
    live_f32 = tile_n * (tile_h + 2 * D) * 4                  # h1 / x1 temporaries
    return const_params + chunk_params + io_blocks + scratch + live_f32 + (6 << 20)


def _auto_tiles(N, D, H, in_bytes, w_bytes, out_bytes, usable_vmem):
    row_cands = [t for t in (1024, 512, 256, 128, 64, 32, 16, 8)
                 if t <= N and N % t == 0] or [N]
    # >= 4 row grid-steps (>= 2 per TensorCore on v7x) keeps the next-block DMA
    # hidden behind compute; only give that up if N is too small.
    preferred = [t for t in row_cands if N // t >= 4] or row_cands
    ordered_rows = preferred + [t for t in row_cands if t not in preferred]
    h_cands = sorted({h for h in (H, 4096, 2048, 1024, 512, 256, 128)
                      if h <= H and H % h == 0}, reverse=True)
    for tn in ordered_rows:
        for th in h_cands:
            if _vmem_need_bytes(tn, th, D, H, in_bytes, w_bytes,
                                out_bytes) <= usable_vmem:
                return tn, th
    return ordered_rows[-1], h_cands[-1]


def _build_residual_call(N, D, H, tile_n, tile_h, in_dtype, w_dtype, out_dtype,
                         vmem_limit, param_bytes, single_buffer_params):
    n_h = H // tile_h
    resident = {}
    if single_buffer_params:
        # Constant index_map -> block DMA'd once and stays resident; one buffer
        # is enough (drops the 2x VMEM reservation for parameters).
        resident = dict(pipeline_mode=pl.Buffered(buffer_count=1))
    chunked = resident if n_h == 1 else {}    # w1/b1/w2 vary across hk otherwise

    row_spec = pl.BlockSpec((tile_n, D), lambda i, hk: (i, 0))
    in_specs = [
        row_spec,                                                      # x
        row_spec,                                                      # y
        pl.BlockSpec((D, D), lambda i, hk: (0, 0), **resident),        # w_in
        pl.BlockSpec((1, D), lambda i, hk: (0, 0), **resident),        # b_in
        pl.BlockSpec((1, D), lambda i, hk: (0, 0), **resident),        # gamma
        pl.BlockSpec((1, D), lambda i, hk: (0, 0), **resident),        # beta
        pl.BlockSpec((D, tile_h), lambda i, hk: (0, hk), **chunked),   # w1
        pl.BlockSpec((1, tile_h), lambda i, hk: (0, hk), **chunked),   # b1
        pl.BlockSpec((tile_h, D), lambda i, hk: (hk, 0), **chunked),   # w2
        pl.BlockSpec((1, D), lambda i, hk: (0, 0), **resident),        # b2
    ]

    cost = pl.CostEstimate(
        flops=2 * N * D * (D + 2 * H),
        transcendentals=N,                                   # rsqrt per row
        bytes_accessed=param_bytes + 3 * N * D * jnp.dtype(in_dtype).itemsize)

    return pl.pallas_call(
        residual_kernel,
        out_shape=jax.ShapeDtypeStruct((N, D), out_dtype),
        grid_spec=pltpu.PrefetchScalarGridSpec(
            num_scalar_prefetch=0,
            grid=(N // tile_n, n_h),
            in_specs=in_specs,
            out_specs=pl.BlockSpec((tile_n, D), lambda i, hk: (i, 0)),
            scratch_shapes=[
                pltpu.VMEM((tile_n, D), out_dtype),      # x1 (residual copy)
                pltpu.VMEM((tile_n, D), w_dtype),        # LayerNorm output
                pltpu.VMEM((tile_n, D), jnp.float32),    # ffn accumulator
            ]),
        compiler_params=pltpu.CompilerParams(
            dimension_semantics=("parallel", "arbitrary"),
            vmem_limit_bytes=int(vmem_limit)),
        cost_estimate=cost,
    )


def residual_forward(x, y, params, *, tile_n=None, tile_h=None):
    """x, y: (N, D). params: dict of weights (see init_params)."""
    N, D = x.shape
    assert y.shape == (N, D)
    H = params["w1"].shape[1]

    # Lane-dense feature dims: full 128-lane vregs, unmasked stores, full MXU
    # columns.
    assert D % 128 == 0 and H % 128 == 0, "feature dims must be multiples of 128"
    # TODO(synk): padding path for D not a multiple of 128 (needs masked
    # LayerNorm statistics) not implemented.

    w_dtype = params["w1"].dtype
    in_bytes = x.dtype.itemsize
    w_bytes = jnp.dtype(w_dtype).itemsize
    usable_vmem = _usable_vmem_bytes()

    auto_tn, auto_th = _auto_tiles(N, D, H, in_bytes, w_bytes, in_bytes,
                                   usable_vmem)
    tile_n = auto_tn if tile_n is None else min(tile_n, N)
    tile_h = auto_th if tile_h is None else min(tile_h, H)
    assert N % tile_n == 0, "N must be divisible by tile_n"
    assert H % tile_h == 0 and tile_h % 128 == 0

    param_bytes = sum(int(p.size) * p.dtype.itemsize for p in params.values())
    args = (x, y, params["w_in"], params["b_in"], params["gamma"],
            params["beta"], params["w1"], params["b1"], params["w2"],
            params["b2"])
    build = functools.partial(
        _build_residual_call, N, D, H, tile_n, tile_h, x.dtype, w_dtype,
        x.dtype, usable_vmem, param_bytes)
    try:
        return build(single_buffer_params=True)(*args)
    except Exception:
        # TODO(synk): this JAX build rejected pl.Buffered(1) single-buffering of
        # the resident parameters; fall back to default double-buffering.
        return build(single_buffer_params=False)(*args)


def init_params(key, d_feats, dtype=jnp.float32):
    """Deterministic synthetic init mimicking nn.Linear/LayerNorm shapes."""
    D = d_feats
    H = 4 * D  # MLP hidden = d_out_feats * 4
    ks = jax.random.split(key, 6)
    u = lambda k, shape, fan_in: jax.random.uniform(
        k, shape, jnp.float32, -1.0 / jnp.sqrt(fan_in), 1.0 / jnp.sqrt(fan_in))
    p = {
        "w_in": u(ks[0], (D, D), D),
        "b_in": u(ks[1], (1, D), D),
        "gamma": jnp.ones((1, D), jnp.float32),
        "beta": jnp.zeros((1, D), jnp.float32),
        "w1": u(ks[2], (D, H), D),
        "b1": u(ks[3], (1, H), D),
        "w2": u(ks[4], (H, D), H),
        "b2": u(ks[5], (1, D), H),
    }
    return {k: v.astype(dtype) for k, v in p.items()}


def reference_forward(x, y, p):
    x1 = x + y @ p["w_in"] + p["b_in"]
    mean = jnp.mean(x1, axis=-1, keepdims=True)
    var = jnp.mean((x1 - mean) ** 2, axis=-1, keepdims=True)
    h = (x1 - mean) * jax.lax.rsqrt(var + 1e-5) * p["gamma"] + p["beta"]
    h1 = jnp.maximum(h @ p["w1"] + p["b1"], 0.0)
    return x1 + h1 @ p["w2"] + p["b2"]


if __name__ == "__main__":
    D = 128      # d_in_feats == d_out_feats, lane-dense (multiple of 128)
    N = 512      # tokens; auto tiling picks tile_n=128 -> 4 row grid-steps
                 # (>= 2 steps per TensorCore on v7x so block DMA overlaps MXU)

    key = jax.random.PRNGKey(0)
    kx, ky, kp = jax.random.split(key, 3)
    x = jax.random.normal(kx, (N, D), jnp.float32)
    y = jax.random.normal(ky, (N, D), jnp.float32)

    # ---- f32 run: module semantics, auto tiling ----
    params = init_params(kp, D, jnp.float32)
    ref = reference_forward(x, y, params)
    out = jax.block_until_ready(residual_forward(x, y, params))
    assert out.shape == (N, D) and out.dtype == jnp.float32
    assert jnp.allclose(out, ref, atol=1e-3, rtol=1e-3)

    # ---- f32 run, forced hidden-chunked reduction (2 chunks along H) ----
    out_hc = jax.block_until_ready(
        residual_forward(x, y, params, tile_n=128, tile_h=256))
    assert jnp.allclose(out_hc, ref, atol=1e-3, rtol=1e-3)

    # ---- bf16 run: native bf16 MXU operands, f32 accumulation (perf path) ----
    params_bf = {k: v.astype(jnp.bfloat16) for k, v in params.items()}
    x_bf, y_bf = x.astype(jnp.bfloat16), y.astype(jnp.bfloat16)
    out_bf = jax.block_until_ready(residual_forward(x_bf, y_bf, params_bf))
    ref_bf = reference_forward(
        x_bf.astype(jnp.float32), y_bf.astype(jnp.float32),
        {k: v.astype(jnp.float32) for k, v in params_bf.items()})
    rel_l2 = (jnp.linalg.norm(out_bf.astype(jnp.float32) - ref_bf)
              / jnp.linalg.norm(ref_bf))
    assert out_bf.dtype == jnp.bfloat16 and float(rel_l2) < 2e-2

    print("KERNEL_OK")
</pallas_src>

<mosaic_0001>
module attributes {stable_mosaic.version = 11 : i64} {
  func.func @residual_kernel(%arg0: i32, %arg1: i32, %arg2: memref<128x128xf32, #tpu.memory_space<vmem>>, %arg3: memref<128x128xf32, #tpu.memory_space<vmem>>, %arg4: memref<128x128xf32, #tpu.memory_space<vmem>>, %arg5: memref<1x128xf32, #tpu.memory_space<vmem>>, %arg6: memref<1x128xf32, #tpu.memory_space<vmem>>, %arg7: memref<1x128xf32, #tpu.memory_space<vmem>>, %arg8: memref<128x512xf32, #tpu.memory_space<vmem>>, %arg9: memref<1x512xf32, #tpu.memory_space<vmem>>, %arg10: memref<512x128xf32, #tpu.memory_space<vmem>>, %arg11: memref<1x128xf32, #tpu.memory_space<vmem>>, %arg12: memref<128x128xf32, #tpu.memory_space<vmem>>, %arg13: memref<128x128xf32, #tpu.memory_space<vmem>>, %arg14: memref<128x128xf32, #tpu.memory_space<vmem>>, %arg15: memref<128x128xf32, #tpu.memory_space<vmem>>) attributes {dimension_semantics = [#tpu.dimension_semantics<parallel>, #tpu.dimension_semantics<arbitrary>], iteration_bounds = array<i64: 4, 1>, scalar_prefetch = 0 : i64, scratch_operands = 3 : i64, tpu.core_type = #tpu.core_type<tc>, window_params = [{transform_indices = @transform_0, window_bounds = array<i64: 128, 128>}, {transform_indices = @transform_1, window_bounds = array<i64: 128, 128>}, {pipeline_mode = #tpu.pipeline_mode<synchronous>, transform_indices = @transform_2, window_bounds = array<i64: 128, 128>}, {pipeline_mode = #tpu.pipeline_mode<synchronous>, transform_indices = @transform_3, window_bounds = array<i64: 1, 128>}, {pipeline_mode = #tpu.pipeline_mode<synchronous>, transform_indices = @transform_4, window_bounds = array<i64: 1, 128>}, {pipeline_mode = #tpu.pipeline_mode<synchronous>, transform_indices = @transform_5, window_bounds = array<i64: 1, 128>}, {pipeline_mode = #tpu.pipeline_mode<synchronous>, transform_indices = @transform_6, window_bounds = array<i64: 128, 512>}, {pipeline_mode = #tpu.pipeline_mode<synchronous>, transform_indices = @transform_7, window_bounds = array<i64: 1, 512>}, {pipeline_mode = #tpu.pipeline_mode<synchronous>, transform_indices = @transform_8, window_bounds = array<i64: 512, 128>}, {pipeline_mode = #tpu.pipeline_mode<synchronous>, transform_indices = @transform_9, window_bounds = array<i64: 1, 128>}, {transform_indices = @transform_10, window_bounds = array<i64: 128, 128>}]} {
    %c0_i32 = arith.constant 0 : i32
    %0 = arith.cmpi eq, %arg1, %c0_i32 : i32
    %1 = arith.extui %0 : i1 to i32
    %c0_i32_0 = arith.constant 0 : i32
    %2 = arith.cmpi ne, %1, %c0_i32_0 : i32
    scf.if %2 {
      %c0_16 = arith.constant 0 : index
      %c0_17 = arith.constant 0 : index
      %19 = vector.load %arg2[%c0_16, %c0_17] : memref<128x128xf32, #tpu.memory_space<vmem>>, vector<128x128xf32>
      %c0_18 = arith.constant 0 : index
      %c0_19 = arith.constant 0 : index
      %20 = vector.load %arg3[%c0_18, %c0_19] : memref<128x128xf32, #tpu.memory_space<vmem>>, vector<128x128xf32>
      %c0_20 = arith.constant 0 : index
      %c0_21 = arith.constant 0 : index
      %21 = vector.load %arg4[%c0_20, %c0_21] : memref<128x128xf32, #tpu.memory_space<vmem>>, vector<128x128xf32>
      %cst_22 = arith.constant dense<0.000000e+00> : vector<128x128xf32>
      %22 = tpu.matmul %20, %21, %cst_22 {dimension_numbers = #tpu.dot_dimension_numbers<[1], [0], [0], [1], [0, 0, 1, 1], [], []>} : vector<128x128xf32>, vector<128x128xf32>, vector<128x128xf32> -> vector<128x128xf32>
      %23 = arith.addf %19, %22 : vector<128x128xf32>
      %c0_23 = arith.constant 0 : index
      %c0_24 = arith.constant 0 : index
      %24 = vector.load %arg5[%c0_23, %c0_24] : memref<1x128xf32, #tpu.memory_space<vmem>>, vector<1x128xf32>
      %25 = vector.broadcast %24 : vector<1x128xf32> to vector<128x128xf32>
      %26 = arith.addf %23, %25 : vector<128x128xf32>
      %cst_25 = arith.constant dense<0.000000e+00> : vector<128xf32>
      %27 = vector.multi_reduction <add>, %26, %cst_25 [1] : vector<128x128xf32> to vector<128xf32>
      %28 = vector.shape_cast %27 : vector<128xf32> to vector<128x1xf32>
      %cst_26 = arith.constant 7.812500e-03 : f32
      %29 = vector.broadcast %cst_26 : f32 to vector<128x1xf32>
      %30 = arith.mulf %28, %29 : vector<128x1xf32>
      %31 = arith.mulf %26, %26 : vector<128x128xf32>
      %cst_27 = arith.constant dense<0.000000e+00> : vector<128xf32>
      %32 = vector.multi_reduction <add>, %31, %cst_27 [1] : vector<128x128xf32> to vector<128xf32>
      %33 = vector.shape_cast %32 : vector<128xf32> to vector<128x1xf32>
      %cst_28 = arith.constant 7.812500e-03 : f32
      %34 = vector.broadcast %cst_28 : f32 to vector<128x1xf32>
      %35 = arith.mulf %33, %34 : vector<128x1xf32>
      %36 = arith.mulf %30, %30 : vector<128x1xf32>
      %37 = arith.subf %35, %36 : vector<128x1xf32>
      %38 = vector.broadcast %30 : vector<128x1xf32> to vector<128x128xf32>
      %39 = arith.subf %26, %38 : vector<128x128xf32>
      %cst_29 = arith.constant 9.99999974E-6 : f32
      %40 = vector.broadcast %cst_29 : f32 to vector<128x1xf32>
      %41 = arith.addf %37, %40 : vector<128x1xf32>
      %42 = math.rsqrt %41 : vector<128x1xf32>
      %43 = vector.broadcast %42 : vector<128x1xf32> to vector<128x128xf32>
      %44 = arith.mulf %39, %43 : vector<128x128xf32>
      %c0_30 = arith.constant 0 : index
      %c0_31 = arith.constant 0 : index
      %45 = vector.load %arg6[%c0_30, %c0_31] : memref<1x128xf32, #tpu.memory_space<vmem>>, vector<1x128xf32>
      %46 = vector.broadcast %45 : vector<1x128xf32> to vector<128x128xf32>
      %47 = arith.mulf %44, %46 : vector<128x128xf32>
      %c0_32 = arith.constant 0 : index
      %c0_33 = arith.constant 0 : index
      %48 = vector.load %arg7[%c0_32, %c0_33] : memref<1x128xf32, #tpu.memory_space<vmem>>, vector<1x128xf32>
      %49 = vector.broadcast %48 : vector<1x128xf32> to vector<128x128xf32>
      %50 = arith.addf %47, %49 : vector<128x128xf32>
      %c0_34 = arith.constant 0 : index
      %c0_35 = arith.constant 0 : index
      %51 = vector.load %arg13[%c0_34, %c0_35] : memref<128x128xf32, #tpu.memory_space<vmem>>, vector<128x128xf32>
      tpu.vector_store %arg13[%c0_34, %c0_35], %26 {strides = array<i32>} : memref<128x128xf32, #tpu.memory_space<vmem>>, vector<128x128xf32>,
      %c0_36 = arith.constant 0 : index
      %c0_37 = arith.constant 0 : index
      %52 = vector.load %arg14[%c0_36, %c0_37] : memref<128x128xf32, #tpu.memory_space<vmem>>, vector<128x128xf32>
      tpu.vector_store %arg14[%c0_36, %c0_37], %50 {strides = array<i32>} : memref<128x128xf32, #tpu.memory_space<vmem>>, vector<128x128xf32>,
      %cst_38 = arith.constant 0.000000e+00 : f32
      %53 = vector.broadcast %cst_38 : f32 to vector<128x128xf32>
      %c0_39 = arith.constant 0 : index
      %c0_40 = arith.constant 0 : index
      %54 = vector.load %arg15[%c0_39, %c0_40] : memref<128x128xf32, #tpu.memory_space<vmem>>, vector<128x128xf32>
      tpu.vector_store %arg15[%c0_39, %c0_40], %53 {strides = array<i32>} : memref<128x128xf32, #tpu.memory_space<vmem>>, vector<128x128xf32>,
    } else {
    }
    %c0 = arith.constant 0 : index
    %c0_1 = arith.constant 0 : index
    %3 = vector.load %arg14[%c0, %c0_1] : memref<128x128xf32, #tpu.memory_space<vmem>>, vector<128x128xf32>
    %c0_2 = arith.constant 0 : index
    %c0_3 = arith.constant 0 : index
    %4 = vector.load %arg8[%c0_2, %c0_3] : memref<128x512xf32, #tpu.memory_space<vmem>>, vector<128x512xf32>
    %cst = arith.constant dense<0.000000e+00> : vector<128x512xf32>
    %5 = tpu.matmul %3, %4, %cst {dimension_numbers = #tpu.dot_dimension_numbers<[1], [0], [0], [1], [0, 0, 1, 1], [], []>} : vector<128x128xf32>, vector<128x512xf32>, vector<128x512xf32> -> vector<128x512xf32>
    %c0_4 = arith.constant 0 : index
    %c0_5 = arith.constant 0 : index
    %6 = vector.load %arg9[%c0_4, %c0_5] : memref<1x512xf32, #tpu.memory_space<vmem>>, vector<1x512xf32>
    %7 = vector.broadcast %6 : vector<1x512xf32> to vector<128x512xf32>
    %8 = arith.addf %5, %7 : vector<128x512xf32>
    %cst_6 = arith.constant 0.000000e+00 : f32
    %9 = vector.broadcast %cst_6 : f32 to vector<128x512xf32>
    %10 = arith.maximumf %8, %9 : vector<128x512xf32>
    %c0_7 = arith.constant 0 : index
    %c0_8 = arith.constant 0 : index
    %11 = vector.load %arg15[%c0_7, %c0_8] : memref<128x128xf32, #tpu.memory_space<vmem>>, vector<128x128xf32>
    %c0_9 = arith.constant 0 : index
    %c0_10 = arith.constant 0 : index
    %12 = vector.load %arg10[%c0_9, %c0_10] : memref<512x128xf32, #tpu.memory_space<vmem>>, vector<512x128xf32>
    %cst_11 = arith.constant dense<0.000000e+00> : vector<128x128xf32>
    %13 = tpu.matmul %10, %12, %cst_11 {dimension_numbers = #tpu.dot_dimension_numbers<[1], [0], [0], [1], [0, 0, 1, 1], [], []>} : vector<128x512xf32>, vector<512x128xf32>, vector<128x128xf32> -> vector<128x128xf32>
    %14 = arith.addf %11, %13 : vector<128x128xf32>
    %c0_12 = arith.constant 0 : index
    %c0_13 = arith.constant 0 : index
    %15 = vector.load %arg15[%c0_12, %c0_13] : memref<128x128xf32, #tpu.memory_space<vmem>>, vector<128x128xf32>
    tpu.vector_store %arg15[%c0_12, %c0_13], %14 {strides = array<i32>} : memref<128x128xf32, #tpu.memory_space<vmem>>, vector<128x128xf32>,
    %c0_i32_14 = arith.constant 0 : i32
    %16 = arith.cmpi eq, %arg1, %c0_i32_14 : i32
    %17 = arith.extui %16 : i1 to i32
    %c0_i32_15 = arith.constant 0 : i32
    %18 = arith.cmpi ne, %17, %c0_i32_15 : i32
    scf.if %18 {
      %c0_16 = arith.constant 0 : index
      %c0_17 = arith.constant 0 : index
      %19 = vector.load %arg13[%c0_16, %c0_17] : memref<128x128xf32, #tpu.memory_space<vmem>>, vector<128x128xf32>
      %c0_18 = arith.constant 0 : index
      %c0_19 = arith.constant 0 : index
      %20 = vector.load %arg15[%c0_18, %c0_19] : memref<128x128xf32, #tpu.memory_space<vmem>>, vector<128x128xf32>
      %21 = arith.addf %19, %20 : vector<128x128xf32>
      %c0_20 = arith.constant 0 : index
      %c0_21 = arith.constant 0 : index
      %22 = vector.load %arg11[%c0_20, %c0_21] : memref<1x128xf32, #tpu.memory_space<vmem>>, vector<1x128xf32>
      %23 = vector.broadcast %22 : vector<1x128xf32> to vector<128x128xf32>
      %24 = arith.addf %21, %23 : vector<128x128xf32>
      %c0_22 = arith.constant 0 : index
      %c0_23 = arith.constant 0 : index
      %25 = vector.load %arg12[%c0_22, %c0_23] : memref<128x128xf32, #tpu.memory_space<vmem>>, vector<128x128xf32>
      tpu.vector_store %arg12[%c0_22, %c0_23], %24 {strides = array<i32>} : memref<128x128xf32, #tpu.memory_space<vmem>>, vector<128x128xf32>,
    } else {
    }
    return
  }
  func.func @transform_0(%arg0: i32, %arg1: i32) -> (i32, i32) {
    %c0_i32 = arith.constant 0 : i32
    %c0_i32_0 = arith.constant 0 : i32
    return %arg0, %c0_i32 : i32, i32
  }
  func.func @transform_1(%arg0: i32, %arg1: i32) -> (i32, i32) {
    %c0_i32 = arith.constant 0 : i32
    %c0_i32_0 = arith.constant 0 : i32
    return %arg0, %c0_i32 : i32, i32
  }
  func.func @transform_2(%arg0: i32, %arg1: i32) -> (i32, i32) {
    %c0_i32 = arith.constant 0 : i32
    %c0_i32_0 = arith.constant 0 : i32
    %c0_i32_1 = arith.constant 0 : i32
    return %c0_i32, %c0_i32_0 : i32, i32
  }
  func.func @transform_3(%arg0: i32, %arg1: i32) -> (i32, i32) {
    %c0_i32 = arith.constant 0 : i32
    %c0_i32_0 = arith.constant 0 : i32
    %c0_i32_1 = arith.constant 0 : i32
    return %c0_i32, %c0_i32_0 : i32, i32
  }
  func.func @transform_4(%arg0: i32, %arg1: i32) -> (i32, i32) {
    %c0_i32 = arith.constant 0 : i32
    %c0_i32_0 = arith.constant 0 : i32
    %c0_i32_1 = arith.constant 0 : i32
    return %c0_i32, %c0_i32_0 : i32, i32
  }
  func.func @transform_5(%arg0: i32, %arg1: i32) -> (i32, i32) {
    %c0_i32 = arith.constant 0 : i32
    %c0_i32_0 = arith.constant 0 : i32
    %c0_i32_1 = arith.constant 0 : i32
    return %c0_i32, %c0_i32_0 : i32, i32
  }
  func.func @transform_6(%arg0: i32, %arg1: i32) -> (i32, i32) {
    %c0_i32 = arith.constant 0 : i32
    %c0_i32_0 = arith.constant 0 : i32
    return %c0_i32, %arg1 : i32, i32
  }
  func.func @transform_7(%arg0: i32, %arg1: i32) -> (i32, i32) {
    %c0_i32 = arith.constant 0 : i32
    %c0_i32_0 = arith.constant 0 : i32
    return %c0_i32, %arg1 : i32, i32
  }
  func.func @transform_8(%arg0: i32, %arg1: i32) -> (i32, i32) {
    %c0_i32 = arith.constant 0 : i32
    %c0_i32_0 = arith.constant 0 : i32
    return %arg1, %c0_i32 : i32, i32
  }
  func.func @transform_9(%arg0: i32, %arg1: i32) -> (i32, i32) {
    %c0_i32 = arith.constant 0 : i32
    %c0_i32_0 = arith.constant 0 : i32
    %c0_i32_1 = arith.constant 0 : i32
    return %c0_i32, %c0_i32_0 : i32, i32
  }
  func.func @transform_10(%arg0: i32, %arg1: i32) -> (i32, i32) {
    %c0_i32 = arith.constant 0 : i32
    %c0_i32_0 = arith.constant 0 : i32
    return %arg0, %c0_i32 : i32, i32
  }
}

module attributes {stable_mosaic.version = 11 : i64} {
  func.func @residual_kernel(%arg0: i32, %arg1: i32, %arg2: memref<128x128xf32, #tpu.memory_space<vmem>>, %arg3: memref<128x128xf32, #tpu.memory_space<vmem>>, %arg4: memref<128x128xf32, #tpu.memory_space<vmem>>, %arg5: memref<1x128xf32, #tpu.memory_space<vmem>>, %arg6: memref<1x128xf32, #tpu.memory_space<vmem>>, %arg7: memref<1x128xf32, #tpu.memory_space<vmem>>, %arg8: memref<128x512xf32, #tpu.memory_space<vmem>>, %arg9: memref<1x512xf32, #tpu.memory_space<vmem>>, %arg10: memref<512x128xf32, #tpu.memory_space<vmem>>, %arg11: memref<1x128xf32, #tpu.memory_space<vmem>>, %arg12: memref<128x128xf32, #tpu.memory_space<vmem>>, %arg13: memref<128x128xf32, #tpu.memory_space<vmem>>, %arg14: memref<128x128xf32, #tpu.memory_space<vmem>>, %arg15: memref<128x128xf32, #tpu.memory_space<vmem>>) attributes {dimension_semantics = [#tpu.dimension_semantics<parallel>, #tpu.dimension_semantics<arbitrary>], iteration_bounds = array<i64: 4, 1>, scalar_prefetch = 0 : i64, scratch_operands = 3 : i64, tpu.core_type = #tpu.core_type<tc>, window_params = [{transform_indices = @transform_0, window_bounds = array<i64: 128, 128>}, {transform_indices = @transform_1, window_bounds = array<i64: 128, 128>}, {pipeline_mode = #tpu.pipeline_mode<synchronous>, transform_indices = @transform_2, window_bounds = array<i64: 128, 128>}, {pipeline_mode = #tpu.pipeline_mode<synchronous>, transform_indices = @transform_3, window_bounds = array<i64: 1, 128>}, {pipeline_mode = #tpu.pipeline_mode<synchronous>, transform_indices = @transform_4, window_bounds = array<i64: 1, 128>}, {pipeline_mode = #tpu.pipeline_mode<synchronous>, transform_indices = @transform_5, window_bounds = array<i64: 1, 128>}, {transform_indices = @transform_6, window_bounds = array<i64: 128, 512>}, {transform_indices = @transform_7, window_bounds = array<i64: 1, 512>}, {transform_indices = @transform_8, window_bounds = array<i64: 512, 128>}, {pipeline_mode = #tpu.pipeline_mode<synchronous>, transform_indices = @transform_9, window_bounds = array<i64: 1, 128>}, {transform_indices = @transform_10, window_bounds = array<i64: 128, 128>}]} {
    %c0_i32 = arith.constant 0 : i32
    %0 = arith.cmpi eq, %arg1, %c0_i32 : i32
    %1 = arith.extui %0 : i1 to i32
    %c0_i32_0 = arith.constant 0 : i32
    %2 = arith.cmpi ne, %1, %c0_i32_0 : i32
    scf.if %2 {
      %c0_16 = arith.constant 0 : index
      %c0_17 = arith.constant 0 : index
      %19 = vector.load %arg2[%c0_16, %c0_17] : memref<128x128xf32, #tpu.memory_space<vmem>>, vector<128x128xf32>
      %c0_18 = arith.constant 0 : index
      %c0_19 = arith.constant 0 : index
      %20 = vector.load %arg3[%c0_18, %c0_19] : memref<128x128xf32, #tpu.memory_space<vmem>>, vector<128x128xf32>
      %c0_20 = arith.constant 0 : index
      %c0_21 = arith.constant 0 : index
      %21 = vector.load %arg4[%c0_20, %c0_21] : memref<128x128xf32, #tpu.memory_space<vmem>>, vector<128x128xf32>
      %cst_22 = arith.constant dense<0.000000e+00> : vector<128x128xf32>
      %22 = tpu.matmul %20, %21, %cst_22 {dimension_numbers = #tpu.dot_dimension_numbers<[1], [0], [0], [1], [0, 0, 1, 1], [], []>} : vector<128x128xf32>, vector<128x128xf32>, vector<128x128xf32> -> vector<128x128xf32>
      %23 = arith.addf %19, %22 : vector<128x128xf32>
      %c0_23 = arith.constant 0 : index
      %c0_24 = arith.constant 0 : index
      %24 = vector.load %arg5[%c0_23, %c0_24] : memref<1x128xf32, #tpu.memory_space<vmem>>, vector<1x128xf32>
      %25 = vector.broadcast %24 : vector<1x128xf32> to vector<128x128xf32>
      %26 = arith.addf %23, %25 : vector<128x128xf32>
      %cst_25 = arith.constant dense<0.000000e+00> : vector<128xf32>
      %27 = vector.multi_reduction <add>, %26, %cst_25 [1] : vector<128x128xf32> to vector<128xf32>
      %28 = vector.shape_cast %27 : vector<128xf32> to vector<128x1xf32>
      %cst_26 = arith.constant 7.812500e-03 : f32
      %29 = vector.broadcast %cst_26 : f32 to vector<128x1xf32>
      %30 = arith.mulf %28, %29 : vector<128x1xf32>
      %31 = arith.mulf %26, %26 : vector<128x128xf32>
      %cst_27 = arith.constant dense<0.000000e+00> : vector<128xf32>
      %32 = vector.multi_reduction <add>, %31, %cst_27 [1] : vector<128x128xf32> to vector<128xf32>
      %33 = vector.shape_cast %32 : vector<128xf32> to vector<128x1xf32>
      %cst_28 = arith.constant 7.812500e-03 : f32
      %34 = vector.broadcast %cst_28 : f32 to vector<128x1xf32>
      %35 = arith.mulf %33, %34 : vector<128x1xf32>
      %36 = arith.mulf %30, %30 : vector<128x1xf32>
      %37 = arith.subf %35, %36 : vector<128x1xf32>
      %38 = vector.broadcast %30 : vector<128x1xf32> to vector<128x128xf32>
      %39 = arith.subf %26, %38 : vector<128x128xf32>
      %cst_29 = arith.constant 9.99999974E-6 : f32
      %40 = vector.broadcast %cst_29 : f32 to vector<128x1xf32>
      %41 = arith.addf %37, %40 : vector<128x1xf32>
      %42 = math.rsqrt %41 : vector<128x1xf32>
      %43 = vector.broadcast %42 : vector<128x1xf32> to vector<128x128xf32>
      %44 = arith.mulf %39, %43 : vector<128x128xf32>
      %c0_30 = arith.constant 0 : index
      %c0_31 = arith.constant 0 : index
      %45 = vector.load %arg6[%c0_30, %c0_31] : memref<1x128xf32, #tpu.memory_space<vmem>>, vector<1x128xf32>
      %46 = vector.broadcast %45 : vector<1x128xf32> to vector<128x128xf32>
      %47 = arith.mulf %44, %46 : vector<128x128xf32>
      %c0_32 = arith.constant 0 : index
      %c0_33 = arith.constant 0 : index
      %48 = vector.load %arg7[%c0_32, %c0_33] : memref<1x128xf32, #tpu.memory_space<vmem>>, vector<1x128xf32>
      %49 = vector.broadcast %48 : vector<1x128xf32> to vector<128x128xf32>
      %50 = arith.addf %47, %49 : vector<128x128xf32>
      %c0_34 = arith.constant 0 : index
      %c0_35 = arith.constant 0 : index
      %51 = vector.load %arg13[%c0_34, %c0_35] : memref<128x128xf32, #tpu.memory_space<vmem>>, vector<128x128xf32>
      tpu.vector_store %arg13[%c0_34, %c0_35], %26 {strides = array<i32>} : memref<128x128xf32, #tpu.memory_space<vmem>>, vector<128x128xf32>,
      %c0_36 = arith.constant 0 : index
      %c0_37 = arith.constant 0 : index
      %52 = vector.load %arg14[%c0_36, %c0_37] : memref<128x128xf32, #tpu.memory_space<vmem>>, vector<128x128xf32>
      tpu.vector_store %arg14[%c0_36, %c0_37], %50 {strides = array<i32>} : memref<128x128xf32, #tpu.memory_space<vmem>>, vector<128x128xf32>,
      %cst_38 = arith.constant 0.000000e+00 : f32
      %53 = vector.broadcast %cst_38 : f32 to vector<128x128xf32>
      %c0_39 = arith.constant 0 : index
      %c0_40 = arith.constant 0 : index
      %54 = vector.load %arg15[%c0_39, %c0_40] : memref<128x128xf32, #tpu.memory_space<vmem>>, vector<128x128xf32>
      tpu.vector_store %arg15[%c0_39, %c0_40], %53 {strides = array<i32>} : memref<128x128xf32, #tpu.memory_space<vmem>>, vector<128x128xf32>,
    } else {
    }
    %c0 = arith.constant 0 : index
    %c0_1 = arith.constant 0 : index
    %3 = vector.load %arg14[%c0, %c0_1] : memref<128x128xf32, #tpu.memory_space<vmem>>, vector<128x128xf32>
    %c0_2 = arith.constant 0 : index
    %c0_3 = arith.constant 0 : index
    %4 = vector.load %arg8[%c0_2, %c0_3] : memref<128x512xf32, #tpu.memory_space<vmem>>, vector<128x512xf32>
    %cst = arith.constant dense<0.000000e+00> : vector<128x512xf32>
    %5 = tpu.matmul %3, %4, %cst {dimension_numbers = #tpu.dot_dimension_numbers<[1], [0], [0], [1], [0, 0, 1, 1], [], []>} : vector<128x128xf32>, vector<128x512xf32>, vector<128x512xf32> -> vector<128x512xf32>
    %c0_4 = arith.constant 0 : index
    %c0_5 = arith.constant 0 : index
    %6 = vector.load %arg9[%c0_4, %c0_5] : memref<1x512xf32, #tpu.memory_space<vmem>>, vector<1x512xf32>
    %7 = vector.broadcast %6 : vector<1x512xf32> to vector<128x512xf32>
    %8 = arith.addf %5, %7 : vector<128x512xf32>
    %cst_6 = arith.constant 0.000000e+00 : f32
    %9 = vector.broadcast %cst_6 : f32 to vector<128x512xf32>
    %10 = arith.maximumf %8, %9 : vector<128x512xf32>
    %c0_7 = arith.constant 0 : index
    %c0_8 = arith.constant 0 : index
    %11 = vector.load %arg15[%c0_7, %c0_8] : memref<128x128xf32, #tpu.memory_space<vmem>>, vector<128x128xf32>
    %c0_9 = arith.constant 0 : index
    %c0_10 = arith.constant 0 : index
    %12 = vector.load %arg10[%c0_9, %c0_10] : memref<512x128xf32, #tpu.memory_space<vmem>>, vector<512x128xf32>
    %cst_11 = arith.constant dense<0.000000e+00> : vector<128x128xf32>
    %13 = tpu.matmul %10, %12, %cst_11 {dimension_numbers = #tpu.dot_dimension_numbers<[1], [0], [0], [1], [0, 0, 1, 1], [], []>} : vector<128x512xf32>, vector<512x128xf32>, vector<128x128xf32> -> vector<128x128xf32>
    %14 = arith.addf %11, %13 : vector<128x128xf32>
    %c0_12 = arith.constant 0 : index
    %c0_13 = arith.constant 0 : index
    %15 = vector.load %arg15[%c0_12, %c0_13] : memref<128x128xf32, #tpu.memory_space<vmem>>, vector<128x128xf32>
    tpu.vector_store %arg15[%c0_12, %c0_13], %14 {strides = array<i32>} : memref<128x128xf32, #tpu.memory_space<vmem>>, vector<128x128xf32>,
    %c0_i32_14 = arith.constant 0 : i32
    %16 = arith.cmpi eq, %arg1, %c0_i32_14 : i32
    %17 = arith.extui %16 : i1 to i32
    %c0_i32_15 = arith.constant 0 : i32
    %18 = arith.cmpi ne, %17, %c0_i32_15 : i32
    scf.if %18 {
      %c0_16 = arith.constant 0 : index
      %c0_17 = arith.constant 0 : index
      %19 = vector.load %arg13[%c0_16, %c0_17] : memref<128x128xf32, #tpu.memory_space<vmem>>, vector<128x128xf32>
      %c0_18 = arith.constant 0 : index
      %c0_19 = arith.constant 0 : index
      %20 = vector.load %arg15[%c0_18, %c0_19] : memref<128x128xf32, #tpu.memory_space<vmem>>, vector<128x128xf32>
      %21 = arith.addf %19, %20 : vector<128x128xf32>
      %c0_20 = arith.constant 0 : index
      %c0_21 = arith.constant 0 : index
      %22 = vector.load %arg11[%c0_20, %c0_21] : memref<1x128xf32, #tpu.memory_space<vmem>>, vector<1x128xf32>
      %23 = vector.broadcast %22 : vector<1x128xf32> to vector<128x128xf32>
      %24 = arith.addf %21, %23 : vector<128x128xf32>
      %c0_22 = arith.constant 0 : index
      %c0_23 = arith.constant 0 : index
      %25 = vector.load %arg12[%c0_22, %c0_23] : memref<128x128xf32, #tpu.memory_space<vmem>>, vector<128x128xf32>
      tpu.vector_store %arg12[%c0_22, %c0_23], %24 {strides = array<i32>} : memref<128x128xf32, #tpu.memory_space<vmem>>, vector<128x128xf32>,
    } else {
    }
    return
  }
  func.func @transform_0(%arg0: i32, %arg1: i32) -> (i32, i32) {
    %c0_i32 = arith.constant 0 : i32
    %c0_i32_0 = arith.constant 0 : i32
    return %arg0, %c0_i32 : i32, i32
  }
  func.func @transform_1(%arg0: i32, %arg1: i32) -> (i32, i32) {
    %c0_i32 = arith.constant 0 : i32
    %c0_i32_0 = arith.constant 0 : i32
    return %arg0, %c0_i32 : i32, i32
  }
  func.func @transform_2(%arg0: i32, %arg1: i32) -> (i32, i32) {
    %c0_i32 = arith.constant 0 : i32
    %c0_i32_0 = arith.constant 0 : i32
    %c0_i32_1 = arith.constant 0 : i32
    return %c0_i32, %c0_i32_0 : i32, i32
  }
  func.func @transform_3(%arg0: i32, %arg1: i32) -> (i32, i32) {
    %c0_i32 = arith.constant 0 : i32
    %c0_i32_0 = arith.constant 0 : i32
    %c0_i32_1 = arith.constant 0 : i32
    return %c0_i32, %c0_i32_0 : i32, i32
  }
  func.func @transform_4(%arg0: i32, %arg1: i32) -> (i32, i32) {
    %c0_i32 = arith.constant 0 : i32
    %c0_i32_0 = arith.constant 0 : i32
    %c0_i32_1 = arith.constant 0 : i32
    return %c0_i32, %c0_i32_0 : i32, i32
  }
  func.func @transform_5(%arg0: i32, %arg1: i32) -> (i32, i32) {
    %c0_i32 = arith.constant 0 : i32
    %c0_i32_0 = arith.constant 0 : i32
    %c0_i32_1 = arith.constant 0 : i32
    return %c0_i32, %c0_i32_0 : i32, i32
  }
  func.func @transform_6(%arg0: i32, %arg1: i32) -> (i32, i32) {
    %c0_i32 = arith.constant 0 : i32
    %c0_i32_0 = arith.constant 0 : i32
    return %c0_i32, %arg1 : i32, i32
  }
  func.func @transform_7(%arg0: i32, %arg1: i32) -> (i32, i32) {
    %c0_i32 = arith.constant 0 : i32
    %c0_i32_0 = arith.constant 0 : i32
    return %c0_i32, %arg1 : i32, i32
  }
  func.func @transform_8(%arg0: i32, %arg1: i32) -> (i32, i32) {
    %c0_i32 = arith.constant 0 : i32
    %c0_i32_0 = arith.constant 0 : i32
    return %arg1, %c0_i32 : i32, i32
  }
  func.func @transform_9(%arg0: i32, %arg1: i32) -> (i32, i32) {
    %c0_i32 = arith.constant 0 : i32
    %c0_i32_0 = arith.constant 0 : i32
    %c0_i32_1 = arith.constant 0 : i32
    return %c0_i32, %c0_i32_0 : i32, i32
  }
  func.func @transform_10(%arg0: i32, %arg1: i32) -> (i32, i32) {
    %c0_i32 = arith.constant 0 : i32
    %c0_i32_0 = arith.constant 0 : i32
    return %arg0, %c0_i32 : i32, i32
  }
}

</mosaic_0001>

<llo_original>
// kernel: tpu_custom_call.1
$region0: #{tpu_custom_call.1}
  #allocation0 [shape = 'u32[]', space=smem, size = 0x4, offset = 0x4, fixed_abs, tag = 'smem constant byte address 0x4 - core index']
  #allocation1 [shape = 'u32[144,128]{1,0:T(1,128)}', space=vmem, size = 0x12000, scoped, tag = 'internal scratch']
  #allocation2 [shape = 'f32[128,128]{1,0:T(8,128)}', space=vmem, size = 0x10000, scoped, tag = 'scratch operand']
  #allocation3 [shape = 'f32[128,128]{1,0:T(8,128)}', space=vmem, size = 0x10000, scoped, tag = 'scratch operand']
  #allocation4 [shape = 'f32[128,128]{1,0:T(8,128)}', space=vmem, size = 0x10000, scoped, tag = 'scratch operand']
  %s0 = inlined_call_operand.hbm [shape: f32[512,128], index: 0, kind: input, shape index: {}]
  %s1 = inlined_call_operand.hbm [shape: f32[512,128], index: 1, kind: input, shape index: {}]
  %s2 = inlined_call_operand.hbm [shape: f32[128,128], index: 2, kind: input, shape index: {}]
  %s3 = inlined_call_operand.vmem [shape: f32[1,128], index: 3, kind: input, shape index: {}]
  %s4 = inlined_call_operand.vmem [shape: f32[1,128], index: 4, kind: input, shape index: {}]
  %s5 = inlined_call_operand.vmem [shape: f32[1,128], index: 5, kind: input, shape index: {}]
  %s6 = inlined_call_operand.hbm [shape: f32[128,512], index: 6, kind: input, shape index: {}]
  %s7 = inlined_call_operand.vmem [shape: f32[1,512], index: 7, kind: input, shape index: {}]
  %s8 = inlined_call_operand.hbm [shape: f32[512,128], index: 8, kind: input, shape index: {}]
  %s9 = inlined_call_operand.vmem [shape: f32[1,128], index: 9, kind: input, shape index: {}]
  %s10 = inlined_call_operand.hbm [shape: f32[512,128], index: 10, kind: output, shape index: {}]
  %s11 = sld [smem:[#allocation0]]
  $region101: #{tpu_custom_call.1} parent=0
    _
  %s13 = ssub.s32 1, %s11
  %s14 = scalar_select 0, %s13, %s11
  $region1: #{tpu_custom_call.1} parent=0
    #allocation5 [shape = 'u8[131072]{0}', space=vmem, size = 0x20000, scoped, tag = 'input window, operand 0']
    #allocation6 [shape = 's32[2]{0}', space=sflag, size = 0x8, scoped, tag = 'scoped memory for tpu_custom_call.1']
    #allocation7 [shape = 's32[2]{0}', space=sflag, size = 0x8, scoped, tag = 'scoped memory for tpu_custom_call.1']
    #allocation8 [shape = 'u8[131072]{0}', space=vmem, size = 0x20000, scoped, tag = 'input window, operand 1']
    #allocation9 [shape = 's32[2]{0}', space=sflag, size = 0x8, scoped, tag = 'scoped memory for tpu_custom_call.1']
    #allocation10 [shape = 'u8[65536]{0}', space=vmem, size = 0x10000, scoped, tag = 'input window, operand 2, single buffered']
    #allocation11 [shape = 'u8[262144]{0}', space=vmem, size = 0x40000, scoped, tag = 'input window, operand 6, single buffered']
    #allocation12 [shape = 's32[1]{0}', space=sflag, size = 0x4, scoped, tag = 'scoped memory for tpu_custom_call.1']
    #allocation13 [shape = 'u8[262144]{0}', space=vmem, size = 0x40000, scoped, tag = 'input window, operand 8, single buffered']
    #allocation14 [shape = 'u8[131072]{0}', space=vmem, size = 0x20000, scoped, tag = 'output window, operand 0']
    %15 = vsyncpa [#allocation6], 0
    %s16 = scalar_lea.sflag [#allocation6], 1
    %17 = vsyncpa %s16, 0
    %18 = vsyncpa [#allocation9], 0
    %s19 = scalar_lea.sflag [#allocation9], 1
    %20 = vsyncpa %s19, 0
    %21 = vsyncpa [#allocation12], 0
    %22 = vsyncpa [#allocation7], 0
    %s23 = scalar_lea.sflag [#allocation7], 1
    %24 = vsyncpa %s23, 0
    loop: start=0, step=1, limit=6
    $region2: #{tpu_custom_call.1} parent=1 // loop_pre_header
      _
    $region3: #{tpu_custom_call.1} parent=1 // loop_header
      %s26 = sphi 0, %s30
      %p27 = scmp.ge.s32.totalorder %s26, 6
      %s33 = sphi 0, %s45
      %s34 = sphi 0, %s41
      %s35 = sphi 0, %s33
      %s36 = sphi 0, %s34
      %s37 = sphi 0, %s35
      %s38 = sphi 0, %s36
      %s48 = sphi 0, %s50
      %s51 = sphi 0, %s48
      %s52 = sphi 0, %s51
      %s68 = sphi 0, %s52
      %s74 = sphi 0, %s76
      %s77 = sphi 0, %s74
      %s78 = sphi 0, %s77
      %s94 = sphi 0, %s78
      %s98 = sphi 0, %s98
      %s100 = sphi 0, %s98
      %s101 = sphi 0, %s100
      %s115 = sphi 0, %s101
      %s119 = sphi 0, %s119
      %s121 = sphi 0, %s119
      %s122 = sphi 0, %s121
      %s136 = sphi 0, %s122
      %s140 = sphi 0, %s140
      %s142 = sphi 0, %s140
      %s143 = sphi 0, %s142
      %s157 = sphi 0, %s143
      %s161 = sphi 0, %s161
      %s163 = sphi 0, %s161
      %s164 = sphi 0, %s163
      %s178 = sphi 0, %s164
      %s184 = sphi 0, %s186
      %s187 = sphi 0, %s184
      %s188 = sphi 0, %s187
      %s204 = sphi 0, %s188
      %s210 = sphi 0, %s212
      %s213 = sphi 0, %s210
      %s214 = sphi 0, %s213
      %s230 = sphi 0, %s214
      %s236 = sphi 0, %s238
      %s239 = sphi 0, %s236
      %s240 = sphi 0, %s239
      %s256 = sphi 0, %s240
      %s260 = sphi 0, %s260
      %s262 = sphi 0, %s260
      %s263 = sphi 0, %s262
      %s277 = sphi 0, %s263
      %s283 = sphi 0, %s285
      %s286 = sphi 0, %s283
      %s287 = sphi 0, %s286
      %s303 = sphi 0, %s287
    $region4: #{tpu_custom_call.1} parent=1 // loop_header_branch
      %29 = sbr.rel (%p27) target = $region8
    $region5: #{tpu_custom_call.1} parent=1 // loop_body
      %s31 = ssub.s32 %s26, 1
      %s32 = ssub.s32 %s26, 2
      %s39 = sadd.s32 1, %s34
      %p40 = scmp.ge.s32.totalorder %s39, 1
      %s41 = scalar_select %p40, 0, %s39
      %s42 = sadd.s32 1, %s33
      %s43 = scalar_select %p40, %s42, %s33
      %p44 = scmp.ge.s32.totalorder %s43, 4
      %s45 = scalar_select %p44, 0, %s43
      %s46 = ssub.s32 %s33, %s45
      %p47 = scmp.eq.s32.totalorder %s46, 0
      %s49 = sadd.s32 %s48, 1
      %s50 = scalar_select %p47, %s48, %s49
      %p53 = pneg %p47
      %p54 = scmp.eq.s32.totalorder %s26, 3
      %p55 = por %p53, %p54
      %p56 = scmp.ne.s32.totalorder %s48, %s51
      %p57 = scmp.eq.s32.totalorder %s26, 0
      %p58 = por %p56, %p57
      %p59 = scmp.ne.s32.totalorder %s48, %s51
      %p60 = scmp.eq.s32.totalorder %s31, 3
      %p61 = por %p59, %p60
      %p62 = scmp.ne.s32.totalorder %s51, %s52
      %p63 = scmp.eq.s32.totalorder %s31, 0
      %p64 = por %p62, %p63
      %p65 = scmp.ne.s32.totalorder %s51, %s52
      %p66 = scmp.eq.s32.totalorder %s32, 3
      %p67 = por %p65, %p66
      %p69 = scmp.ne.s32.totalorder %s52, %s68
      %p70 = scmp.eq.s32.totalorder %s32, 0
      %p71 = por %p69, %p70
      %s72 = ssub.s32 %s33, %s45
      %p73 = scmp.eq.s32.totalorder %s72, 0
      %s75 = sadd.s32 %s74, 1
      %s76 = scalar_select %p73, %s74, %s75
      %p79 = pneg %p73
      %p80 = scmp.eq.s32.totalorder %s26, 3
      %p81 = por %p79, %p80
      %p82 = scmp.ne.s32.totalorder %s74, %s77
      %p83 = scmp.eq.s32.totalorder %s26, 0
      %p84 = por %p82, %p83
      %p85 = scmp.ne.s32.totalorder %s74, %s77
      %p86 = scmp.eq.s32.totalorder %s31, 3
      %p87 = por %p85, %p86
      %p88 = scmp.ne.s32.totalorder %s77, %s78
      %p89 = scmp.eq.s32.totalorder %s31, 0
      %p90 = por %p88, %p89
      %p91 = scmp.ne.s32.totalorder %s77, %s78
      %p92 = scmp.eq.s32.totalorder %s32, 3
      %p93 = por %p91, %p92
      %p95 = scmp.ne.s32.totalorder %s78, %s94
      %p96 = scmp.eq.s32.totalorder %s32, 0
      %p97 = por %p95, %p96
      %s99 = sadd.s32 %s98, 1
      %p102 = scmp.eq.s32.totalorder %s26, 3
      %p103 = scmp.ne.s32.totalorder %s98, %s100
      %p104 = scmp.eq.s32.totalorder %s26, 0
      %p105 = por %p103, %p104
      %p106 = scmp.ne.s32.totalorder %s98, %s100
      %p107 = scmp.eq.s32.totalorder %s31, 3
      %p108 = por %p106, %p107
      %p109 = scmp.ne.s32.totalorder %s100, %s101
      %p110 = scmp.eq.s32.totalorder %s31, 0
      %p111 = por %p109, %p110
      %p112 = scmp.ne.s32.totalorder %s100, %s101
      %p113 = scmp.eq.s32.totalorder %s32, 3
      %p114 = por %p112, %p113
      %p116 = scmp.ne.s32.totalorder %s101, %s115
      %p117 = scmp.eq.s32.totalorder %s32, 0
      %p118 = por %p116, %p117
      %s120 = sadd.s32 %s119, 1
      %p123 = scmp.eq.s32.totalorder %s26, 3
      %p124 = scmp.ne.s32.totalorder %s119, %s121
      %p125 = scmp.eq.s32.totalorder %s26, 0
      %p126 = por %p124, %p125
      %p127 = scmp.ne.s32.totalorder %s119, %s121
      %p128 = scmp.eq.s32.totalorder %s31, 3
      %p129 = por %p127, %p128
      %p130 = scmp.ne.s32.totalorder %s121, %s122
      %p131 = scmp.eq.s32.totalorder %s31, 0
      %p132 = por %p130, %p131
      %p133 = scmp.ne.s32.totalorder %s121, %s122
      %p134 = scmp.eq.s32.totalorder %s32, 3
      %p135 = por %p133, %p134
      %p137 = scmp.ne.s32.totalorder %s122, %s136
      %p138 = scmp.eq.s32.totalorder %s32, 0
      %p139 = por %p137, %p138
      %s141 = sadd.s32 %s140, 1
      %p144 = scmp.eq.s32.totalorder %s26, 3
      %p145 = scmp.ne.s32.totalorder %s140, %s142
      %p146 = scmp.eq.s32.totalorder %s26, 0
      %p147 = por %p145, %p146
      %p148 = scmp.ne.s32.totalorder %s140, %s142
      %p149 = scmp.eq.s32.totalorder %s31, 3
      %p150 = por %p148, %p149
      %p151 = scmp.ne.s32.totalorder %s142, %s143
      %p152 = scmp.eq.s32.totalorder %s31, 0
      %p153 = por %p151, %p152
      %p154 = scmp.ne.s32.totalorder %s142, %s143
      %p155 = scmp.eq.s32.totalorder %s32, 3
      %p156 = por %p154, %p155
      %p158 = scmp.ne.s32.totalorder %s143, %s157
      %p159 = scmp.eq.s32.totalorder %s32, 0
      %p160 = por %p158, %p159
      %s162 = sadd.s32 %s161, 1
      %p165 = scmp.eq.s32.totalorder %s26, 3
      %p166 = scmp.ne.s32.totalorder %s161, %s163
      %p167 = scmp.eq.s32.totalorder %s26, 0
      %p168 = por %p166, %p167
      %p169 = scmp.ne.s32.totalorder %s161, %s163
      %p170 = scmp.eq.s32.totalorder %s31, 3
      %p171 = por %p169, %p170
      %p172 = scmp.ne.s32.totalorder %s163, %s164
      %p173 = scmp.eq.s32.totalorder %s31, 0
      %p174 = por %p172, %p173
      %p175 = scmp.ne.s32.totalorder %s163, %s164
      %p176 = scmp.eq.s32.totalorder %s32, 3
      %p177 = por %p175, %p176
      %p179 = scmp.ne.s32.totalorder %s164, %s178
      %p180 = scmp.eq.s32.totalorder %s32, 0
      %p181 = por %p179, %p180
      %s182 = ssub.s32 %s34, %s41
      %p183 = scmp.eq.s32.totalorder %s182, 0
      %s185 = sadd.s32 %s184, 1
      %s186 = scalar_select %p183, %s184, %s185
      %p189 = pneg %p183
      %p190 = scmp.eq.s32.totalorder %s26, 3
      %p191 = por %p189, %p190
      %p192 = scmp.ne.s32.totalorder %s184, %s187
      %p193 = scmp.eq.s32.totalorder %s26, 0
      %p194 = por %p192, %p193
      %p195 = scmp.ne.s32.totalorder %s184, %s187
      %p196 = scmp.eq.s32.totalorder %s31, 3
      %p197 = por %p195, %p196
      %p198 = scmp.ne.s32.totalorder %s187, %s188
      %p199 = scmp.eq.s32.totalorder %s31, 0
      %p200 = por %p198, %p199
      %p201 = scmp.ne.s32.totalorder %s187, %s188
      %p202 = scmp.eq.s32.totalorder %s32, 3
      %p203 = por %p201, %p202
      %p205 = scmp.ne.s32.totalorder %s188, %s204
      %p206 = scmp.eq.s32.totalorder %s32, 0
      %p207 = por %p205, %p206
      %s208 = ssub.s32 %s34, %s41
      %p209 = scmp.eq.s32.totalorder %s208, 0
      %s211 = sadd.s32 %s210, 1
      %s212 = scalar_select %p209, %s210, %s211
      %p215 = pneg %p209
      %p216 = scmp.eq.s32.totalorder %s26, 3
      %p217 = por %p215, %p216
      %p218 = scmp.ne.s32.totalorder %s210, %s213
      %p219 = scmp.eq.s32.totalorder %s26, 0
      %p220 = por %p218, %p219
      %p221 = scmp.ne.s32.totalorder %s210, %s213
      %p222 = scmp.eq.s32.totalorder %s31, 3
      %p223 = por %p221, %p222
      %p224 = scmp.ne.s32.totalorder %s213, %s214
      %p225 = scmp.eq.s32.totalorder %s31, 0
      %p226 = por %p224, %p225
      %p227 = scmp.ne.s32.totalorder %s213, %s214
      %p228 = scmp.eq.s32.totalorder %s32, 3
      %p229 = por %p227, %p228
      %p231 = scmp.ne.s32.totalorder %s214, %s230
      %p232 = scmp.eq.s32.totalorder %s32, 0
      %p233 = por %p231, %p232
      %s234 = ssub.s32 %s34, %s41
      %p235 = scmp.eq.s32.totalorder %s234, 0
      %s237 = sadd.s32 %s236, 1
      %s238 = scalar_select %p235, %s236, %s237
      %p241 = pneg %p235
      %p242 = scmp.eq.s32.totalorder %s26, 3
      %p243 = por %p241, %p242
      %p244 = scmp.ne.s32.totalorder %s236, %s239
      %p245 = scmp.eq.s32.totalorder %s26, 0
      %p246 = por %p244, %p245
      %p247 = scmp.ne.s32.totalorder %s236, %s239
      %p248 = scmp.eq.s32.totalorder %s31, 3
      %p249 = por %p247, %p248
      %p250 = scmp.ne.s32.totalorder %s239, %s240
      %p251 = scmp.eq.s32.totalorder %s31, 0
      %p252 = por %p250, %p251
      %p253 = scmp.ne.s32.totalorder %s239, %s240
      %p254 = scmp.eq.s32.totalorder %s32, 3
      %p255 = por %p253, %p254
      %p257 = scmp.ne.s32.totalorder %s240, %s256
      %p258 = scmp.eq.s32.totalorder %s32, 0
      %p259 = por %p257, %p258
      %s261 = sadd.s32 %s260, 1
      %p264 = scmp.eq.s32.totalorder %s26, 3
      %p265 = scmp.ne.s32.totalorder %s260, %s262
      %p266 = scmp.eq.s32.totalorder %s26, 0
      %p267 = por %p265, %p266
      %p268 = scmp.ne.s32.totalorder %s260, %s262
      %p269 = scmp.eq.s32.totalorder %s31, 3
      %p270 = por %p268, %p269
      %p271 = scmp.ne.s32.totalorder %s262, %s263
      %p272 = scmp.eq.s32.totalorder %s31, 0
      %p273 = por %p271, %p272
      %p274 = scmp.ne.s32.totalorder %s262, %s263
      %p275 = scmp.eq.s32.totalorder %s32, 3
      %p276 = por %p274, %p275
      %p278 = scmp.ne.s32.totalorder %s263, %s277
      %p279 = scmp.eq.s32.totalorder %s32, 0
      %p280 = por %p278, %p279
      %s281 = ssub.s32 %s33, %s45
      %p282 = scmp.eq.s32.totalorder %s281, 0
      %s284 = sadd.s32 %s283, 1
      %s285 = scalar_select %p282, %s283, %s284
      %p288 = pneg %p282
      %p289 = scmp.eq.s32.totalorder %s26, 3
      %p290 = por %p288, %p289
      %p291 = scmp.ne.s32.totalorder %s283, %s286
      %p292 = scmp.eq.s32.totalorder %s26, 0
      %p293 = por %p291, %p292
      %p294 = scmp.ne.s32.totalorder %s283, %s286
      %p295 = scmp.eq.s32.totalorder %s31, 3
      %p296 = por %p294, %p295
      %p297 = scmp.ne.s32.totalorder %s286, %s287
      %p298 = scmp.eq.s32.totalorder %s31, 0
      %p299 = por %p297, %p298
      %p300 = scmp.ne.s32.totalorder %s286, %s287
      %p301 = scmp.eq.s32.totalorder %s32, 3
      %p302 = por %p300, %p301
      %p304 = scmp.ne.s32.totalorder %s287, %s303
      %p305 = scmp.eq.s32.totalorder %s32, 0
      %p306 = por %p304, %p305
      %p307 = scmp.le.s32.totalorder 1, %s26
      %p308 = scmp.lt.s32.totalorder %s26, 5
      %p309 = pnand %p307, %p308
      %p310 = pneg %p309
      // Predicated region
      $region9: #{tpu_custom_call.1} parent=5 // pred_check
        _
      $region10: #{tpu_custom_call.1} parent=5 // pred_check_branch
        %312 = sbr.rel (%p309) target = $region12
      $region11: #{tpu_custom_call.1} parent=5 // pred_region
        %s313 = ssub.s32 %s26, 1
        // Predicated region
        $region13: #{tpu_custom_call.1} parent=11 // pred_check
          %p314 = pneg %p111
        $region14: #{tpu_custom_call.1} parent=11 // pred_check_branch
          %316 = sbr.rel (%p314) target = $region16
        $region15: #{tpu_custom_call.1} parent=11 // pred_region
          %s318 = ssub.s32 2048, 2048
          %319 = vsyncadd [#allocation9], %s318
          %s320 = sshll.u32 [#allocation10], 4
          %s321 = int_to_ptr.vmem [resolvable:$true] %s320
          %326 = dma.hbm_to_vmem [thread:$0]  %s2, 2048, %s321, [#allocation9], 128, 128, 8
        $region16: #{tpu_custom_call.1} parent=11 // pred_fallthru
          _
        // Predicated region
        $region17: #{tpu_custom_call.1} parent=11 // pred_check
          %p327 = pneg %p132
        $region18: #{tpu_custom_call.1} parent=11 // pred_check_branch
          %329 = sbr.rel (%p327) target = $region20
        $region19: #{tpu_custom_call.1} parent=11 // pred_region
          _
        $region20: #{tpu_custom_call.1} parent=11 // pred_fallthru
          _
        // Predicated region
        $region21: #{tpu_custom_call.1} parent=11 // pred_check
          %p330 = pneg %p153
        $region22: #{tpu_custom_call.1} parent=11 // pred_check_branch
          %332 = sbr.rel (%p330) target = $region24
        $region23: #{tpu_custom_call.1} parent=11 // pred_region
          _
        $region24: #{tpu_custom_call.1} parent=11 // pred_fallthru
          _
        // Predicated region
        $region25: #{tpu_custom_call.1} parent=11 // pred_check
          %p333 = pneg %p174
        $region26: #{tpu_custom_call.1} parent=11 // pred_check_branch
          %335 = sbr.rel (%p333) target = $region28
        $region27: #{tpu_custom_call.1} parent=11 // pred_region
          _
        $region28: #{tpu_custom_call.1} parent=11 // pred_fallthru
          _
        // Predicated region
        $region29: #{tpu_custom_call.1} parent=11 // pred_check
          %p336 = pneg %p200
        $region30: #{tpu_custom_call.1} parent=11 // pred_check_branch
          %338 = sbr.rel (%p336) target = $region32
        $region31: #{tpu_custom_call.1} parent=11 // pred_region
          %s339 = smul.u32 4, %s36
          %s341 = ssub.s32 8192, 8192
          %342 = vsyncadd [#allocation12], %s341
          %s343 = smul.addr %s339, 128
          %s344 = scalar_lea.hbm %s6, %s343
          %s345 = sshll.u32 [#allocation11], 4
          %s346 = int_to_ptr.vmem [resolvable:$true] %s345
          %351 = dma.hbm_to_vmem [thread:$0]  %s344, 8192, %s346, [#allocation12], 512, 512, 32
        $region32: #{tpu_custom_call.1} parent=11 // pred_fallthru
          _
        // Predicated region
        $region33: #{tpu_custom_call.1} parent=11 // pred_check
          %p352 = pneg %p226
        $region34: #{tpu_custom_call.1} parent=11 // pred_check_branch
          %354 = sbr.rel (%p352) target = $region36
        $region35: #{tpu_custom_call.1} parent=11 // pred_region
          %s355 = smul.u32 4, %s36
          %p356 = scmp.lt.s32.totalorder %s355, 3
          %s357 = scalar_select %p356, %s355, 3
          %s358 = scalar_lea.vmem %s7, %s357
          %s359 = smul.u32 4, %s36
        $region36: #{tpu_custom_call.1} parent=11 // pred_fallthru
          _
        // Predicated region
        $region37: #{tpu_custom_call.1} parent=11 // pred_check
          %p360 = pneg %p252
        $region38: #{tpu_custom_call.1} parent=11 // pred_check_branch
          %362 = sbr.rel (%p360) target = $region40
        $region39: #{tpu_custom_call.1} parent=11 // pred_region
          %s363 = smul.u32 64, %s36
          %s365 = ssub.s32 8192, 8192
          %366 = vsyncadd [#allocation12], %s365
          %s367 = smul.addr %s363, 128
          %s368 = scalar_lea.hbm %s8, %s367
          %s369 = sshll.u32 [#allocation13], 4
          %s370 = int_to_ptr.vmem [resolvable:$true] %s369
          %375 = dma.hbm_to_vmem [thread:$0]  %s368, 8192, %s370, [#allocation12], 128, 128, 8
        $region40: #{tpu_custom_call.1} parent=11 // pred_fallthru
          _
        // Predicated region
        $region41: #{tpu_custom_call.1} parent=11 // pred_check
          %p376 = pneg %p273
        $region42: #{tpu_custom_call.1} parent=11 // pred_check_branch
          %378 = sbr.rel (%p376) target = $region44
        $region43: #{tpu_custom_call.1} parent=11 // pred_region
          _
        $region44: #{tpu_custom_call.1} parent=11 // pred_fallthru
          _
      $region12: #{tpu_custom_call.1} parent=5 // pred_fallthru
        _
      %p379 = scmp.lt.s32.totalorder %s26, 4
      // Predicated region
      $region45: #{tpu_custom_call.1} parent=5 // pred_check
        %p380 = pneg %p379
      $region46: #{tpu_custom_call.1} parent=5 // pred_check_branch
        %382 = sbr.rel (%p380) target = $region48
      $region47: #{tpu_custom_call.1} parent=5 // pred_region
        // Predicated region
        $region49: #{tpu_custom_call.1} parent=47 // pred_check
          %p383 = pneg %p58
        $region50: #{tpu_custom_call.1} parent=47 // pred_check_branch
          %385 = sbr.rel (%p383) target = $region52
        $region51: #{tpu_custom_call.1} parent=47 // pred_region
          %s386 = sand.u32 %s48, 1
          %s387 = scalar_lea.sflag [#allocation6], %s386
          %s388 = sand.u32 %s48, 1
          %s389 = smul.addr %s388, 128
          %s390 = scalar_lea.vmem [#allocation5], %s389
          %s391 = smul.u32 16, %s33
          %s393 = ssub.s32 2048, 2048
          %394 = vsyncadd %s387, %s393
          %s395 = smul.addr %s391, 128
          %s396 = scalar_lea.hbm %s0, %s395
          %s397 = sshll.u32 %s390, 4
          %s398 = int_to_ptr.vmem [resolvable:$true] %s397
          %403 = dma.hbm_to_vmem [thread:$0]  %s396, 2048, %s398, %s387, 128, 128, 8
        $region52: #{tpu_custom_call.1} parent=47 // pred_fallthru
          _
        // Predicated region
        $region53: #{tpu_custom_call.1} parent=47 // pred_check
          %p404 = pneg %p84
        $region54: #{tpu_custom_call.1} parent=47 // pred_check_branch
          %406 = sbr.rel (%p404) target = $region56
        $region55: #{tpu_custom_call.1} parent=47 // pred_region
          %s407 = sand.u32 %s26, 1
          %s408 = scalar_lea.sflag [#allocation9], %s407
          %s409 = sand.u32 %s74, 1
          %s410 = smul.addr %s409, 128
          %s411 = scalar_lea.vmem [#allocation8], %s410
          %s412 = smul.u32 16, %s33
          %s414 = ssub.s32 2048, 2048
          %415 = vsyncadd %s408, %s414
          %s416 = smul.addr %s412, 128
          %s417 = scalar_lea.hbm %s1, %s416
          %s418 = sshll.u32 %s411, 4
          %s419 = int_to_ptr.vmem [resolvable:$true] %s418
          %424 = dma.hbm_to_vmem [thread:$0]  %s417, 2048, %s419, %s408, 128, 128, 8
        $region56: #{tpu_custom_call.1} parent=47 // pred_fallthru
          _
      $region48: #{tpu_custom_call.1} parent=5 // pred_fallthru
        _
      %p425 = scmp.le.s32.totalorder 1, %s26
      %p426 = scmp.lt.s32.totalorder %s26, 5
      %p427 = pnand %p425, %p426
      %p428 = pneg %p427
      // Predicated region
      $region57: #{tpu_custom_call.1} parent=5 // pred_check
        _
      $region58: #{tpu_custom_call.1} parent=5 // pred_check_branch
        %430 = sbr.rel (%p427) target = $region60
      $region59: #{tpu_custom_call.1} parent=5 // pred_region
        %s431 = ssub.s32 %s26, 1
        %s432 = sand.u32 %s51, 1
        %s433 = scalar_lea.sflag [#allocation6], %s432
        %s434 = sand.u32 %s51, 1
        %s435 = smul.addr %s434, 128
        %s436 = scalar_lea.vmem [#allocation5], %s435
        // Predicated region
        $region61: #{tpu_custom_call.1} parent=59 // pred_check
          %p437 = pneg %p64
        $region62: #{tpu_custom_call.1} parent=59 // pred_check_branch
          %439 = sbr.rel (%p437) target = $region64
        $region63: #{tpu_custom_call.1} parent=59 // pred_region
          %440 = dma.done %s433, 2048
        $region64: #{tpu_custom_call.1} parent=59 // pred_fallthru
          _
        %s441 = sand.u32 %s31, 1
        %s442 = scalar_lea.sflag [#allocation9], %s441
        %s443 = sand.u32 %s77, 1
        %s444 = smul.addr %s443, 128
        %s445 = scalar_lea.vmem [#allocation8], %s444
        // Predicated region
        $region65: #{tpu_custom_call.1} parent=59 // pred_check
          %p446 = pneg %p90
        $region66: #{tpu_custom_call.1} parent=59 // pred_check_branch
          %448 = sbr.rel (%p446) target = $region68
        $region67: #{tpu_custom_call.1} parent=59 // pred_region
          %449 = dma.done %s442, 2048
        $region68: #{tpu_custom_call.1} parent=59 // pred_fallthru
          _
        // Predicated region
        $region69: #{tpu_custom_call.1} parent=59 // pred_check
          %p450 = pneg %p111
        $region70: #{tpu_custom_call.1} parent=59 // pred_check_branch
          %452 = sbr.rel (%p450) target = $region72
        $region71: #{tpu_custom_call.1} parent=59 // pred_region
          %453 = dma.done [#allocation9], 2048
        $region72: #{tpu_custom_call.1} parent=59 // pred_fallthru
          _
        // Predicated region
        $region73: #{tpu_custom_call.1} parent=59 // pred_check
          %p454 = pneg %p200
        $region74: #{tpu_custom_call.1} parent=59 // pred_check_branch
          %456 = sbr.rel (%p454) target = $region76
        $region75: #{tpu_custom_call.1} parent=59 // pred_region
          %457 = dma.done [#allocation12], 8192
        $region76: #{tpu_custom_call.1} parent=59 // pred_fallthru
          _
        // Predicated region
        $region77: #{tpu_custom_call.1} parent=59 // pred_check
          %p458 = pneg %p252
        $region78: #{tpu_custom_call.1} parent=59 // pred_check_branch
          %460 = sbr.rel (%p458) target = $region80
        $region79: #{tpu_custom_call.1} parent=59 // pred_region
          %461 = dma.done [#allocation12], 8192
        $region80: #{tpu_custom_call.1} parent=59 // pred_fallthru
          _
        %s462 = sand.u32 %s51, 1
        %s463 = scalar_lea.sflag [#allocation6], %s462
        %s464 = sand.u32 %s51, 1
        %s465 = smul.addr %s464, 128
        %s466 = scalar_lea.vmem [#allocation5], %s465
        %p467 = pneg %p64
        %p468 = pneg %p61
        %s469 = sand.u32 %s31, 1
        %s470 = scalar_lea.sflag [#allocation9], %s469
        %s471 = sand.u32 %s77, 1
        %s472 = smul.addr %s471, 128
        %s473 = scalar_lea.vmem [#allocation8], %s472
        %p474 = pneg %p90
        %p475 = pneg %p87
        %p476 = pneg %p111
        %p477 = pneg %p108
        %p478 = pneg %p132
        %p479 = pneg %p129
        %p480 = pneg %p153
        %p481 = pneg %p150
        %p482 = pneg %p174
        %p483 = pneg %p171
        %p484 = pneg %p200
        %p485 = pneg %p197
        %s486 = smul.u32 4, %s36
        %p487 = scmp.lt.s32.totalorder %s486, 3
        %s488 = scalar_select %p487, %s486, 3
        %s489 = scalar_lea.vmem %s7, %s488
        %p490 = pneg %p226
        %p491 = pneg %p223
        %p492 = pneg %p252
        %p493 = pneg %p249
        %p494 = pneg %p273
        %p495 = pneg %p270
        %p496 = pneg %p299
        %p497 = pneg %p296
        %s498 = sand.u32 %s286, 1
        %s499 = scalar_lea.sflag [#allocation7], %s498
        %s500 = sand.u32 %s286, 1
        %s501 = smul.addr %s500, 128
        %s502 = scalar_lea.vmem [#allocation14], %s501
        %s503 = smul.u32 16, %s35
        %s504 = smul.u32 16, %s35
        %s505 = smul.u32 4, %s36
        %s506 = smul.u32 4, %s36
        %p507 = scmp.lt.s32.totalorder %s506, 3
        %s508 = scalar_select %p507, %s506, 3
        %s509 = scalar_lea.vmem %s7, %s508
        %s510 = smul.u32 4, %s36
        %s511 = smul.u32 64, %s36
        %s512 = smul.u32 16, %s35
        %p513 = scmp.eq.s32.totalorder %s36, 0
        // Predicated region
        $region81: #{tpu_custom_call.1} parent=59 // pred_check
          %p514 = pneg %p513
        $region82: #{tpu_custom_call.1} parent=59 // pred_check_branch
          %516 = sbr.rel (%p514) target = $region84
        $region83: #{tpu_custom_call.1} parent=59 // pred_region
          %v517 = vld [vmem:[%s436] sm:$0xff]
          %v518 = vld [vmem:[%s436 + $0x8] sm:$0xff]
          %v519 = vld [vmem:[%s436 + $0x10] sm:$0xff]
          %v520 = vld [vmem:[%s436 + $0x18] sm:$0xff]
          %v521 = vld [vmem:[%s436 + $0x20] sm:$0xff]
          %v522 = vld [vmem:[%s436 + $0x28] sm:$0xff]
          %v523 = vld [vmem:[%s436 + $0x30] sm:$0xff]
          %v524 = vld [vmem:[%s436 + $0x38] sm:$0xff]
          %v525 = vld [vmem:[%s436 + $0x40] sm:$0xff]
          %v526 = vld [vmem:[%s436 + $0x48] sm:$0xff]
          %v527 = vld [vmem:[%s436 + $0x50] sm:$0xff]
          %v528 = vld [vmem:[%s436 + $0x58] sm:$0xff]
          %v529 = vld [vmem:[%s436 + $0x60] sm:$0xff]
          %v530 = vld [vmem:[%s436 + $0x68] sm:$0xff]
          %v531 = vld [vmem:[%s436 + $0x70] sm:$0xff]
          %v532 = vld [vmem:[%s436 + $0x78] sm:$0xff]
          %v533 = vld [vmem:[%s445] sm:$0xff]
          %v534 = vld [vmem:[%s445 + $0x8] sm:$0xff]
          %v535 = vld [vmem:[%s445 + $0x10] sm:$0xff]
          %v536 = vld [vmem:[%s445 + $0x18] sm:$0xff]
          %v537 = vld [vmem:[%s445 + $0x20] sm:$0xff]
          %v538 = vld [vmem:[%s445 + $0x28] sm:$0xff]
          %v539 = vld [vmem:[%s445 + $0x30] sm:$0xff]
          %v540 = vld [vmem:[%s445 + $0x38] sm:$0xff]
          %v541 = vld [vmem:[%s445 + $0x40] sm:$0xff]
          %v542 = vld [vmem:[%s445 + $0x48] sm:$0xff]
          %v543 = vld [vmem:[%s445 + $0x50] sm:$0xff]
          %v544 = vld [vmem:[%s445 + $0x58] sm:$0xff]
          %v545 = vld [vmem:[%s445 + $0x60] sm:$0xff]
          %v546 = vld [vmem:[%s445 + $0x68] sm:$0xff]
          %v547 = vld [vmem:[%s445 + $0x70] sm:$0xff]
          %v548 = vld [vmem:[%s445 + $0x78] sm:$0xff]
          %v549 = vld [vmem:[#allocation10] sm:$0xff]
          %v550 = vld [vmem:[#allocation10 + $0x8] sm:$0xff]
          %v551 = vld [vmem:[#allocation10 + $0x10] sm:$0xff]
          %v552 = vld [vmem:[#allocation10 + $0x18] sm:$0xff]
          %v553 = vld [vmem:[#allocation10 + $0x20] sm:$0xff]
          %v554 = vld [vmem:[#allocation10 + $0x28] sm:$0xff]
          %v555 = vld [vmem:[#allocation10 + $0x30] sm:$0xff]
          %v556 = vld [vmem:[#allocation10 + $0x38] sm:$0xff]
          %v557 = vld [vmem:[#allocation10 + $0x40] sm:$0xff]
          %v558 = vld [vmem:[#allocation10 + $0x48] sm:$0xff]
          %v559 = vld [vmem:[#allocation10 + $0x50] sm:$0xff]
          %v560 = vld [vmem:[#allocation10 + $0x58] sm:$0xff]
          %v561 = vld [vmem:[#allocation10 + $0x60] sm:$0xff]
          %v562 = vld [vmem:[#allocation10 + $0x68] sm:$0xff]
          %v563 = vld [vmem:[#allocation10 + $0x70] sm:$0xff]
          %v564 = vld [vmem:[#allocation10 + $0x78] sm:$0xff]
          %565 = vmatprep.subr.mxu0 0.0
          %566 = vmatpush1.msra.mxu0 %v549
          %567 = vmatprep.subr.mxu0 0.0
          %568 = vmatpush1.msra.mxu0 %v550
          %569 = vmatprep.subr.mxu0 0.0
          %570 = vmatpush1.msra.mxu0 %v551
          %571 = vmatprep.subr.mxu0 0.0
          %572 = vmatpush1.msra.mxu0 %v552
          %573 = vmatprep.subr.mxu0 0.0
          %574 = vmatpush1.msra.mxu0 %v553
          %575 = vmatprep.subr.mxu0 0.0
          %576 = vmatpush1.msra.mxu0 %v554
          %577 = vmatprep.subr.mxu0 0.0
          %578 = vmatpush1.msra.mxu0 %v555
          %579 = vmatprep.subr.mxu0 0.0
          %580 = vmatpush1.msra.mxu0 %v556
          %581 = vmatprep.subr.mxu0 0.0
          %582 = vmatpush1.msra.mxu0 %v557
          %583 = vmatprep.subr.mxu0 0.0
          %584 = vmatpush1.msra.mxu0 %v558
          %585 = vmatprep.subr.mxu0 0.0
          %586 = vmatpush1.msra.mxu0 %v559
          %587 = vmatprep.subr.mxu0 0.0
          %588 = vmatpush1.msra.mxu0 %v560
          %589 = vmatprep.subr.mxu0 0.0
          %590 = vmatpush1.msra.mxu0 %v561
          %591 = vmatprep.subr.mxu0 0.0
          %592 = vmatpush1.msra.mxu0 %v562
          %593 = vmatprep.subr.mxu0 0.0
          %594 = vmatpush1.msra.mxu0 %v563
          %595 = vmatprep.subr.mxu0 0.0
          %596 = vmatpush1.msra.mxu0 %v564
          %597 = vmatprep.subr.mxu0 0.0
          %598 = vmatpush1.msra.mxu0 0.0
          %599 = vmatprep.subr.mxu0 0.0
          %600 = vmatpush1.msra.mxu0 0.0
          %601 = vmatprep.subr.mxu0 0.0
          %602 = vmatpush1.msra.mxu0 0.0
          %603 = vmatprep.subr.mxu0 0.0
          %604 = vmatpush1.msra.mxu0 0.0
          %605 = vmatprep.subr.mxu0 0.0
          %606 = vmatpush1.msra.mxu0 0.0
          %607 = vmatprep.subr.mxu0 0.0
          %608 = vmatpush1.msra.mxu0 0.0
          %609 = vmatprep.subr.mxu0 0.0
          %610 = vmatpush1.msra.mxu0 0.0
          %611 = vmatprep.subr.mxu0 0.0
          %612 = vmatpush1.msra.mxu0 0.0
          %613 = vmatprep.subr.mxu0 0.0
          %614 = vmatpush1.msra.mxu0 0.0
          %615 = vmatprep.subr.mxu0 0.0
          %616 = vmatpush1.msra.mxu0 0.0
          %617 = vmatprep.subr.mxu0 0.0
          %618 = vmatpush1.msra.mxu0 0.0
          %619 = vmatprep.subr.mxu0 0.0
          %620 = vmatpush1.msra.mxu0 0.0
          %621 = vmatprep.subr.mxu0 0.0
          %622 = vmatpush1.msra.mxu0 0.0
          %623 = vmatprep.subr.mxu0 0.0
          %624 = vmatpush1.msra.mxu0 0.0
          %625 = vmatprep.subr.mxu0 0.0
          %626 = vmatpush1.msra.mxu0 0.0
          %627 = vmatprep.subr.mxu0 0.0
          %628 = vmatpush1.msra.mxu0 0.0
          %629 = vmatprep.mubr.f32.mxu0 0.0
          %630 = vmatmul.mubr.f32.gmra.mrb[0].mxu0 %v533
          %v631 = vpop.f32.mrb[0].mxu0
          %v632 = vadd.f32 0.0, %v631
          %v633 = vpop.f32.mrb[0].mxu0
          %634 = vmatprep.mubr.f32.mxu0 0.0
          %635 = vmatmul.mubr.f32.gmra.mrb[0].mxu0 %v534
          %v636 = vpop.f32.mrb[0].mxu0
          %v637 = vadd.f32 0.0, %v636
          %v638 = vpop.f32.mrb[0].mxu0
          %639 = vmatprep.mubr.f32.mxu0 0.0
          %640 = vmatmul.mubr.f32.gmra.mrb[0].mxu0 %v535
          %v641 = vpop.f32.mrb[0].mxu0
          %v642 = vadd.f32 0.0, %v641
          %v643 = vpop.f32.mrb[0].mxu0
          %644 = vmatprep.mubr.f32.mxu0 0.0
          %645 = vmatmul.mubr.f32.gmra.mrb[0].mxu0 %v536
          %v646 = vpop.f32.mrb[0].mxu0
          %v647 = vadd.f32 0.0, %v646
          %v648 = vpop.f32.mrb[0].mxu0
          %649 = vmatprep.mubr.f32.mxu0 0.0
          %650 = vmatmul.mubr.f32.gmra.mrb[0].mxu0 %v537
          %v651 = vpop.f32.mrb[0].mxu0
          %v652 = vadd.f32 0.0, %v651
          %v653 = vpop.f32.mrb[0].mxu0
          %654 = vmatprep.mubr.f32.mxu0 0.0
          %655 = vmatmul.mubr.f32.gmra.mrb[0].mxu0 %v538
          %v656 = vpop.f32.mrb[0].mxu0
          %v657 = vadd.f32 0.0, %v656
          %v658 = vpop.f32.mrb[0].mxu0
          %659 = vmatprep.mubr.f32.mxu0 0.0
          %660 = vmatmul.mubr.f32.gmra.mrb[0].mxu0 %v539
          %v661 = vpop.f32.mrb[0].mxu0
          %v662 = vadd.f32 0.0, %v661
          %v663 = vpop.f32.mrb[0].mxu0
          %664 = vmatprep.mubr.f32.mxu0 0.0
          %665 = vmatmul.mubr.f32.gmra.mrb[0].mxu0 %v540
          %v666 = vpop.f32.mrb[0].mxu0
          %v667 = vadd.f32 0.0, %v666
          %v668 = vpop.f32.mrb[0].mxu0
          %669 = vmatprep.mubr.f32.mxu0 0.0
          %670 = vmatmul.mubr.f32.gmra.mrb[0].mxu0 %v541
          %v671 = vpop.f32.mrb[0].mxu0
          %v672 = vadd.f32 0.0, %v671
          %v673 = vpop.f32.mrb[0].mxu0
          %674 = vmatprep.mubr.f32.mxu0 0.0
          %675 = vmatmul.mubr.f32.gmra.mrb[0].mxu0 %v542
          %v676 = vpop.f32.mrb[0].mxu0
          %v677 = vadd.f32 0.0, %v676
          %v678 = vpop.f32.mrb[0].mxu0
          %679 = vmatprep.mubr.f32.mxu0 0.0
          %680 = vmatmul.mubr.f32.gmra.mrb[0].mxu0 %v543
          %v681 = vpop.f32.mrb[0].mxu0
          %v682 = vadd.f32 0.0, %v681
          %v683 = vpop.f32.mrb[0].mxu0
          %684 = vmatprep.mubr.f32.mxu0 0.0
          %685 = vmatmul.mubr.f32.gmra.mrb[0].mxu0 %v544
          %v686 = vpop.f32.mrb[0].mxu0
          %v687 = vadd.f32 0.0, %v686
          %v688 = vpop.f32.mrb[0].mxu0
          %689 = vmatprep.mubr.f32.mxu0 0.0
          %690 = vmatmul.mubr.f32.gmra.mrb[0].mxu0 %v545
          %v691 = vpop.f32.mrb[0].mxu0
          %v692 = vadd.f32 0.0, %v691
          %v693 = vpop.f32.mrb[0].mxu0
          %694 = vmatprep.mubr.f32.mxu0 0.0
          %695 = vmatmul.mubr.f32.gmra.mrb[0].mxu0 %v546
          %v696 = vpop.f32.mrb[0].mxu0
          %v697 = vadd.f32 0.0, %v696
          %v698 = vpop.f32.mrb[0].mxu0
          %699 = vmatprep.mubr.f32.mxu0 0.0
          %700 = vmatmul.mubr.f32.gmra.mrb[0].mxu0 %v547
          %v701 = vpop.f32.mrb[0].mxu0
          %v702 = vadd.f32 0.0, %v701
          %v703 = vpop.f32.mrb[0].mxu0
          %704 = vmatprep.mubr.f32.mxu0 0.0
          %705 = vmatmul.mubr.f32.gmra.mrb[0].mxu0 %v548
          %v706 = vpop.f32.mrb[0].mxu0
          %v707 = vadd.f32 0.0, %v706
          %v708 = vpop.f32.mrb[0].mxu0
          %709 = vdwg.mxu0
          %v710 = vadd.f32 %v517, %v632
          %v711 = vadd.f32 %v518, %v637
          %v712 = vadd.f32 %v519, %v642
          %v713 = vadd.f32 %v520, %v647
          %v714 = vadd.f32 %v521, %v652
          %v715 = vadd.f32 %v522, %v657
          %v716 = vadd.f32 %v523, %v662
          %v717 = vadd.f32 %v524, %v667
          %v718 = vadd.f32 %v525, %v672
          %v719 = vadd.f32 %v526, %v677
          %v720 = vadd.f32 %v527, %v682
          %v721 = vadd.f32 %v528, %v687
          %v722 = vadd.f32 %v529, %v692
          %v723 = vadd.f32 %v530, %v697
          %v724 = vadd.f32 %v531, %v702
          %v725 = vadd.f32 %v532, %v707
          %v726 = vld [vmem:[%s3] sm:$0x1]
          %v728 = vlaneseq
          %v729 = vshrl.u32 %v728, 7
          %v730 = vsub.s32 0, %v729
          %v731 = vrot.slane %v726, %v730
          %v733 = vadd.f32 %v710, %v731
          %v734 = vadd.f32 %v711, %v731
          %v735 = vadd.f32 %v712, %v731
          %v736 = vadd.f32 %v713, %v731
          %v737 = vadd.f32 %v714, %v731
          %v738 = vadd.f32 %v715, %v731
          %v739 = vadd.f32 %v716, %v731
          %v740 = vadd.f32 %v717, %v731
          %v741 = vadd.f32 %v718, %v731
          %v742 = vadd.f32 %v719, %v731
          %v743 = vadd.f32 %v720, %v731
          %v744 = vadd.f32 %v721, %v731
          %v745 = vadd.f32 %v722, %v731
          %v746 = vadd.f32 %v723, %v731
          %v747 = vadd.f32 %v724, %v731
          %v748 = vadd.f32 %v725, %v731
          %749 = vadd.xlane.f32.xlu0 %v733
          %v750 = vpop.xlane.xlu0 %749
          %751 = vadd.xlane.f32.xlu0 %v734
          %v752 = vpop.xlane.xlu0 %751
          %753 = vadd.xlane.f32.xlu0 %v735
          %v754 = vpop.xlane.xlu0 %753
          %755 = vadd.xlane.f32.xlu0 %v736
          %v756 = vpop.xlane.xlu0 %755
          %757 = vadd.xlane.f32.xlu0 %v737
          %v758 = vpop.xlane.xlu0 %757
          %759 = vadd.xlane.f32.xlu0 %v738
          %v760 = vpop.xlane.xlu0 %759
          %761 = vadd.xlane.f32.xlu0 %v739
          %v762 = vpop.xlane.xlu0 %761
          %763 = vadd.xlane.f32.xlu0 %v740
          %v764 = vpop.xlane.xlu0 %763
          %765 = vadd.xlane.f32.xlu0 %v741
          %v766 = vpop.xlane.xlu0 %765
          %767 = vadd.xlane.f32.xlu0 %v742
          %v768 = vpop.xlane.xlu0 %767
          %769 = vadd.xlane.f32.xlu0 %v743
          %v770 = vpop.xlane.xlu0 %769
          %771 = vadd.xlane.f32.xlu0 %v744
          %v772 = vpop.xlane.xlu0 %771
          %773 = vadd.xlane.f32.xlu0 %v745
          %v774 = vpop.xlane.xlu0 %773
          %775 = vadd.xlane.f32.xlu0 %v746
          %v776 = vpop.xlane.xlu0 %775
          %777 = vadd.xlane.f32.xlu0 %v747
          %v778 = vpop.xlane.xlu0 %777
          %779 = vadd.xlane.f32.xlu0 %v748
          %v780 = vpop.xlane.xlu0 %779
          %v781 = vmul.f32 %v750, 0.0078125
          %v782 = vmul.f32 %v752, 0.0078125
          %v783 = vmul.f32 %v754, 0.0078125
          %v784 = vmul.f32 %v756, 0.0078125
          %v785 = vmul.f32 %v758, 0.0078125
          %v786 = vmul.f32 %v760, 0.0078125
          %v787 = vmul.f32 %v762, 0.0078125
          %v788 = vmul.f32 %v764, 0.0078125
          %v789 = vmul.f32 %v766, 0.0078125
          %v790 = vmul.f32 %v768, 0.0078125
          %v791 = vmul.f32 %v770, 0.0078125
          %v792 = vmul.f32 %v772, 0.0078125
          %v793 = vmul.f32 %v774, 0.0078125
          %v794 = vmul.f32 %v776, 0.0078125
          %v795 = vmul.f32 %v778, 0.0078125
          %v796 = vmul.f32 %v780, 0.0078125
          %v797 = vmul.f32 %v733, %v733
          %v798 = vmul.f32 %v734, %v734
          %v799 = vmul.f32 %v735, %v735
          %v800 = vmul.f32 %v736, %v736
          %v801 = vmul.f32 %v737, %v737
          %v802 = vmul.f32 %v738, %v738
          %v803 = vmul.f32 %v739, %v739
          %v804 = vmul.f32 %v740, %v740
          %v805 = vmul.f32 %v741, %v741
          %v806 = vmul.f32 %v742, %v742
          %v807 = vmul.f32 %v743, %v743
          %v808 = vmul.f32 %v744, %v744
          %v809 = vmul.f32 %v745, %v745
          %v810 = vmul.f32 %v746, %v746
          %v811 = vmul.f32 %v747, %v747
          %v812 = vmul.f32 %v748, %v748
          %813 = vadd.xlane.f32.xlu0 %v797
          %v814 = vpop.xlane.xlu0 %813
          %815 = vadd.xlane.f32.xlu0 %v798
          %v816 = vpop.xlane.xlu0 %815
          %817 = vadd.xlane.f32.xlu0 %v799
          %v818 = vpop.xlane.xlu0 %817
          %819 = vadd.xlane.f32.xlu0 %v800
          %v820 = vpop.xlane.xlu0 %819
          %821 = vadd.xlane.f32.xlu0 %v801
          %v822 = vpop.xlane.xlu0 %821
          %823 = vadd.xlane.f32.xlu0 %v802
          %v824 = vpop.xlane.xlu0 %823
          %825 = vadd.xlane.f32.xlu0 %v803
          %v826 = vpop.xlane.xlu0 %825
          %827 = vadd.xlane.f32.xlu0 %v804
          %v828 = vpop.xlane.xlu0 %827
          %829 = vadd.xlane.f32.xlu0 %v805
          %v830 = vpop.xlane.xlu0 %829
          %831 = vadd.xlane.f32.xlu0 %v806
          %v832 = vpop.xlane.xlu0 %831
          %833 = vadd.xlane.f32.xlu0 %v807
          %v834 = vpop.xlane.xlu0 %833
          %835 = vadd.xlane.f32.xlu0 %v808
          %v836 = vpop.xlane.xlu0 %835
          %837 = vadd.xlane.f32.xlu0 %v809
          %v838 = vpop.xlane.xlu0 %837
          %839 = vadd.xlane.f32.xlu0 %v810
          %v840 = vpop.xlane.xlu0 %839
          %841 = vadd.xlane.f32.xlu0 %v811
          %v842 = vpop.xlane.xlu0 %841
          %843 = vadd.xlane.f32.xlu0 %v812
          %v844 = vpop.xlane.xlu0 %843
          %v845 = vmul.f32 %v814, 0.0078125
          %v846 = vmul.f32 %v816, 0.0078125
          %v847 = vmul.f32 %v818, 0.0078125
          %v848 = vmul.f32 %v820, 0.0078125
          %v849 = vmul.f32 %v822, 0.0078125
          %v850 = vmul.f32 %v824, 0.0078125
          %v851 = vmul.f32 %v826, 0.0078125
          %v852 = vmul.f32 %v828, 0.0078125
          %v853 = vmul.f32 %v830, 0.0078125
          %v854 = vmul.f32 %v832, 0.0078125
          %v855 = vmul.f32 %v834, 0.0078125
          %v856 = vmul.f32 %v836, 0.0078125
          %v857 = vmul.f32 %v838, 0.0078125
          %v858 = vmul.f32 %v840, 0.0078125
          %v859 = vmul.f32 %v842, 0.0078125
          %v860 = vmul.f32 %v844, 0.0078125
          %v861 = vmul.f32 %v781, %v781
          %v862 = vmul.f32 %v782, %v782
          %v863 = vmul.f32 %v783, %v783
          %v864 = vmul.f32 %v784, %v784
          %v865 = vmul.f32 %v785, %v785
          %v866 = vmul.f32 %v786, %v786
          %v867 = vmul.f32 %v787, %v787
          %v868 = vmul.f32 %v788, %v788
          %v869 = vmul.f32 %v789, %v789
          %v870 = vmul.f32 %v790, %v790
          %v871 = vmul.f32 %v791, %v791
          %v872 = vmul.f32 %v792, %v792
          %v873 = vmul.f32 %v793, %v793
          %v874 = vmul.f32 %v794, %v794
          %v875 = vmul.f32 %v795, %v795
          %v876 = vmul.f32 %v796, %v796
          %v877 = vsub.f32 %v845, %v861
          %v878 = vsub.f32 %v846, %v862
          %v879 = vsub.f32 %v847, %v863
          %v880 = vsub.f32 %v848, %v864
          %v881 = vsub.f32 %v849, %v865
          %v882 = vsub.f32 %v850, %v866
          %v883 = vsub.f32 %v851, %v867
          %v884 = vsub.f32 %v852, %v868
          %v885 = vsub.f32 %v853, %v869
          %v886 = vsub.f32 %v854, %v870
          %v887 = vsub.f32 %v855, %v871
          %v888 = vsub.f32 %v856, %v872
          %v889 = vsub.f32 %v857, %v873
          %v890 = vsub.f32 %v858, %v874
          %v891 = vsub.f32 %v859, %v875
          %v892 = vsub.f32 %v860, %v876
          %v893 = vsub.f32 %v733, %v781
          %v894 = vsub.f32 %v734, %v782
          %v895 = vsub.f32 %v735, %v783
          %v896 = vsub.f32 %v736, %v784
          %v897 = vsub.f32 %v737, %v785
          %v898 = vsub.f32 %v738, %v786
          %v899 = vsub.f32 %v739, %v787
          %v900 = vsub.f32 %v740, %v788
          %v901 = vsub.f32 %v741, %v789
          %v902 = vsub.f32 %v742, %v790
          %v903 = vsub.f32 %v743, %v791
          %v904 = vsub.f32 %v744, %v792
          %v905 = vsub.f32 %v745, %v793
          %v906 = vsub.f32 %v746, %v794
          %v907 = vsub.f32 %v747, %v795
          %v908 = vsub.f32 %v748, %v796
          %v909 = vadd.f32 %v877, 1e-05
          %v910 = vadd.f32 %v878, 1e-05
          %v911 = vadd.f32 %v879, 1e-05
          %v912 = vadd.f32 %v880, 1e-05
          %v913 = vadd.f32 %v881, 1e-05
          %v914 = vadd.f32 %v882, 1e-05
          %v915 = vadd.f32 %v883, 1e-05
          %v916 = vadd.f32 %v884, 1e-05
          %v917 = vadd.f32 %v885, 1e-05
          %v918 = vadd.f32 %v886, 1e-05
          %v919 = vadd.f32 %v887, 1e-05
          %v920 = vadd.f32 %v888, 1e-05
          %v921 = vadd.f32 %v889, 1e-05
          %v922 = vadd.f32 %v890, 1e-05
          %v923 = vadd.f32 %v891, 1e-05
          %v924 = vadd.f32 %v892, 1e-05
          %v925 = vrsqrt.pop %v909
          %v926 = vrsqrt.pop %v910
          %v927 = vrsqrt.pop %v911
          %v928 = vrsqrt.pop %v912
          %v929 = vrsqrt.pop %v913
          %v930 = vrsqrt.pop %v914
          %v931 = vrsqrt.pop %v915
          %v932 = vrsqrt.pop %v916
          %v933 = vrsqrt.pop %v917
          %v934 = vrsqrt.pop %v918
          %v935 = vrsqrt.pop %v919
          %v936 = vrsqrt.pop %v920
          %v937 = vrsqrt.pop %v921
          %v938 = vrsqrt.pop %v922
          %v939 = vrsqrt.pop %v923
          %v940 = vrsqrt.pop %v924
          %v941 = vmul.f32 %v893, %v925
          %v942 = vmul.f32 %v894, %v926
          %v943 = vmul.f32 %v895, %v927
          %v944 = vmul.f32 %v896, %v928
          %v945 = vmul.f32 %v897, %v929
          %v946 = vmul.f32 %v898, %v930
          %v947 = vmul.f32 %v899, %v931
          %v948 = vmul.f32 %v900, %v932
          %v949 = vmul.f32 %v901, %v933
          %v950 = vmul.f32 %v902, %v934
          %v951 = vmul.f32 %v903, %v935
          %v952 = vmul.f32 %v904, %v936
          %v953 = vmul.f32 %v905, %v937
          %v954 = vmul.f32 %v906, %v938
          %v955 = vmul.f32 %v907, %v939
          %v956 = vmul.f32 %v908, %v940
          %v957 = vld [vmem:[%s4] sm:$0x1]
          %v959 = vlaneseq
          %v960 = vshrl.u32 %v959, 7
          %v961 = vsub.s32 0, %v960
          %v962 = vrot.slane %v957, %v961
          %v964 = vmul.f32 %v941, %v962
          %v965 = vmul.f32 %v942, %v962
          %v966 = vmul.f32 %v943, %v962
          %v967 = vmul.f32 %v944, %v962
          %v968 = vmul.f32 %v945, %v962
          %v969 = vmul.f32 %v946, %v962
          %v970 = vmul.f32 %v947, %v962
          %v971 = vmul.f32 %v948, %v962
          %v972 = vmul.f32 %v949, %v962
          %v973 = vmul.f32 %v950, %v962
          %v974 = vmul.f32 %v951, %v962
          %v975 = vmul.f32 %v952, %v962
          %v976 = vmul.f32 %v953, %v962
          %v977 = vmul.f32 %v954, %v962
          %v978 = vmul.f32 %v955, %v962
          %v979 = vmul.f32 %v956, %v962
          %v980 = vld [vmem:[%s5] sm:$0x1]
          %v982 = vlaneseq
          %v983 = vshrl.u32 %v982, 7
          %v984 = vsub.s32 0, %v983
          %v985 = vrot.slane %v980, %v984
          %v987 = vadd.f32 %v964, %v985
          %v988 = vadd.f32 %v965, %v985
          %v989 = vadd.f32 %v966, %v985
          %v990 = vadd.f32 %v967, %v985
          %v991 = vadd.f32 %v968, %v985
          %v992 = vadd.f32 %v969, %v985
          %v993 = vadd.f32 %v970, %v985
          %v994 = vadd.f32 %v971, %v985
          %v995 = vadd.f32 %v972, %v985
          %v996 = vadd.f32 %v973, %v985
          %v997 = vadd.f32 %v974, %v985
          %v998 = vadd.f32 %v975, %v985
          %v999 = vadd.f32 %v976, %v985
          %v1000 = vadd.f32 %v977, %v985
          %v1001 = vadd.f32 %v978, %v985
          %v1002 = vadd.f32 %v979, %v985
          %1003 = vst [vmem:[#allocation2] sm:$0xff] %v733
          %1004 = vst [vmem:[#allocation2 + $0x8] sm:$0xff] %v734
          %1005 = vst [vmem:[#allocation2 + $0x10] sm:$0xff] %v735
          %1006 = vst [vmem:[#allocation2 + $0x18] sm:$0xff] %v736
          %1007 = vst [vmem:[#allocation2 + $0x20] sm:$0xff] %v737
          %1008 = vst [vmem:[#allocation2 + $0x28] sm:$0xff] %v738
          %1009 = vst [vmem:[#allocation2 + $0x30] sm:$0xff] %v739
          %1010 = vst [vmem:[#allocation2 + $0x38] sm:$0xff] %v740
          %1011 = vst [vmem:[#allocation2 + $0x40] sm:$0xff] %v741
          %1012 = vst [vmem:[#allocation2 + $0x48] sm:$0xff] %v742
          %1013 = vst [vmem:[#allocation2 + $0x50] sm:$0xff] %v743
          %1014 = vst [vmem:[#allocation2 + $0x58] sm:$0xff] %v744
          %1015 = vst [vmem:[#allocation2 + $0x60] sm:$0xff] %v745
          %1016 = vst [vmem:[#allocation2 + $0x68] sm:$0xff] %v746
          %1017 = vst [vmem:[#allocation2 + $0x70] sm:$0xff] %v747
          %1018 = vst [vmem:[#allocation2 + $0x78] sm:$0xff] %v748
          %1019 = vst [vmem:[#allocation3] sm:$0xff] %v987
          %1020 = vst [vmem:[#allocation3 + $0x8] sm:$0xff] %v988
          %1021 = vst [vmem:[#allocation3 + $0x10] sm:$0xff] %v989
          %1022 = vst [vmem:[#allocation3 + $0x18] sm:$0xff] %v990
          %1023 = vst [vmem:[#allocation3 + $0x20] sm:$0xff] %v991
          %1024 = vst [vmem:[#allocation3 + $0x28] sm:$0xff] %v992
          %1025 = vst [vmem:[#allocation3 + $0x30] sm:$0xff] %v993
          %1026 = vst [vmem:[#allocation3 + $0x38] sm:$0xff] %v994
          %1027 = vst [vmem:[#allocation3 + $0x40] sm:$0xff] %v995
          %1028 = vst [vmem:[#allocation3 + $0x48] sm:$0xff] %v996
          %1029 = vst [vmem:[#allocation3 + $0x50] sm:$0xff] %v997
          %1030 = vst [vmem:[#allocation3 + $0x58] sm:$0xff] %v998
          %1031 = vst [vmem:[#allocation3 + $0x60] sm:$0xff] %v999
          %1032 = vst [vmem:[#allocation3 + $0x68] sm:$0xff] %v1000
          %1033 = vst [vmem:[#allocation3 + $0x70] sm:$0xff] %v1001
          %1034 = vst [vmem:[#allocation3 + $0x78] sm:$0xff] %v1002
          %1035 = vst [vmem:[#allocation4] sm:$0xff] 0.0
          %1036 = vst [vmem:[#allocation4 + $0x8] sm:$0xff] 0.0
          %1037 = vst [vmem:[#allocation4 + $0x10] sm:$0xff] 0.0
          %1038 = vst [vmem:[#allocation4 + $0x18] sm:$0xff] 0.0
          %1039 = vst [vmem:[#allocation4 + $0x20] sm:$0xff] 0.0
          %1040 = vst [vmem:[#allocation4 + $0x28] sm:$0xff] 0.0
          %1041 = vst [vmem:[#allocation4 + $0x30] sm:$0xff] 0.0
          %1042 = vst [vmem:[#allocation4 + $0x38] sm:$0xff] 0.0
          %1043 = vst [vmem:[#allocation4 + $0x40] sm:$0xff] 0.0
          %1044 = vst [vmem:[#allocation4 + $0x48] sm:$0xff] 0.0
          %1045 = vst [vmem:[#allocation4 + $0x50] sm:$0xff] 0.0
          %1046 = vst [vmem:[#allocation4 + $0x58] sm:$0xff] 0.0
          %1047 = vst [vmem:[#allocation4 + $0x60] sm:$0xff] 0.0
          %1048 = vst [vmem:[#allocation4 + $0x68] sm:$0xff] 0.0
          %1049 = vst [vmem:[#allocation4 + $0x70] sm:$0xff] 0.0
          %1050 = vst [vmem:[#allocation4 + $0x78] sm:$0xff] 0.0
        $region84: #{tpu_custom_call.1} parent=59 // pred_fallthru
          _
        %v1051 = vld [vmem:[#allocation3] sm:$0xff]
        %v1052 = vld [vmem:[#allocation3 + $0x8] sm:$0xff]
        %v1053 = vld [vmem:[#allocation3 + $0x10] sm:$0xff]
        %v1054 = vld [vmem:[#allocation3 + $0x18] sm:$0xff]
        %v1055 = vld [vmem:[#allocation3 + $0x20] sm:$0xff]
        %v1056 = vld [vmem:[#allocation3 + $0x28] sm:$0xff]
        %v1057 = vld [vmem:[#allocation3 + $0x30] sm:$0xff]
        %v1058 = vld [vmem:[#allocation3 + $0x38] sm:$0xff]
        %v1059 = vld [vmem:[#allocation3 + $0x40] sm:$0xff]
        %v1060 = vld [vmem:[#allocation3 + $0x48] sm:$0xff]
        %v1061 = vld [vmem:[#allocation3 + $0x50] sm:$0xff]
        %v1062 = vld [vmem:[#allocation3 + $0x58] sm:$0xff]
        %v1063 = vld [vmem:[#allocation3 + $0x60] sm:$0xff]
        %v1064 = vld [vmem:[#allocation3 + $0x68] sm:$0xff]
        %v1065 = vld [vmem:[#allocation3 + $0x70] sm:$0xff]
        %v1066 = vld [vmem:[#allocation3 + $0x78] sm:$0xff]
        %v1067 = vld [vmem:[#allocation11] sm:$0xff]
        %v1068 = vld [vmem:[#allocation11 + $0x8] sm:$0xff]
        %v1069 = vld [vmem:[#allocation11 + $0x10] sm:$0xff]
        %v1070 = vld [vmem:[#allocation11 + $0x18] sm:$0xff]
        %v1071 = vld [vmem:[#allocation11 + $0x20] sm:$0xff]
        %v1072 = vld [vmem:[#allocation11 + $0x28] sm:$0xff]
        %v1073 = vld [vmem:[#allocation11 + $0x30] sm:$0xff]
        %v1074 = vld [vmem:[#allocation11 + $0x38] sm:$0xff]
        %v1075 = vld [vmem:[#allocation11 + $0x40] sm:$0xff]
        %v1076 = vld [vmem:[#allocation11 + $0x48] sm:$0xff]
        %v1077 = vld [vmem:[#allocation11 + $0x50] sm:$0xff]
        %v1078 = vld [vmem:[#allocation11 + $0x58] sm:$0xff]
        %v1079 = vld [vmem:[#allocation11 + $0x60] sm:$0xff]
        %v1080 = vld [vmem:[#allocation11 + $0x68] sm:$0xff]
        %v1081 = vld [vmem:[#allocation11 + $0x70] sm:$0xff]
        %v1082 = vld [vmem:[#allocation11 + $0x78] sm:$0xff]
        %v1083 = vld [vmem:[#allocation11 + $0x80] sm:$0xff]
        %v1084 = vld [vmem:[#allocation11 + $0x88] sm:$0xff]
        %v1085 = vld [vmem:[#allocation11 + $0x90] sm:$0xff]
        %v1086 = vld [vmem:[#allocation11 + $0x98] sm:$0xff]
        %v1087 = vld [vmem:[#allocation11 + $0xa0] sm:$0xff]
        %v1088 = vld [vmem:[#allocation11 + $0xa8] sm:$0xff]
        %v1089 = vld [vmem:[#allocation11 + $0xb0] sm:$0xff]
        %v1090 = vld [vmem:[#allocation11 + $0xb8] sm:$0xff]
        %v1091 = vld [vmem:[#allocation11 + $0xc0] sm:$0xff]
        %v1092 = vld [vmem:[#allocation11 + $0xc8] sm:$0xff]
        %v1093 = vld [vmem:[#allocation11 + $0xd0] sm:$0xff]
        %v1094 = vld [vmem:[#allocation11 + $0xd8] sm:$0xff]
        %v1095 = vld [vmem:[#allocation11 + $0xe0] sm:$0xff]
        %v1096 = vld [vmem:[#allocation11 + $0xe8] sm:$0xff]
        %v1097 = vld [vmem:[#allocation11 + $0xf0] sm:$0xff]
        %v1098 = vld [vmem:[#allocation11 + $0xf8] sm:$0xff]
        %v1099 = vld [vmem:[#allocation11 + $0x100] sm:$0xff]
        %v1100 = vld [vmem:[#allocation11 + $0x108] sm:$0xff]
        %v1101 = vld [vmem:[#allocation11 + $0x110] sm:$0xff]
        %v1102 = vld [vmem:[#allocation11 + $0x118] sm:$0xff]
        %v1103 = vld [vmem:[#allocation11 + $0x120] sm:$0xff]
        %v1104 = vld [vmem:[#allocation11 + $0x128] sm:$0xff]
        %v1105 = vld [vmem:[#allocation11 + $0x130] sm:$0xff]
        %v1106 = vld [vmem:[#allocation11 + $0x138] sm:$0xff]
        %v1107 = vld [vmem:[#allocation11 + $0x140] sm:$0xff]
        %v1108 = vld [vmem:[#allocation11 + $0x148] sm:$0xff]
        %v1109 = vld [vmem:[#allocation11 + $0x150] sm:$0xff]
        %v1110 = vld [vmem:[#allocation11 + $0x158] sm:$0xff]
        %v1111 = vld [vmem:[#allocation11 + $0x160] sm:$0xff]
        %v1112 = vld [vmem:[#allocation11 + $0x168] sm:$0xff]
        %v1113 = vld [vmem:[#allocation11 + $0x170] sm:$0xff]
        %v1114 = vld [vmem:[#allocation11 + $0x178] sm:$0xff]
        %v1115 = vld [vmem:[#allocation11 + $0x180] sm:$0xff]
        %v1116 = vld [vmem:[#allocation11 + $0x188] sm:$0xff]
        %v1117 = vld [vmem:[#allocation11 + $0x190] sm:$0xff]
        %v1118 = vld [vmem:[#allocation11 + $0x198] sm:$0xff]
        %v1119 = vld [vmem:[#allocation11 + $0x1a0] sm:$0xff]
        %v1120 = vld [vmem:[#allocation11 + $0x1a8] sm:$0xff]
        %v1121 = vld [vmem:[#allocation11 + $0x1b0] sm:$0xff]
        %v1122 = vld [vmem:[#allocation11 + $0x1b8] sm:$0xff]
        %v1123 = vld [vmem:[#allocation11 + $0x1c0] sm:$0xff]
        %v1124 = vld [vmem:[#allocation11 + $0x1c8] sm:$0xff]
        %v1125 = vld [vmem:[#allocation11 + $0x1d0] sm:$0xff]
        %v1126 = vld [vmem:[#allocation11 + $0x1d8] sm:$0xff]
        %v1127 = vld [vmem:[#allocation11 + $0x1e0] sm:$0xff]
        %v1128 = vld [vmem:[#allocation11 + $0x1e8] sm:$0xff]
        %v1129 = vld [vmem:[#allocation11 + $0x1f0] sm:$0xff]
        %v1130 = vld [vmem:[#allocation11 + $0x1f8] sm:$0xff]
        %v1131 = vld [vmem:[%s509] sm:$0xf]
        %v1133 = vlaneseq
        %v1134 = vshrl.u32 %v1133, 7
        %v1135 = vsub.s32 0, %v1134
        %v1136 = vrot.slane %v1131, %v1135
        %v1137 = vlaneseq
        %v1138 = vshrl.u32 %v1137, 7
        %v1139 = vsub.s32 1, %v1138
        %v1140 = vrot.slane %v1131, %v1139
        %v1141 = vlaneseq
        %v1142 = vshrl.u32 %v1141, 7
        %v1143 = vsub.s32 2, %v1142
        %v1144 = vrot.slane %v1131, %v1143
        %v1145 = vlaneseq
        %v1146 = vshrl.u32 %v1145, 7
        %v1147 = vsub.s32 3, %v1146
        %v1148 = vrot.slane %v1131, %v1147
        %1153 = vmatprep.subr.mxu0 %v1068
        %1154 = vmatpush1.msra.mxu0 %v1067
        %1155 = vmatprep.subr.mxu0 %v1072
        %1156 = vmatpush1.msra.mxu0 %v1071
        %1157 = vmatprep.subr.mxu0 %v1076
        %1158 = vmatpush1.msra.mxu0 %v1075
        %1159 = vmatprep.subr.mxu0 %v1080
        %1160 = vmatpush1.msra.mxu0 %v1079
        %1161 = vmatprep.subr.mxu0 %v1084
        %1162 = vmatpush1.msra.mxu0 %v1083
        %1163 = vmatprep.subr.mxu0 %v1088
        %1164 = vmatpush1.msra.mxu0 %v1087
        %1165 = vmatprep.subr.mxu0 %v1092
        %1166 = vmatpush1.msra.mxu0 %v1091
        %1167 = vmatprep.subr.mxu0 %v1096
        %1168 = vmatpush1.msra.mxu0 %v1095
        %1169 = vmatprep.subr.mxu0 %v1100
        %1170 = vmatpush1.msra.mxu0 %v1099
        %1171 = vmatprep.subr.mxu0 %v1104
        %1172 = vmatpush1.msra.mxu0 %v1103
        %1173 = vmatprep.subr.mxu0 %v1108
        %1174 = vmatpush1.msra.mxu0 %v1107
        %1175 = vmatprep.subr.mxu0 %v1112
        %1176 = vmatpush1.msra.mxu0 %v1111
        %1177 = vmatprep.subr.mxu0 %v1116
        %1178 = vmatpush1.msra.mxu0 %v1115
        %1179 = vmatprep.subr.mxu0 %v1120
        %1180 = vmatpush1.msra.mxu0 %v1119
        %1181 = vmatprep.subr.mxu0 %v1124
        %1182 = vmatpush1.msra.mxu0 %v1123
        %1183 = vmatprep.subr.mxu0 %v1128
        %1184 = vmatpush1.msra.mxu0 %v1127
        %1185 = vmatprep.subr.mxu0 0.0
        %1186 = vmatpush1.msra.mxu0 0.0
        %1187 = vmatprep.subr.mxu0 0.0
        %1188 = vmatpush1.msra.mxu0 0.0
        %1189 = vmatprep.subr.mxu0 0.0
        %1190 = vmatpush1.msra.mxu0 0.0
        %1191 = vmatprep.subr.mxu0 0.0
        %1192 = vmatpush1.msra.mxu0 0.0
        %1193 = vmatprep.subr.mxu0 0.0
        %1194 = vmatpush1.msra.mxu0 0.0
        %1195 = vmatprep.subr.mxu0 0.0
        %1196 = vmatpush1.msra.mxu0 0.0
        %1197 = vmatprep.subr.mxu0 0.0
        %1198 = vmatpush1.msra.mxu0 0.0
        %1199 = vmatprep.subr.mxu0 0.0
        %1200 = vmatpush1.msra.mxu0 0.0
        %1201 = vmatprep.subr.mxu0 0.0
        %1202 = vmatpush1.msra.mxu0 0.0
        %1203 = vmatprep.subr.mxu0 0.0
        %1204 = vmatpush1.msra.mxu0 0.0
        %1205 = vmatprep.subr.mxu0 0.0
        %1206 = vmatpush1.msra.mxu0 0.0
        %1207 = vmatprep.subr.mxu0 0.0
        %1208 = vmatpush1.msra.mxu0 0.0
        %1209 = vmatprep.subr.mxu0 0.0
        %1210 = vmatpush1.msra.mxu0 0.0
        %1211 = vmatprep.subr.mxu0 0.0
        %1212 = vmatpush1.msra.mxu0 0.0
        %1213 = vmatprep.subr.mxu0 0.0
        %1214 = vmatpush1.msra.mxu0 0.0
        %1215 = vmatprep.subr.mxu0 0.0
        %1216 = vmatpush1.msra.mxu0 0.0
        %1217 = vmatprep.mubr.f32.mxu0 0.0
        %1218 = vmatmul.mubr.f32.gmra.mrb[0].mxu0 %v1051
        %v1219 = vpop.f32.mrb[0].mxu0
        %v1220 = vadd.f32 %v1136, %v1219
        %v1221 = vpop.f32.mrb[0].mxu0
        %v1222 = vadd.f32 %v1140, %v1221
        %1223 = vmatprep.mubr.f32.mxu0 0.0
        %1224 = vmatmul.mubr.f32.gmra.mrb[0].mxu0 %v1052
        %v1225 = vpop.f32.mrb[0].mxu0
        %v1226 = vadd.f32 %v1136, %v1225
        %v1227 = vpop.f32.mrb[0].mxu0
        %v1228 = vadd.f32 %v1140, %v1227
        %1229 = vmatprep.mubr.f32.mxu0 0.0
        %1230 = vmatmul.mubr.f32.gmra.mrb[0].mxu0 %v1053
        %v1231 = vpop.f32.mrb[0].mxu0
        %v1232 = vadd.f32 %v1136, %v1231
        %v1233 = vpop.f32.mrb[0].mxu0
        %v1234 = vadd.f32 %v1140, %v1233
        %1235 = vmatprep.mubr.f32.mxu0 0.0
        %1236 = vmatmul.mubr.f32.gmra.mrb[0].mxu0 %v1054
        %v1237 = vpop.f32.mrb[0].mxu0
        %v1238 = vadd.f32 %v1136, %v1237
        %v1239 = vpop.f32.mrb[0].mxu0
        %v1240 = vadd.f32 %v1140, %v1239
        %1241 = vmatprep.mubr.f32.mxu0 0.0
        %1242 = vmatmul.mubr.f32.gmra.mrb[0].mxu0 %v1055
        %v1243 = vpop.f32.mrb[0].mxu0
        %v1244 = vadd.f32 %v1136, %v1243
        %v1245 = vpop.f32.mrb[0].mxu0
        %v1246 = vadd.f32 %v1140, %v1245
        %1247 = vmatprep.mubr.f32.mxu0 0.0
        %1248 = vmatmul.mubr.f32.gmra.mrb[0].mxu0 %v1056
        %v1249 = vpop.f32.mrb[0].mxu0
        %v1250 = vadd.f32 %v1136, %v1249
        %v1251 = vpop.f32.mrb[0].mxu0
        %v1252 = vadd.f32 %v1140, %v1251
        %1253 = vmatprep.mubr.f32.mxu0 0.0
        %1254 = vmatmul.mubr.f32.gmra.mrb[0].mxu0 %v1057
        %v1255 = vpop.f32.mrb[0].mxu0
        %v1256 = vadd.f32 %v1136, %v1255
        %v1257 = vpop.f32.mrb[0].mxu0
        %v1258 = vadd.f32 %v1140, %v1257
        %1259 = vmatprep.mubr.f32.mxu0 0.0
        %1260 = vmatmul.mubr.f32.gmra.mrb[0].mxu0 %v1058
        %v1261 = vpop.f32.mrb[0].mxu0
        %v1262 = vadd.f32 %v1136, %v1261
        %v1263 = vpop.f32.mrb[0].mxu0
        %v1264 = vadd.f32 %v1140, %v1263
        %1265 = vmatprep.mubr.f32.mxu0 0.0
        %1266 = vmatmul.mubr.f32.gmra.mrb[0].mxu0 %v1059
        %v1267 = vpop.f32.mrb[0].mxu0
        %v1268 = vadd.f32 %v1136, %v1267
        %v1269 = vpop.f32.mrb[0].mxu0
        %v1270 = vadd.f32 %v1140, %v1269
        %1271 = vmatprep.mubr.f32.mxu0 0.0
        %1272 = vmatmul.mubr.f32.gmra.mrb[0].mxu0 %v1060
        %v1273 = vpop.f32.mrb[0].mxu0
        %v1274 = vadd.f32 %v1136, %v1273
        %v1275 = vpop.f32.mrb[0].mxu0
        %v1276 = vadd.f32 %v1140, %v1275
        %1277 = vmatprep.mubr.f32.mxu0 0.0
        %1278 = vmatmul.mubr.f32.gmra.mrb[0].mxu0 %v1061
        %v1279 = vpop.f32.mrb[0].mxu0
        %v1280 = vadd.f32 %v1136, %v1279
        %v1281 = vpop.f32.mrb[0].mxu0
        %v1282 = vadd.f32 %v1140, %v1281
        %1283 = vmatprep.mubr.f32.mxu0 0.0
        %1284 = vmatmul.mubr.f32.gmra.mrb[0].mxu0 %v1062
        %v1285 = vpop.f32.mrb[0].mxu0
        %v1286 = vadd.f32 %v1136, %v1285
        %v1287 = vpop.f32.mrb[0].mxu0
        %v1288 = vadd.f32 %v1140, %v1287
        %1289 = vmatprep.mubr.f32.mxu0 0.0
        %1290 = vmatmul.mubr.f32.gmra.mrb[0].mxu0 %v1063
        %v1291 = vpop.f32.mrb[0].mxu0
        %v1292 = vadd.f32 %v1136, %v1291
        %v1293 = vpop.f32.mrb[0].mxu0
        %v1294 = vadd.f32 %v1140, %v1293
        %1295 = vmatprep.mubr.f32.mxu0 0.0
        %1296 = vmatmul.mubr.f32.gmra.mrb[0].mxu0 %v1064
        %v1297 = vpop.f32.mrb[0].mxu0
        %v1298 = vadd.f32 %v1136, %v1297
        %v1299 = vpop.f32.mrb[0].mxu0
        %v1300 = vadd.f32 %v1140, %v1299
        %1301 = vmatprep.mubr.f32.mxu0 0.0
        %1302 = vmatmul.mubr.f32.gmra.mrb[0].mxu0 %v1065
        %v1303 = vpop.f32.mrb[0].mxu0
        %v1304 = vadd.f32 %v1136, %v1303
        %v1305 = vpop.f32.mrb[0].mxu0
        %v1306 = vadd.f32 %v1140, %v1305
        %1307 = vmatprep.mubr.f32.mxu0 0.0
        %1308 = vmatmul.mubr.f32.gmra.mrb[0].mxu0 %v1066
        %v1309 = vpop.f32.mrb[0].mxu0
        %v1310 = vadd.f32 %v1136, %v1309
        %v1311 = vpop.f32.mrb[0].mxu0
        %v1312 = vadd.f32 %v1140, %v1311
        %1313 = vdwg.mxu0
        %1314 = vmatprep.subr.mxu0 %v1070
        %1315 = vmatpush1.msra.mxu0 %v1069
        %1316 = vmatprep.subr.mxu0 %v1074
        %1317 = vmatpush1.msra.mxu0 %v1073
        %1318 = vmatprep.subr.mxu0 %v1078
        %1319 = vmatpush1.msra.mxu0 %v1077
        %1320 = vmatprep.subr.mxu0 %v1082
        %1321 = vmatpush1.msra.mxu0 %v1081
        %1322 = vmatprep.subr.mxu0 %v1086
        %1323 = vmatpush1.msra.mxu0 %v1085
        %1324 = vmatprep.subr.mxu0 %v1090
        %1325 = vmatpush1.msra.mxu0 %v1089
        %1326 = vmatprep.subr.mxu0 %v1094
        %1327 = vmatpush1.msra.mxu0 %v1093
        %1328 = vmatprep.subr.mxu0 %v1098
        %1329 = vmatpush1.msra.mxu0 %v1097
        %1330 = vmatprep.subr.mxu0 %v1102
        %1331 = vmatpush1.msra.mxu0 %v1101
        %1332 = vmatprep.subr.mxu0 %v1106
        %1333 = vmatpush1.msra.mxu0 %v1105
        %1334 = vmatprep.subr.mxu0 %v1110
        %1335 = vmatpush1.msra.mxu0 %v1109
        %1336 = vmatprep.subr.mxu0 %v1114
        %1337 = vmatpush1.msra.mxu0 %v1113
        %1338 = vmatprep.subr.mxu0 %v1118
        %1339 = vmatpush1.msra.mxu0 %v1117
        %1340 = vmatprep.subr.mxu0 %v1122
        %1341 = vmatpush1.msra.mxu0 %v1121
        %1342 = vmatprep.subr.mxu0 %v1126
        %1343 = vmatpush1.msra.mxu0 %v1125
        %1344 = vmatprep.subr.mxu0 %v1130
        %1345 = vmatpush1.msra.mxu0 %v1129
        %1346 = vmatprep.subr.mxu0 0.0
        %1347 = vmatpush1.msra.mxu0 0.0
        %1348 = vmatprep.subr.mxu0 0.0
        %1349 = vmatpush1.msra.mxu0 0.0
        %1350 = vmatprep.subr.mxu0 0.0
        %1351 = vmatpush1.msra.mxu0 0.0
        %1352 = vmatprep.subr.mxu0 0.0
        %1353 = vmatpush1.msra.mxu0 0.0
        %1354 = vmatprep.subr.mxu0 0.0
        %1355 = vmatpush1.msra.mxu0 0.0
        %1356 = vmatprep.subr.mxu0 0.0
        %1357 = vmatpush1.msra.mxu0 0.0
        %1358 = vmatprep.subr.mxu0 0.0
        %1359 = vmatpush1.msra.mxu0 0.0
        %1360 = vmatprep.subr.mxu0 0.0
        %1361 = vmatpush1.msra.mxu0 0.0
        %1362 = vmatprep.subr.mxu0 0.0
        %1363 = vmatpush1.msra.mxu0 0.0
        %1364 = vmatprep.subr.mxu0 0.0
        %1365 = vmatpush1.msra.mxu0 0.0
        %1366 = vmatprep.subr.mxu0 0.0
        %1367 = vmatpush1.msra.mxu0 0.0
        %1368 = vmatprep.subr.mxu0 0.0
        %1369 = vmatpush1.msra.mxu0 0.0
        %1370 = vmatprep.subr.mxu0 0.0
        %1371 = vmatpush1.msra.mxu0 0.0
        %1372 = vmatprep.subr.mxu0 0.0
        %1373 = vmatpush1.msra.mxu0 0.0
        %1374 = vmatprep.subr.mxu0 0.0
        %1375 = vmatpush1.msra.mxu0 0.0
        %1376 = vmatprep.subr.mxu0 0.0
        %1377 = vmatpush1.msra.mxu0 0.0
        %1378 = vmatprep.mubr.f32.mxu0 0.0
        %1379 = vmatmul.mubr.f32.gmra.mrb[0].mxu0 %v1051
        %v1380 = vpop.f32.mrb[0].mxu0
        %v1381 = vadd.f32 %v1144, %v1380
        %v1382 = vpop.f32.mrb[0].mxu0
        %v1383 = vadd.f32 %v1148, %v1382
        %1384 = vmatprep.mubr.f32.mxu0 0.0
        %1385 = vmatmul.mubr.f32.gmra.mrb[0].mxu0 %v1052
        %v1386 = vpop.f32.mrb[0].mxu0
        %v1387 = vadd.f32 %v1144, %v1386
        %v1388 = vpop.f32.mrb[0].mxu0
        %v1389 = vadd.f32 %v1148, %v1388
        %1390 = vmatprep.mubr.f32.mxu0 0.0
        %1391 = vmatmul.mubr.f32.gmra.mrb[0].mxu0 %v1053
        %v1392 = vpop.f32.mrb[0].mxu0
        %v1393 = vadd.f32 %v1144, %v1392
        %v1394 = vpop.f32.mrb[0].mxu0
        %v1395 = vadd.f32 %v1148, %v1394
        %1396 = vmatprep.mubr.f32.mxu0 0.0
        %1397 = vmatmul.mubr.f32.gmra.mrb[0].mxu0 %v1054
        %v1398 = vpop.f32.mrb[0].mxu0
        %v1399 = vadd.f32 %v1144, %v1398
        %v1400 = vpop.f32.mrb[0].mxu0
        %v1401 = vadd.f32 %v1148, %v1400
        %1402 = vmatprep.mubr.f32.mxu0 0.0
        %1403 = vmatmul.mubr.f32.gmra.mrb[0].mxu0 %v1055
        %v1404 = vpop.f32.mrb[0].mxu0
        %v1405 = vadd.f32 %v1144, %v1404
        %v1406 = vpop.f32.mrb[0].mxu0
        %v1407 = vadd.f32 %v1148, %v1406
        %1408 = vmatprep.mubr.f32.mxu0 0.0
        %1409 = vmatmul.mubr.f32.gmra.mrb[0].mxu0 %v1056
        %v1410 = vpop.f32.mrb[0].mxu0
        %v1411 = vadd.f32 %v1144, %v1410
        %v1412 = vpop.f32.mrb[0].mxu0
        %v1413 = vadd.f32 %v1148, %v1412
        %1414 = vmatprep.mubr.f32.mxu0 0.0
        %1415 = vmatmul.mubr.f32.gmra.mrb[0].mxu0 %v1057
        %v1416 = vpop.f32.mrb[0].mxu0
        %v1417 = vadd.f32 %v1144, %v1416
        %v1418 = vpop.f32.mrb[0].mxu0
        %v1419 = vadd.f32 %v1148, %v1418
        %1420 = vmatprep.mubr.f32.mxu0 0.0
        %1421 = vmatmul.mubr.f32.gmra.mrb[0].mxu0 %v1058
        %v1422 = vpop.f32.mrb[0].mxu0
        %v1423 = vadd.f32 %v1144, %v1422
        %v1424 = vpop.f32.mrb[0].mxu0
        %v1425 = vadd.f32 %v1148, %v1424
        %1426 = vmatprep.mubr.f32.mxu0 0.0
        %1427 = vmatmul.mubr.f32.gmra.mrb[0].mxu0 %v1059
        %v1428 = vpop.f32.mrb[0].mxu0
        %v1429 = vadd.f32 %v1144, %v1428
        %v1430 = vpop.f32.mrb[0].mxu0
        %v1431 = vadd.f32 %v1148, %v1430
        %1432 = vmatprep.mubr.f32.mxu0 0.0
        %1433 = vmatmul.mubr.f32.gmra.mrb[0].mxu0 %v1060
        %v1434 = vpop.f32.mrb[0].mxu0
        %v1435 = vadd.f32 %v1144, %v1434
        %v1436 = vpop.f32.mrb[0].mxu0
        %v1437 = vadd.f32 %v1148, %v1436
        %1438 = vmatprep.mubr.f32.mxu0 0.0
        %1439 = vmatmul.mubr.f32.gmra.mrb[0].mxu0 %v1061
        %v1440 = vpop.f32.mrb[0].mxu0
        %v1441 = vadd.f32 %v1144, %v1440
        %v1442 = vpop.f32.mrb[0].mxu0
        %v1443 = vadd.f32 %v1148, %v1442
        %1444 = vmatprep.mubr.f32.mxu0 0.0
        %1445 = vmatmul.mubr.f32.gmra.mrb[0].mxu0 %v1062
        %v1446 = vpop.f32.mrb[0].mxu0
        %v1447 = vadd.f32 %v1144, %v1446
        %v1448 = vpop.f32.mrb[0].mxu0
        %v1449 = vadd.f32 %v1148, %v1448
        %1450 = vmatprep.mubr.f32.mxu0 0.0
        %1451 = vmatmul.mubr.f32.gmra.mrb[0].mxu0 %v1063
        %v1452 = vpop.f32.mrb[0].mxu0
        %v1453 = vadd.f32 %v1144, %v1452
        %v1454 = vpop.f32.mrb[0].mxu0
        %v1455 = vadd.f32 %v1148, %v1454
        %1456 = vmatprep.mubr.f32.mxu0 0.0
        %1457 = vmatmul.mubr.f32.gmra.mrb[0].mxu0 %v1064
        %v1458 = vpop.f32.mrb[0].mxu0
        %v1459 = vadd.f32 %v1144, %v1458
        %v1460 = vpop.f32.mrb[0].mxu0
        %v1461 = vadd.f32 %v1148, %v1460
        %1462 = vmatprep.mubr.f32.mxu0 0.0
        %1463 = vmatmul.mubr.f32.gmra.mrb[0].mxu0 %v1065
        %v1464 = vpop.f32.mrb[0].mxu0
        %v1465 = vadd.f32 %v1144, %v1464
        %v1466 = vpop.f32.mrb[0].mxu0
        %v1467 = vadd.f32 %v1148, %v1466
        %1468 = vmatprep.mubr.f32.mxu0 0.0
        %1469 = vmatmul.mubr.f32.gmra.mrb[0].mxu0 %v1066
        %v1470 = vpop.f32.mrb[0].mxu0
        %v1471 = vadd.f32 %v1144, %v1470
        %v1472 = vpop.f32.mrb[0].mxu0
        %v1473 = vadd.f32 %v1148, %v1472
        %1474 = vdwg.mxu0
        %v1475 = vmax.f32 %v1220, 0.0
        %v1476 = vmax.f32 %v1222, 0.0
        %v1477 = vmax.f32 %v1381, 0.0
        %v1478 = vmax.f32 %v1383, 0.0
        %v1479 = vmax.f32 %v1226, 0.0
        %v1480 = vmax.f32 %v1228, 0.0
        %v1481 = vmax.f32 %v1387, 0.0
        %v1482 = vmax.f32 %v1389, 0.0
        %v1483 = vmax.f32 %v1232, 0.0
        %v1484 = vmax.f32 %v1234, 0.0
        %v1485 = vmax.f32 %v1393, 0.0
        %v1486 = vmax.f32 %v1395, 0.0
        %v1487 = vmax.f32 %v1238, 0.0
        %v1488 = vmax.f32 %v1240, 0.0
        %v1489 = vmax.f32 %v1399, 0.0
        %v1490 = vmax.f32 %v1401, 0.0
        %v1491 = vmax.f32 %v1244, 0.0
        %v1492 = vmax.f32 %v1246, 0.0
        %v1493 = vmax.f32 %v1405, 0.0
        %v1494 = vmax.f32 %v1407, 0.0
        %v1495 = vmax.f32 %v1250, 0.0
        %v1496 = vmax.f32 %v1252, 0.0
        %v1497 = vmax.f32 %v1411, 0.0
        %v1498 = vmax.f32 %v1413, 0.0
        %v1499 = vmax.f32 %v1256, 0.0
        %v1500 = vmax.f32 %v1258, 0.0
        %v1501 = vmax.f32 %v1417, 0.0
        %v1502 = vmax.f32 %v1419, 0.0
        %v1503 = vmax.f32 %v1262, 0.0
        %v1504 = vmax.f32 %v1264, 0.0
        %v1505 = vmax.f32 %v1423, 0.0
        %v1506 = vmax.f32 %v1425, 0.0
        %v1507 = vmax.f32 %v1268, 0.0
        %v1508 = vmax.f32 %v1270, 0.0
        %v1509 = vmax.f32 %v1429, 0.0
        %v1510 = vmax.f32 %v1431, 0.0
        %v1511 = vmax.f32 %v1274, 0.0
        %v1512 = vmax.f32 %v1276, 0.0
        %v1513 = vmax.f32 %v1435, 0.0
        %v1514 = vmax.f32 %v1437, 0.0
        %v1515 = vmax.f32 %v1280, 0.0
        %v1516 = vmax.f32 %v1282, 0.0
        %v1517 = vmax.f32 %v1441, 0.0
        %v1518 = vmax.f32 %v1443, 0.0
        %v1519 = vmax.f32 %v1286, 0.0
        %v1520 = vmax.f32 %v1288, 0.0
        %v1521 = vmax.f32 %v1447, 0.0
        %v1522 = vmax.f32 %v1449, 0.0
        %v1523 = vmax.f32 %v1292, 0.0
        %v1524 = vmax.f32 %v1294, 0.0
        %v1525 = vmax.f32 %v1453, 0.0
        %v1526 = vmax.f32 %v1455, 0.0
        %v1527 = vmax.f32 %v1298, 0.0
        %v1528 = vmax.f32 %v1300, 0.0
        %v1529 = vmax.f32 %v1459, 0.0
        %v1530 = vmax.f32 %v1461, 0.0
        %v1531 = vmax.f32 %v1304, 0.0
        %v1532 = vmax.f32 %v1306, 0.0
        %v1533 = vmax.f32 %v1465, 0.0
        %v1534 = vmax.f32 %v1467, 0.0
        %v1535 = vmax.f32 %v1310, 0.0
        %v1536 = vmax.f32 %v1312, 0.0
        %v1537 = vmax.f32 %v1471, 0.0
        %v1538 = vmax.f32 %v1473, 0.0
        %v1539 = vld [vmem:[#allocation4] sm:$0xff]
        %v1540 = vld [vmem:[#allocation4 + $0x8] sm:$0xff]
        %v1541 = vld [vmem:[#allocation4 + $0x10] sm:$0xff]
        %v1542 = vld [vmem:[#allocation4 + $0x18] sm:$0xff]
        %v1543 = vld [vmem:[#allocation4 + $0x20] sm:$0xff]
        %v1544 = vld [vmem:[#allocation4 + $0x28] sm:$0xff]
        %v1545 = vld [vmem:[#allocation4 + $0x30] sm:$0xff]
        %v1546 = vld [vmem:[#allocation4 + $0x38] sm:$0xff]
        %v1547 = vld [vmem:[#allocation4 + $0x40] sm:$0xff]
        %v1548 = vld [vmem:[#allocation4 + $0x48] sm:$0xff]
        %v1549 = vld [vmem:[#allocation4 + $0x50] sm:$0xff]
        %v1550 = vld [vmem:[#allocation4 + $0x58] sm:$0xff]
        %v1551 = vld [vmem:[#allocation4 + $0x60] sm:$0xff]
        %v1552 = vld [vmem:[#allocation4 + $0x68] sm:$0xff]
        %v1553 = vld [vmem:[#allocation4 + $0x70] sm:$0xff]
        %v1554 = vld [vmem:[#allocation4 + $0x78] sm:$0xff]
        %v1555 = vld [vmem:[#allocation13] sm:$0xff]
        %v1556 = vld [vmem:[#allocation13 + $0x8] sm:$0xff]
        %v1557 = vld [vmem:[#allocation13 + $0x10] sm:$0xff]
        %v1558 = vld [vmem:[#allocation13 + $0x18] sm:$0xff]
        %v1559 = vld [vmem:[#allocation13 + $0x20] sm:$0xff]
        %v1560 = vld [vmem:[#allocation13 + $0x28] sm:$0xff]
        %v1561 = vld [vmem:[#allocation13 + $0x30] sm:$0xff]
        %v1562 = vld [vmem:[#allocation13 + $0x38] sm:$0xff]
        %v1563 = vld [vmem:[#allocation13 + $0x40] sm:$0xff]
        %v1564 = vld [vmem:[#allocation13 + $0x48] sm:$0xff]
        %v1565 = vld [vmem:[#allocation13 + $0x50] sm:$0xff]
        %v1566 = vld [vmem:[#allocation13 + $0x58] sm:$0xff]
        %v1567 = vld [vmem:[#allocation13 + $0x60] sm:$0xff]
        %v1568 = vld [vmem:[#allocation13 + $0x68] sm:$0xff]
        %v1569 = vld [vmem:[#allocation13 + $0x70] sm:$0xff]
        %v1570 = vld [vmem:[#allocation13 + $0x78] sm:$0xff]
        %v1571 = vld [vmem:[#allocation13 + $0x80] sm:$0xff]
        %v1572 = vld [vmem:[#allocation13 + $0x88] sm:$0xff]
        %v1573 = vld [vmem:[#allocation13 + $0x90] sm:$0xff]
        %v1574 = vld [vmem:[#allocation13 + $0x98] sm:$0xff]
        %v1575 = vld [vmem:[#allocation13 + $0xa0] sm:$0xff]
        %v1576 = vld [vmem:[#allocation13 + $0xa8] sm:$0xff]
        %v1577 = vld [vmem:[#allocation13 + $0xb0] sm:$0xff]
        %v1578 = vld [vmem:[#allocation13 + $0xb8] sm:$0xff]
        %v1579 = vld [vmem:[#allocation13 + $0xc0] sm:$0xff]
        %v1580 = vld [vmem:[#allocation13 + $0xc8] sm:$0xff]
        %v1581 = vld [vmem:[#allocation13 + $0xd0] sm:$0xff]
        %v1582 = vld [vmem:[#allocation13 + $0xd8] sm:$0xff]
        %v1583 = vld [vmem:[#allocation13 + $0xe0] sm:$0xff]
        %v1584 = vld [vmem:[#allocation13 + $0xe8] sm:$0xff]
        %v1585 = vld [vmem:[#allocation13 + $0xf0] sm:$0xff]
        %v1586 = vld [vmem:[#allocation13 + $0xf8] sm:$0xff]
        %v1587 = vld [vmem:[#allocation13 + $0x100] sm:$0xff]
        %v1588 = vld [vmem:[#allocation13 + $0x108] sm:$0xff]
        %v1589 = vld [vmem:[#allocation13 + $0x110] sm:$0xff]
        %v1590 = vld [vmem:[#allocation13 + $0x118] sm:$0xff]
        %v1591 = vld [vmem:[#allocation13 + $0x120] sm:$0xff]
        %v1592 = vld [vmem:[#allocation13 + $0x128] sm:$0xff]
        %v1593 = vld [vmem:[#allocation13 + $0x130] sm:$0xff]
        %v1594 = vld [vmem:[#allocation13 + $0x138] sm:$0xff]
        %v1595 = vld [vmem:[#allocation13 + $0x140] sm:$0xff]
        %v1596 = vld [vmem:[#allocation13 + $0x148] sm:$0xff]
        %v1597 = vld [vmem:[#allocation13 + $0x150] sm:$0xff]
        %v1598 = vld [vmem:[#allocation13 + $0x158] sm:$0xff]
        %v1599 = vld [vmem:[#allocation13 + $0x160] sm:$0xff]
        %v1600 = vld [vmem:[#allocation13 + $0x168] sm:$0xff]
        %v1601 = vld [vmem:[#allocation13 + $0x170] sm:$0xff]
        %v1602 = vld [vmem:[#allocation13 + $0x178] sm:$0xff]
        %v1603 = vld [vmem:[#allocation13 + $0x180] sm:$0xff]
        %v1604 = vld [vmem:[#allocation13 + $0x188] sm:$0xff]
        %v1605 = vld [vmem:[#allocation13 + $0x190] sm:$0xff]
        %v1606 = vld [vmem:[#allocation13 + $0x198] sm:$0xff]
        %v1607 = vld [vmem:[#allocation13 + $0x1a0] sm:$0xff]
        %v1608 = vld [vmem:[#allocation13 + $0x1a8] sm:$0xff]
        %v1609 = vld [vmem:[#allocation13 + $0x1b0] sm:$0xff]
        %v1610 = vld [vmem:[#allocation13 + $0x1b8] sm:$0xff]
        %v1611 = vld [vmem:[#allocation13 + $0x1c0] sm:$0xff]
        %v1612 = vld [vmem:[#allocation13 + $0x1c8] sm:$0xff]
        %v1613 = vld [vmem:[#allocation13 + $0x1d0] sm:$0xff]
        %v1614 = vld [vmem:[#allocation13 + $0x1d8] sm:$0xff]
        %v1615 = vld [vmem:[#allocation13 + $0x1e0] sm:$0xff]
        %v1616 = vld [vmem:[#allocation13 + $0x1e8] sm:$0xff]
        %v1617 = vld [vmem:[#allocation13 + $0x1f0] sm:$0xff]
        %v1618 = vld [vmem:[#allocation13 + $0x1f8] sm:$0xff]
        %1619 = vmatprep.subr.mxu0 0.0
        %1620 = vmatpush1.msra.mxu0 %v1555
        %1621 = vmatprep.subr.mxu0 0.0
        %1622 = vmatpush1.msra.mxu0 %v1556
        %1623 = vmatprep.subr.mxu0 0.0
        %1624 = vmatpush1.msra.mxu0 %v1557
        %1625 = vmatprep.subr.mxu0 0.0
        %1626 = vmatpush1.msra.mxu0 %v1558
        %1627 = vmatprep.subr.mxu0 0.0
        %1628 = vmatpush1.msra.mxu0 %v1559
        %1629 = vmatprep.subr.mxu0 0.0
        %1630 = vmatpush1.msra.mxu0 %v1560
        %1631 = vmatprep.subr.mxu0 0.0
        %1632 = vmatpush1.msra.mxu0 %v1561
        %1633 = vmatprep.subr.mxu0 0.0
        %1634 = vmatpush1.msra.mxu0 %v1562
        %1635 = vmatprep.subr.mxu0 0.0
        %1636 = vmatpush1.msra.mxu0 %v1563
        %1637 = vmatprep.subr.mxu0 0.0
        %1638 = vmatpush1.msra.mxu0 %v1564
        %1639 = vmatprep.subr.mxu0 0.0
        %1640 = vmatpush1.msra.mxu0 %v1565
        %1641 = vmatprep.subr.mxu0 0.0
        %1642 = vmatpush1.msra.mxu0 %v1566
        %1643 = vmatprep.subr.mxu0 0.0
        %1644 = vmatpush1.msra.mxu0 %v1567
        %1645 = vmatprep.subr.mxu0 0.0
        %1646 = vmatpush1.msra.mxu0 %v1568
        %1647 = vmatprep.subr.mxu0 0.0
        %1648 = vmatpush1.msra.mxu0 %v1569
        %1649 = vmatprep.subr.mxu0 0.0
        %1650 = vmatpush1.msra.mxu0 %v1570
        %1651 = vmatprep.subr.mxu0 0.0
        %1652 = vmatpush1.msra.mxu0 %v1571
        %1653 = vmatprep.subr.mxu0 0.0
        %1654 = vmatpush1.msra.mxu0 %v1572
        %1655 = vmatprep.subr.mxu0 0.0
        %1656 = vmatpush1.msra.mxu0 %v1573
        %1657 = vmatprep.subr.mxu0 0.0
        %1658 = vmatpush1.msra.mxu0 %v1574
        %1659 = vmatprep.subr.mxu0 0.0
        %1660 = vmatpush1.msra.mxu0 %v1575
        %1661 = vmatprep.subr.mxu0 0.0
        %1662 = vmatpush1.msra.mxu0 %v1576
        %1663 = vmatprep.subr.mxu0 0.0
        %1664 = vmatpush1.msra.mxu0 %v1577
        %1665 = vmatprep.subr.mxu0 0.0
        %1666 = vmatpush1.msra.mxu0 %v1578
        %1667 = vmatprep.subr.mxu0 0.0
        %1668 = vmatpush1.msra.mxu0 %v1579
        %1669 = vmatprep.subr.mxu0 0.0
        %1670 = vmatpush1.msra.mxu0 %v1580
        %1671 = vmatprep.subr.mxu0 0.0
        %1672 = vmatpush1.msra.mxu0 %v1581
        %1673 = vmatprep.subr.mxu0 0.0
        %1674 = vmatpush1.msra.mxu0 %v1582
        %1675 = vmatprep.subr.mxu0 0.0
        %1676 = vmatpush1.msra.mxu0 %v1583
        %1677 = vmatprep.subr.mxu0 0.0
        %1678 = vmatpush1.msra.mxu0 %v1584
        %1679 = vmatprep.subr.mxu0 0.0
        %1680 = vmatpush1.msra.mxu0 %v1585
        %1681 = vmatprep.subr.mxu0 0.0
        %1682 = vmatpush1.msra.mxu0 %v1586
        %1683 = vmatprep.mubr.f32.mxu0 %v1476
        %1684 = vmatmul.mubr.f32.gmra.mrb[0].mxu0 %v1475
        %v1685 = vpop.f32.mrb[0].mxu0
        %v1686 = vadd.f32 0.0, %v1685
        %v1687 = vpop.f32.mrb[0].mxu0
        %1688 = vmatprep.mubr.f32.mxu0 %v1480
        %1689 = vmatmul.mubr.f32.gmra.mrb[0].mxu0 %v1479
        %v1690 = vpop.f32.mrb[0].mxu0
        %v1691 = vadd.f32 0.0, %v1690
        %v1692 = vpop.f32.mrb[0].mxu0
        %1693 = vmatprep.mubr.f32.mxu0 %v1484
        %1694 = vmatmul.mubr.f32.gmra.mrb[0].mxu0 %v1483
        %v1695 = vpop.f32.mrb[0].mxu0
        %v1696 = vadd.f32 0.0, %v1695
        %v1697 = vpop.f32.mrb[0].mxu0
        %1698 = vmatprep.mubr.f32.mxu0 %v1488
        %1699 = vmatmul.mubr.f32.gmra.mrb[0].mxu0 %v1487
        %v1700 = vpop.f32.mrb[0].mxu0
        %v1701 = vadd.f32 0.0, %v1700
        %v1702 = vpop.f32.mrb[0].mxu0
        %1703 = vmatprep.mubr.f32.mxu0 %v1492
        %1704 = vmatmul.mubr.f32.gmra.mrb[0].mxu0 %v1491
        %v1705 = vpop.f32.mrb[0].mxu0
        %v1706 = vadd.f32 0.0, %v1705
        %v1707 = vpop.f32.mrb[0].mxu0
        %1708 = vmatprep.mubr.f32.mxu0 %v1496
        %1709 = vmatmul.mubr.f32.gmra.mrb[0].mxu0 %v1495
        %v1710 = vpop.f32.mrb[0].mxu0
        %v1711 = vadd.f32 0.0, %v1710
        %v1712 = vpop.f32.mrb[0].mxu0
        %1713 = vmatprep.mubr.f32.mxu0 %v1500
        %1714 = vmatmul.mubr.f32.gmra.mrb[0].mxu0 %v1499
        %v1715 = vpop.f32.mrb[0].mxu0
        %v1716 = vadd.f32 0.0, %v1715
        %v1717 = vpop.f32.mrb[0].mxu0
        %1718 = vmatprep.mubr.f32.mxu0 %v1504
        %1719 = vmatmul.mubr.f32.gmra.mrb[0].mxu0 %v1503
        %v1720 = vpop.f32.mrb[0].mxu0
        %v1721 = vadd.f32 0.0, %v1720
        %v1722 = vpop.f32.mrb[0].mxu0
        %1723 = vmatprep.mubr.f32.mxu0 %v1508
        %1724 = vmatmul.mubr.f32.gmra.mrb[0].mxu0 %v1507
        %v1725 = vpop.f32.mrb[0].mxu0
        %v1726 = vadd.f32 0.0, %v1725
        %v1727 = vpop.f32.mrb[0].mxu0
        %1728 = vmatprep.mubr.f32.mxu0 %v1512
        %1729 = vmatmul.mubr.f32.gmra.mrb[0].mxu0 %v1511
        %v1730 = vpop.f32.mrb[0].mxu0
        %v1731 = vadd.f32 0.0, %v1730
        %v1732 = vpop.f32.mrb[0].mxu0
        %1733 = vmatprep.mubr.f32.mxu0 %v1516
        %1734 = vmatmul.mubr.f32.gmra.mrb[0].mxu0 %v1515
        %v1735 = vpop.f32.mrb[0].mxu0
        %v1736 = vadd.f32 0.0, %v1735
        %v1737 = vpop.f32.mrb[0].mxu0
        %1738 = vmatprep.mubr.f32.mxu0 %v1520
        %1739 = vmatmul.mubr.f32.gmra.mrb[0].mxu0 %v1519
        %v1740 = vpop.f32.mrb[0].mxu0
        %v1741 = vadd.f32 0.0, %v1740
        %v1742 = vpop.f32.mrb[0].mxu0
        %1743 = vmatprep.mubr.f32.mxu0 %v1524
        %1744 = vmatmul.mubr.f32.gmra.mrb[0].mxu0 %v1523
        %v1745 = vpop.f32.mrb[0].mxu0
        %v1746 = vadd.f32 0.0, %v1745
        %v1747 = vpop.f32.mrb[0].mxu0
        %1748 = vmatprep.mubr.f32.mxu0 %v1528
        %1749 = vmatmul.mubr.f32.gmra.mrb[0].mxu0 %v1527
        %v1750 = vpop.f32.mrb[0].mxu0
        %v1751 = vadd.f32 0.0, %v1750
        %v1752 = vpop.f32.mrb[0].mxu0
        %1753 = vmatprep.mubr.f32.mxu0 %v1532
        %1754 = vmatmul.mubr.f32.gmra.mrb[0].mxu0 %v1531
        %v1755 = vpop.f32.mrb[0].mxu0
        %v1756 = vadd.f32 0.0, %v1755
        %v1757 = vpop.f32.mrb[0].mxu0
        %1758 = vmatprep.mubr.f32.mxu0 %v1536
        %1759 = vmatmul.mubr.f32.gmra.mrb[0].mxu0 %v1535
        %v1760 = vpop.f32.mrb[0].mxu0
        %v1761 = vadd.f32 0.0, %v1760
        %v1762 = vpop.f32.mrb[0].mxu0
        %1763 = vdwg.mxu0
        %1764 = vmatprep.subr.mxu0 0.0
        %1765 = vmatpush1.msra.mxu0 %v1587
        %1766 = vmatprep.subr.mxu0 0.0
        %1767 = vmatpush1.msra.mxu0 %v1588
        %1768 = vmatprep.subr.mxu0 0.0
        %1769 = vmatpush1.msra.mxu0 %v1589
        %1770 = vmatprep.subr.mxu0 0.0
        %1771 = vmatpush1.msra.mxu0 %v1590
        %1772 = vmatprep.subr.mxu0 0.0
        %1773 = vmatpush1.msra.mxu0 %v1591
        %1774 = vmatprep.subr.mxu0 0.0
        %1775 = vmatpush1.msra.mxu0 %v1592
        %1776 = vmatprep.subr.mxu0 0.0
        %1777 = vmatpush1.msra.mxu0 %v1593
        %1778 = vmatprep.subr.mxu0 0.0
        %1779 = vmatpush1.msra.mxu0 %v1594
        %1780 = vmatprep.subr.mxu0 0.0
        %1781 = vmatpush1.msra.mxu0 %v1595
        %1782 = vmatprep.subr.mxu0 0.0
        %1783 = vmatpush1.msra.mxu0 %v1596
        %1784 = vmatprep.subr.mxu0 0.0
        %1785 = vmatpush1.msra.mxu0 %v1597
        %1786 = vmatprep.subr.mxu0 0.0
        %1787 = vmatpush1.msra.mxu0 %v1598
        %1788 = vmatprep.subr.mxu0 0.0
        %1789 = vmatpush1.msra.mxu0 %v1599
        %1790 = vmatprep.subr.mxu0 0.0
        %1791 = vmatpush1.msra.mxu0 %v1600
        %1792 = vmatprep.subr.mxu0 0.0
        %1793 = vmatpush1.msra.mxu0 %v1601
        %1794 = vmatprep.subr.mxu0 0.0
        %1795 = vmatpush1.msra.mxu0 %v1602
        %1796 = vmatprep.subr.mxu0 0.0
        %1797 = vmatpush1.msra.mxu0 %v1603
        %1798 = vmatprep.subr.mxu0 0.0
        %1799 = vmatpush1.msra.mxu0 %v1604
        %1800 = vmatprep.subr.mxu0 0.0
        %1801 = vmatpush1.msra.mxu0 %v1605
        %1802 = vmatprep.subr.mxu0 0.0
        %1803 = vmatpush1.msra.mxu0 %v1606
        %1804 = vmatprep.subr.mxu0 0.0
        %1805 = vmatpush1.msra.mxu0 %v1607
        %1806 = vmatprep.subr.mxu0 0.0
        %1807 = vmatpush1.msra.mxu0 %v1608
        %1808 = vmatprep.subr.mxu0 0.0
        %1809 = vmatpush1.msra.mxu0 %v1609
        %1810 = vmatprep.subr.mxu0 0.0
        %1811 = vmatpush1.msra.mxu0 %v1610
        %1812 = vmatprep.subr.mxu0 0.0
        %1813 = vmatpush1.msra.mxu0 %v1611
        %1814 = vmatprep.subr.mxu0 0.0
        %1815 = vmatpush1.msra.mxu0 %v1612
        %1816 = vmatprep.subr.mxu0 0.0
        %1817 = vmatpush1.msra.mxu0 %v1613
        %1818 = vmatprep.subr.mxu0 0.0
        %1819 = vmatpush1.msra.mxu0 %v1614
        %1820 = vmatprep.subr.mxu0 0.0
        %1821 = vmatpush1.msra.mxu0 %v1615
        %1822 = vmatprep.subr.mxu0 0.0
        %1823 = vmatpush1.msra.mxu0 %v1616
        %1824 = vmatprep.subr.mxu0 0.0
        %1825 = vmatpush1.msra.mxu0 %v1617
        %1826 = vmatprep.subr.mxu0 0.0
        %1827 = vmatpush1.msra.mxu0 %v1618
        %1828 = vmatprep.mubr.f32.mxu0 %v1478
        %1829 = vmatmul.mubr.f32.gmra.mrb[0].mxu0 %v1477
        %v1830 = vpop.f32.mrb[0].mxu0
        %v1831 = vadd.f32 %v1686, %v1830
        %v1832 = vpop.f32.mrb[0].mxu0
        %1833 = vmatprep.mubr.f32.mxu0 %v1482
        %1834 = vmatmul.mubr.f32.gmra.mrb[0].mxu0 %v1481
        %v1835 = vpop.f32.mrb[0].mxu0
        %v1836 = vadd.f32 %v1691, %v1835
        %v1837 = vpop.f32.mrb[0].mxu0
        %1838 = vmatprep.mubr.f32.mxu0 %v1486
        %1839 = vmatmul.mubr.f32.gmra.mrb[0].mxu0 %v1485
        %v1840 = vpop.f32.mrb[0].mxu0
        %v1841 = vadd.f32 %v1696, %v1840
        %v1842 = vpop.f32.mrb[0].mxu0
        %1843 = vmatprep.mubr.f32.mxu0 %v1490
        %1844 = vmatmul.mubr.f32.gmra.mrb[0].mxu0 %v1489
        %v1845 = vpop.f32.mrb[0].mxu0
        %v1846 = vadd.f32 %v1701, %v1845
        %v1847 = vpop.f32.mrb[0].mxu0
        %1848 = vmatprep.mubr.f32.mxu0 %v1494
        %1849 = vmatmul.mubr.f32.gmra.mrb[0].mxu0 %v1493
        %v1850 = vpop.f32.mrb[0].mxu0
        %v1851 = vadd.f32 %v1706, %v1850
        %v1852 = vpop.f32.mrb[0].mxu0
        %1853 = vmatprep.mubr.f32.mxu0 %v1498
        %1854 = vmatmul.mubr.f32.gmra.mrb[0].mxu0 %v1497
        %v1855 = vpop.f32.mrb[0].mxu0
        %v1856 = vadd.f32 %v1711, %v1855
        %v1857 = vpop.f32.mrb[0].mxu0
        %1858 = vmatprep.mubr.f32.mxu0 %v1502
        %1859 = vmatmul.mubr.f32.gmra.mrb[0].mxu0 %v1501
        %v1860 = vpop.f32.mrb[0].mxu0
        %v1861 = vadd.f32 %v1716, %v1860
        %v1862 = vpop.f32.mrb[0].mxu0
        %1863 = vmatprep.mubr.f32.mxu0 %v1506
        %1864 = vmatmul.mubr.f32.gmra.mrb[0].mxu0 %v1505
        %v1865 = vpop.f32.mrb[0].mxu0
        %v1866 = vadd.f32 %v1721, %v1865
        %v1867 = vpop.f32.mrb[0].mxu0
        %1868 = vmatprep.mubr.f32.mxu0 %v1510
        %1869 = vmatmul.mubr.f32.gmra.mrb[0].mxu0 %v1509
        %v1870 = vpop.f32.mrb[0].mxu0
        %v1871 = vadd.f32 %v1726, %v1870
        %v1872 = vpop.f32.mrb[0].mxu0
        %1873 = vmatprep.mubr.f32.mxu0 %v1514
        %1874 = vmatmul.mubr.f32.gmra.mrb[0].mxu0 %v1513
        %v1875 = vpop.f32.mrb[0].mxu0
        %v1876 = vadd.f32 %v1731, %v1875
        %v1877 = vpop.f32.mrb[0].mxu0
        %1878 = vmatprep.mubr.f32.mxu0 %v1518
        %1879 = vmatmul.mubr.f32.gmra.mrb[0].mxu0 %v1517
        %v1880 = vpop.f32.mrb[0].mxu0
        %v1881 = vadd.f32 %v1736, %v1880
        %v1882 = vpop.f32.mrb[0].mxu0
        %1883 = vmatprep.mubr.f32.mxu0 %v1522
        %1884 = vmatmul.mubr.f32.gmra.mrb[0].mxu0 %v1521
        %v1885 = vpop.f32.mrb[0].mxu0
        %v1886 = vadd.f32 %v1741, %v1885
        %v1887 = vpop.f32.mrb[0].mxu0
        %1888 = vmatprep.mubr.f32.mxu0 %v1526
        %1889 = vmatmul.mubr.f32.gmra.mrb[0].mxu0 %v1525
        %v1890 = vpop.f32.mrb[0].mxu0
        %v1891 = vadd.f32 %v1746, %v1890
        %v1892 = vpop.f32.mrb[0].mxu0
        %1893 = vmatprep.mubr.f32.mxu0 %v1530
        %1894 = vmatmul.mubr.f32.gmra.mrb[0].mxu0 %v1529
        %v1895 = vpop.f32.mrb[0].mxu0
        %v1896 = vadd.f32 %v1751, %v1895
        %v1897 = vpop.f32.mrb[0].mxu0
        %1898 = vmatprep.mubr.f32.mxu0 %v1534
        %1899 = vmatmul.mubr.f32.gmra.mrb[0].mxu0 %v1533
        %v1900 = vpop.f32.mrb[0].mxu0
        %v1901 = vadd.f32 %v1756, %v1900
        %v1902 = vpop.f32.mrb[0].mxu0
        %1903 = vmatprep.mubr.f32.mxu0 %v1538
        %1904 = vmatmul.mubr.f32.gmra.mrb[0].mxu0 %v1537
        %v1905 = vpop.f32.mrb[0].mxu0
        %v1906 = vadd.f32 %v1761, %v1905
        %v1907 = vpop.f32.mrb[0].mxu0
        %1908 = vdwg.mxu0
        %v1909 = vadd.f32 %v1539, %v1831
        %v1910 = vadd.f32 %v1540, %v1836
        %v1911 = vadd.f32 %v1541, %v1841
        %v1912 = vadd.f32 %v1542, %v1846
        %v1913 = vadd.f32 %v1543, %v1851
        %v1914 = vadd.f32 %v1544, %v1856
        %v1915 = vadd.f32 %v1545, %v1861
        %v1916 = vadd.f32 %v1546, %v1866
        %v1917 = vadd.f32 %v1547, %v1871
        %v1918 = vadd.f32 %v1548, %v1876
        %v1919 = vadd.f32 %v1549, %v1881
        %v1920 = vadd.f32 %v1550, %v1886
        %v1921 = vadd.f32 %v1551, %v1891
        %v1922 = vadd.f32 %v1552, %v1896
        %v1923 = vadd.f32 %v1553, %v1901
        %v1924 = vadd.f32 %v1554, %v1906
        %1925 = vst [vmem:[#allocation4] sm:$0xff] %v1909
        %1926 = vst [vmem:[#allocation4 + $0x8] sm:$0xff] %v1910
        %1927 = vst [vmem:[#allocation4 + $0x10] sm:$0xff] %v1911
        %1928 = vst [vmem:[#allocation4 + $0x18] sm:$0xff] %v1912
        %1929 = vst [vmem:[#allocation4 + $0x20] sm:$0xff] %v1913
        %1930 = vst [vmem:[#allocation4 + $0x28] sm:$0xff] %v1914
        %1931 = vst [vmem:[#allocation4 + $0x30] sm:$0xff] %v1915
        %1932 = vst [vmem:[#allocation4 + $0x38] sm:$0xff] %v1916
        %1933 = vst [vmem:[#allocation4 + $0x40] sm:$0xff] %v1917
        %1934 = vst [vmem:[#allocation4 + $0x48] sm:$0xff] %v1918
        %1935 = vst [vmem:[#allocation4 + $0x50] sm:$0xff] %v1919
        %1936 = vst [vmem:[#allocation4 + $0x58] sm:$0xff] %v1920
        %1937 = vst [vmem:[#allocation4 + $0x60] sm:$0xff] %v1921
        %1938 = vst [vmem:[#allocation4 + $0x68] sm:$0xff] %v1922
        %1939 = vst [vmem:[#allocation4 + $0x70] sm:$0xff] %v1923
        %1940 = vst [vmem:[#allocation4 + $0x78] sm:$0xff] %v1924
        // Predicated region
        $region85: #{tpu_custom_call.1} parent=59 // pred_check
          %p1941 = pneg %p513
        $region86: #{tpu_custom_call.1} parent=59 // pred_check_branch
          %1943 = sbr.rel (%p1941) target = $region88
        $region87: #{tpu_custom_call.1} parent=59 // pred_region
          %v1944 = vld [vmem:[#allocation2] sm:$0xff]
          %v1945 = vld [vmem:[#allocation2 + $0x8] sm:$0xff]
          %v1946 = vld [vmem:[#allocation2 + $0x10] sm:$0xff]
          %v1947 = vld [vmem:[#allocation2 + $0x18] sm:$0xff]
          %v1948 = vld [vmem:[#allocation2 + $0x20] sm:$0xff]
          %v1949 = vld [vmem:[#allocation2 + $0x28] sm:$0xff]
          %v1950 = vld [vmem:[#allocation2 + $0x30] sm:$0xff]
          %v1951 = vld [vmem:[#allocation2 + $0x38] sm:$0xff]
          %v1952 = vld [vmem:[#allocation2 + $0x40] sm:$0xff]
          %v1953 = vld [vmem:[#allocation2 + $0x48] sm:$0xff]
          %v1954 = vld [vmem:[#allocation2 + $0x50] sm:$0xff]
          %v1955 = vld [vmem:[#allocation2 + $0x58] sm:$0xff]
          %v1956 = vld [vmem:[#allocation2 + $0x60] sm:$0xff]
          %v1957 = vld [vmem:[#allocation2 + $0x68] sm:$0xff]
          %v1958 = vld [vmem:[#allocation2 + $0x70] sm:$0xff]
          %v1959 = vld [vmem:[#allocation2 + $0x78] sm:$0xff]
          %v1960 = vld [vmem:[#allocation4] sm:$0xff]
          %v1961 = vld [vmem:[#allocation4 + $0x8] sm:$0xff]
          %v1962 = vld [vmem:[#allocation4 + $0x10] sm:$0xff]
          %v1963 = vld [vmem:[#allocation4 + $0x18] sm:$0xff]
          %v1964 = vld [vmem:[#allocation4 + $0x20] sm:$0xff]
          %v1965 = vld [vmem:[#allocation4 + $0x28] sm:$0xff]
          %v1966 = vld [vmem:[#allocation4 + $0x30] sm:$0xff]
          %v1967 = vld [vmem:[#allocation4 + $0x38] sm:$0xff]
          %v1968 = vld [vmem:[#allocation4 + $0x40] sm:$0xff]
          %v1969 = vld [vmem:[#allocation4 + $0x48] sm:$0xff]
          %v1970 = vld [vmem:[#allocation4 + $0x50] sm:$0xff]
          %v1971 = vld [vmem:[#allocation4 + $0x58] sm:$0xff]
          %v1972 = vld [vmem:[#allocation4 + $0x60] sm:$0xff]
          %v1973 = vld [vmem:[#allocation4 + $0x68] sm:$0xff]
          %v1974 = vld [vmem:[#allocation4 + $0x70] sm:$0xff]
          %v1975 = vld [vmem:[#allocation4 + $0x78] sm:$0xff]
          %v1976 = vadd.f32 %v1944, %v1960
          %v1977 = vadd.f32 %v1945, %v1961
          %v1978 = vadd.f32 %v1946, %v1962
          %v1979 = vadd.f32 %v1947, %v1963
          %v1980 = vadd.f32 %v1948, %v1964
          %v1981 = vadd.f32 %v1949, %v1965
          %v1982 = vadd.f32 %v1950, %v1966
          %v1983 = vadd.f32 %v1951, %v1967
          %v1984 = vadd.f32 %v1952, %v1968
          %v1985 = vadd.f32 %v1953, %v1969
          %v1986 = vadd.f32 %v1954, %v1970
          %v1987 = vadd.f32 %v1955, %v1971
          %v1988 = vadd.f32 %v1956, %v1972
          %v1989 = vadd.f32 %v1957, %v1973
          %v1990 = vadd.f32 %v1958, %v1974
          %v1991 = vadd.f32 %v1959, %v1975
          %v1992 = vld [vmem:[%s9] sm:$0x1]
          %v1994 = vlaneseq
          %v1995 = vshrl.u32 %v1994, 7
          %v1996 = vsub.s32 0, %v1995
          %v1997 = vrot.slane %v1992, %v1996
          %v1999 = vadd.f32 %v1976, %v1997
          %v2000 = vadd.f32 %v1977, %v1997
          %v2001 = vadd.f32 %v1978, %v1997
          %v2002 = vadd.f32 %v1979, %v1997
          %v2003 = vadd.f32 %v1980, %v1997
          %v2004 = vadd.f32 %v1981, %v1997
          %v2005 = vadd.f32 %v1982, %v1997
          %v2006 = vadd.f32 %v1983, %v1997
          %v2007 = vadd.f32 %v1984, %v1997
          %v2008 = vadd.f32 %v1985, %v1997
          %v2009 = vadd.f32 %v1986, %v1997
          %v2010 = vadd.f32 %v1987, %v1997
          %v2011 = vadd.f32 %v1988, %v1997
          %v2012 = vadd.f32 %v1989, %v1997
          %v2013 = vadd.f32 %v1990, %v1997
          %v2014 = vadd.f32 %v1991, %v1997
          %2015 = vst [vmem:[%s502] sm:$0xff] %v1999
          %2016 = vst [vmem:[%s502 + $0x8] sm:$0xff] %v2000
          %2017 = vst [vmem:[%s502 + $0x10] sm:$0xff] %v2001
          %2018 = vst [vmem:[%s502 + $0x18] sm:$0xff] %v2002
          %2019 = vst [vmem:[%s502 + $0x20] sm:$0xff] %v2003
          %2020 = vst [vmem:[%s502 + $0x28] sm:$0xff] %v2004
          %2021 = vst [vmem:[%s502 + $0x30] sm:$0xff] %v2005
          %2022 = vst [vmem:[%s502 + $0x38] sm:$0xff] %v2006
          %2023 = vst [vmem:[%s502 + $0x40] sm:$0xff] %v2007
          %2024 = vst [vmem:[%s502 + $0x48] sm:$0xff] %v2008
          %2025 = vst [vmem:[%s502 + $0x50] sm:$0xff] %v2009
          %2026 = vst [vmem:[%s502 + $0x58] sm:$0xff] %v2010
          %2027 = vst [vmem:[%s502 + $0x60] sm:$0xff] %v2011
          %2028 = vst [vmem:[%s502 + $0x68] sm:$0xff] %v2012
          %2029 = vst [vmem:[%s502 + $0x70] sm:$0xff] %v2013
          %2030 = vst [vmem:[%s502 + $0x78] sm:$0xff] %v2014
        $region88: #{tpu_custom_call.1} parent=59 // pred_fallthru
          _
        %s2031 = sand.u32 %s286, 1
        %s2032 = scalar_lea.sflag [#allocation7], %s2031
        %s2033 = sand.u32 %s286, 1
        %s2034 = smul.addr %s2033, 128
        %s2035 = scalar_lea.vmem [#allocation14], %s2034
        // Predicated region
        $region89: #{tpu_custom_call.1} parent=59 // pred_check
          %p2036 = pneg %p296
        $region90: #{tpu_custom_call.1} parent=59 // pred_check_branch
          %2038 = sbr.rel (%p2036) target = $region92
        $region91: #{tpu_custom_call.1} parent=59 // pred_region
          %s2039 = smul.u32 16, %s35
          %s2041 = ssub.s32 2048, 2048
          %2042 = vsyncadd %s2032, %s2041
          %s2043 = smul.addr %s2039, 128
          %s2044 = scalar_lea.hbm %s10, %s2043
          %s2045 = sshll.u32 %s2035, 4
          %s2046 = int_to_ptr.vmem [resolvable:$true] %s2045
          %2051 = dma.vmem_to_hbm [thread:$0]  %s2046, 2048, %s2044, %s2032, 128, 128, 8
        $region92: #{tpu_custom_call.1} parent=59 // pred_fallthru
          _
      $region60: #{tpu_custom_call.1} parent=5 // pred_fallthru
        _
      %p2052 = scmp.le.s32.totalorder 2, %s26
      // Predicated region
      $region93: #{tpu_custom_call.1} parent=5 // pred_check
        %p2053 = pneg %p2052
      $region94: #{tpu_custom_call.1} parent=5 // pred_check_branch
        %2055 = sbr.rel (%p2053) target = $region96
      $region95: #{tpu_custom_call.1} parent=5 // pred_region
        %s2056 = ssub.s32 %s26, 2
        // Predicated region
        $region97: #{tpu_custom_call.1} parent=95 // pred_check
          %p2057 = pneg %p302
        $region98: #{tpu_custom_call.1} parent=95 // pred_check_branch
          %2059 = sbr.rel (%p2057) target = $region100
        $region99: #{tpu_custom_call.1} parent=95 // pred_region
          %s2060 = sand.u32 %s287, 1
          %s2061 = scalar_lea.sflag [#allocation7], %s2060
          %s2062 = sand.u32 %s287, 1
          %s2063 = smul.addr %s2062, 128
          %s2064 = scalar_lea.vmem [#allocation14], %s2063
          %2065 = dma.done %s2061, 2048
        $region100: #{tpu_custom_call.1} parent=95 // pred_fallthru
          _
      $region96: #{tpu_custom_call.1} parent=5 // pred_fallthru
        _
    $region6: #{tpu_custom_call.1} parent=1 // loop_footer
      %s30 = sadd.s32 1, %s26
    $region7: #{tpu_custom_call.1} parent=1 // loop_footer_branch
      %25 = sbr.rel target = $region3
    $region8: #{tpu_custom_call.1} parent=1 // loop_exit
      _
    %2066 = vsyncpa [#allocation6], 1
    %s2067 = scalar_lea.sflag [#allocation6], 1
    %2068 = vsyncpa %s2067, 1
    %2069 = vsyncpa [#allocation9], 1
    %s2070 = scalar_lea.sflag [#allocation9], 1
    %2071 = vsyncpa %s2070, 1
    %2072 = vsyncpa [#allocation12], 1
    %2073 = vsyncpa [#allocation7], 1
    %s2074 = scalar_lea.sflag [#allocation7], 1
    %2075 = vsyncpa %s2074, 1

// kernel: tpu_custom_call.1
$region0: #{tpu_custom_call.1}
  #allocation0 [shape = 'u32[]', space=smem, size = 0x4, offset = 0x4, fixed_abs, tag = 'smem constant byte address 0x4 - core index']
  #allocation1 [shape = 'u32[144,128]{1,0:T(1,128)}', space=vmem, size = 0x12000, scoped, tag = 'internal scratch']
  #allocation2 [shape = 'f32[128,128]{1,0:T(8,128)}', space=vmem, size = 0x10000, scoped, tag = 'scratch operand']
  #allocation3 [shape = 'f32[128,128]{1,0:T(8,128)}', space=vmem, size = 0x10000, scoped, tag = 'scratch operand']
  #allocation4 [shape = 'f32[128,128]{1,0:T(8,128)}', space=vmem, size = 0x10000, scoped, tag = 'scratch operand']
  %s0 = inlined_call_operand.hbm [shape: f32[512,128], index: 0, kind: input, shape index: {}]
  %s1 = inlined_call_operand.hbm [shape: f32[512,128], index: 1, kind: input, shape index: {}]
  %s2 = inlined_call_operand.hbm [shape: f32[128,128], index: 2, kind: input, shape index: {}]
  %s3 = inlined_call_operand.vmem [shape: f32[1,128], index: 3, kind: input, shape index: {}]
  %s4 = inlined_call_operand.vmem [shape: f32[1,128], index: 4, kind: input, shape index: {}]
  %s5 = inlined_call_operand.vmem [shape: f32[1,128], index: 5, kind: input, shape index: {}]
  %s6 = inlined_call_operand.hbm [shape: f32[128,512], index: 6, kind: input, shape index: {}]
  %s7 = inlined_call_operand.vmem [shape: f32[1,512], index: 7, kind: input, shape index: {}]
  %s8 = inlined_call_operand.hbm [shape: f32[512,128], index: 8, kind: input, shape index: {}]
  %s9 = inlined_call_operand.vmem [shape: f32[1,128], index: 9, kind: input, shape index: {}]
  %s10 = inlined_call_operand.hbm [shape: f32[512,128], index: 10, kind: output, shape index: {}]
  %s11 = sld [smem:[#allocation0]]
  $region101: #{tpu_custom_call.1} parent=0
    _
  %s13 = ssub.s32 1, %s11
  %s14 = scalar_select 0, %s13, %s11
  $region1: #{tpu_custom_call.1} parent=0
    #allocation5 [shape = 'u8[131072]{0}', space=vmem, size = 0x20000, scoped, tag = 'input window, operand 0']
    #allocation6 [shape = 's32[2]{0}', space=sflag, size = 0x8, scoped, tag = 'scoped memory for tpu_custom_call.1']
    #allocation7 [shape = 's32[2]{0}', space=sflag, size = 0x8, scoped, tag = 'scoped memory for tpu_custom_call.1']
    #allocation8 [shape = 'u8[131072]{0}', space=vmem, size = 0x20000, scoped, tag = 'input window, operand 1']
    #allocation9 [shape = 's32[2]{0}', space=sflag, size = 0x8, scoped, tag = 'scoped memory for tpu_custom_call.1']
    #allocation10 [shape = 'u8[65536]{0}', space=vmem, size = 0x10000, scoped, tag = 'input window, operand 2, single buffered']
    #allocation11 [shape = 'u8[262144]{0}', space=vmem, size = 0x40000, scoped, tag = 'input window, operand 6, single buffered']
    #allocation12 [shape = 's32[1]{0}', space=sflag, size = 0x4, scoped, tag = 'scoped memory for tpu_custom_call.1']
    #allocation13 [shape = 'u8[262144]{0}', space=vmem, size = 0x40000, scoped, tag = 'input window, operand 8, single buffered']
    #allocation14 [shape = 'u8[131072]{0}', space=vmem, size = 0x20000, scoped, tag = 'output window, operand 0']
    %15 = vsyncpa [#allocation6], 0
    %s16 = scalar_lea.sflag [#allocation6], 1
    %17 = vsyncpa %s16, 0
    %18 = vsyncpa [#allocation9], 0
    %s19 = scalar_lea.sflag [#allocation9], 1
    %20 = vsyncpa %s19, 0
    %21 = vsyncpa [#allocation12], 0
    %22 = vsyncpa [#allocation7], 0
    %s23 = scalar_lea.sflag [#allocation7], 1
    %24 = vsyncpa %s23, 0
    loop: start=0, step=1, limit=6
    $region2: #{tpu_custom_call.1} parent=1 // loop_pre_header
      _
    $region3: #{tpu_custom_call.1} parent=1 // loop_header
      %s26 = sphi 0, %s30
      %p27 = scmp.ge.s32.totalorder %s26, 6
      %s33 = sphi 0, %s45
      %s34 = sphi 0, %s41
      %s35 = sphi 0, %s33
      %s36 = sphi 0, %s34
      %s37 = sphi 0, %s35
      %s38 = sphi 0, %s36
      %s48 = sphi 0, %s50
      %s51 = sphi 0, %s48
      %s52 = sphi 0, %s51
      %s68 = sphi 0, %s52
      %s74 = sphi 0, %s76
      %s77 = sphi 0, %s74
      %s78 = sphi 0, %s77
      %s94 = sphi 0, %s78
      %s98 = sphi 0, %s98
      %s100 = sphi 0, %s98
      %s101 = sphi 0, %s100
      %s115 = sphi 0, %s101
      %s119 = sphi 0, %s119
      %s121 = sphi 0, %s119
      %s122 = sphi 0, %s121
      %s136 = sphi 0, %s122
      %s140 = sphi 0, %s140
      %s142 = sphi 0, %s140
      %s143 = sphi 0, %s142
      %s157 = sphi 0, %s143
      %s161 = sphi 0, %s161
      %s163 = sphi 0, %s161
      %s164 = sphi 0, %s163
      %s178 = sphi 0, %s164
      %s184 = sphi 0, %s186
      %s187 = sphi 0, %s184
      %s188 = sphi 0, %s187
      %s204 = sphi 0, %s188
      %s210 = sphi 0, %s212
      %s213 = sphi 0, %s210
      %s214 = sphi 0, %s213
      %s230 = sphi 0, %s214
      %s236 = sphi 0, %s238
      %s239 = sphi 0, %s236
      %s240 = sphi 0, %s239
      %s256 = sphi 0, %s240
      %s260 = sphi 0, %s260
      %s262 = sphi 0, %s260
      %s263 = sphi 0, %s262
      %s277 = sphi 0, %s263
      %s283 = sphi 0, %s285
      %s286 = sphi 0, %s283
      %s287 = sphi 0, %s286
      %s303 = sphi 0, %s287
    $region4: #{tpu_custom_call.1} parent=1 // loop_header_branch
      %29 = sbr.rel (%p27) target = $region8
    $region5: #{tpu_custom_call.1} parent=1 // loop_body
      %s31 = ssub.s32 %s26, 1
      %s32 = ssub.s32 %s26, 2
      %s39 = sadd.s32 1, %s34
      %p40 = scmp.ge.s32.totalorder %s39, 1
      %s41 = scalar_select %p40, 0, %s39
      %s42 = sadd.s32 1, %s33
      %s43 = scalar_select %p40, %s42, %s33
      %p44 = scmp.ge.s32.totalorder %s43, 4
      %s45 = scalar_select %p44, 0, %s43
      %s46 = ssub.s32 %s33, %s45
      %p47 = scmp.eq.s32.totalorder %s46, 0
      %s49 = sadd.s32 %s48, 1
      %s50 = scalar_select %p47, %s48, %s49
      %p53 = pneg %p47
      %p54 = scmp.eq.s32.totalorder %s26, 3
      %p55 = por %p53, %p54
      %p56 = scmp.ne.s32.totalorder %s48, %s51
      %p57 = scmp.eq.s32.totalorder %s26, 0
      %p58 = por %p56, %p57
      %p59 = scmp.ne.s32.totalorder %s48, %s51
      %p60 = scmp.eq.s32.totalorder %s31, 3
      %p61 = por %p59, %p60
      %p62 = scmp.ne.s32.totalorder %s51, %s52
      %p63 = scmp.eq.s32.totalorder %s31, 0
      %p64 = por %p62, %p63
      %p65 = scmp.ne.s32.totalorder %s51, %s52
      %p66 = scmp.eq.s32.totalorder %s32, 3
      %p67 = por %p65, %p66
      %p69 = scmp.ne.s32.totalorder %s52, %s68
      %p70 = scmp.eq.s32.totalorder %s32, 0
      %p71 = por %p69, %p70
      %s72 = ssub.s32 %s33, %s45
      %p73 = scmp.eq.s32.totalorder %s72, 0
      %s75 = sadd.s32 %s74, 1
      %s76 = scalar_select %p73, %s74, %s75
      %p79 = pneg %p73
      %p80 = scmp.eq.s32.totalorder %s26, 3
      %p81 = por %p79, %p80
      %p82 = scmp.ne.s32.totalorder %s74, %s77
      %p83 = scmp.eq.s32.totalorder %s26, 0
      %p84 = por %p82, %p83
      %p85 = scmp.ne.s32.totalorder %s74, %s77
      %p86 = scmp.eq.s32.totalorder %s31, 3
      %p87 = por %p85, %p86
      %p88 = scmp.ne.s32.totalorder %s77, %s78
      %p89 = scmp.eq.s32.totalorder %s31, 0
      %p90 = por %p88, %p89
      %p91 = scmp.ne.s32.totalorder %s77, %s78
      %p92 = scmp.eq.s32.totalorder %s32, 3
      %p93 = por %p91, %p92
      %p95 = scmp.ne.s32.totalorder %s78, %s94
      %p96 = scmp.eq.s32.totalorder %s32, 0
      %p97 = por %p95, %p96
      %s99 = sadd.s32 %s98, 1
      %p102 = scmp.eq.s32.totalorder %s26, 3
      %p103 = scmp.ne.s32.totalorder %s98, %s100
      %p104 = scmp.eq.s32.totalorder %s26, 0
      %p105 = por %p103, %p104
      %p106 = scmp.ne.s32.totalorder %s98, %s100
      %p107 = scmp.eq.s32.totalorder %s31, 3
      %p108 = por %p106, %p107
      %p109 = scmp.ne.s32.totalorder %s100, %s101
      %p110 = scmp.eq.s32.totalorder %s31, 0
      %p111 = por %p109, %p110
      %p112 = scmp.ne.s32.totalorder %s100, %s101
      %p113 = scmp.eq.s32.totalorder %s32, 3
      %p114 = por %p112, %p113
      %p116 = scmp.ne.s32.totalorder %s101, %s115
      %p117 = scmp.eq.s32.totalorder %s32, 0
      %p118 = por %p116, %p117
      %s120 = sadd.s32 %s119, 1
      %p123 = scmp.eq.s32.totalorder %s26, 3
      %p124 = scmp.ne.s32.totalorder %s119, %s121
      %p125 = scmp.eq.s32.totalorder %s26, 0
      %p126 = por %p124, %p125
      %p127 = scmp.ne.s32.totalorder %s119, %s121
      %p128 = scmp.eq.s32.totalorder %s31, 3
      %p129 = por %p127, %p128
      %p130 = scmp.ne.s32.totalorder %s121, %s122
      %p131 = scmp.eq.s32.totalorder %s31, 0
      %p132 = por %p130, %p131
      %p133 = scmp.ne.s32.totalorder %s121, %s122
      %p134 = scmp.eq.s32.totalorder %s32, 3
      %p135 = por %p133, %p134
      %p137 = scmp.ne.s32.totalorder %s122, %s136
      %p138 = scmp.eq.s32.totalorder %s32, 0
      %p139 = por %p137, %p138
      %s141 = sadd.s32 %s140, 1
      %p144 = scmp.eq.s32.totalorder %s26, 3
      %p145 = scmp.ne.s32.totalorder %s140, %s142
      %p146 = scmp.eq.s32.totalorder %s26, 0
      %p147 = por %p145, %p146
      %p148 = scmp.ne.s32.totalorder %s140, %s142
      %p149 = scmp.eq.s32.totalorder %s31, 3
      %p150 = por %p148, %p149
      %p151 = scmp.ne.s32.totalorder %s142, %s143
      %p152 = scmp.eq.s32.totalorder %s31, 0
      %p153 = por %p151, %p152
      %p154 = scmp.ne.s32.totalorder %s142, %s143
      %p155 = scmp.eq.s32.totalorder %s32, 3
      %p156 = por %p154, %p155
      %p158 = scmp.ne.s32.totalorder %s143, %s157
      %p159 = scmp.eq.s32.totalorder %s32, 0
      %p160 = por %p158, %p159
      %s162 = sadd.s32 %s161, 1
      %p165 = scmp.eq.s32.totalorder %s26, 3
      %p166 = scmp.ne.s32.totalorder %s161, %s163
      %p167 = scmp.eq.s32.totalorder %s26, 0
      %p168 = por %p166, %p167
      %p169 = scmp.ne.s32.totalorder %s161, %s163
      %p170 = scmp.eq.s32.totalorder %s31, 3
      %p171 = por %p169, %p170
      %p172 = scmp.ne.s32.totalorder %s163, %s164
      %p173 = scmp.eq.s32.totalorder %s31, 0
      %p174 = por %p172, %p173
      %p175 = scmp.ne.s32.totalorder %s163, %s164
      %p176 = scmp.eq.s32.totalorder %s32, 3
      %p177 = por %p175, %p176
      %p179 = scmp.ne.s32.totalorder %s164, %s178
      %p180 = scmp.eq.s32.totalorder %s32, 0
      %p181 = por %p179, %p180
      %s182 = ssub.s32 %s34, %s41
      %p183 = scmp.eq.s32.totalorder %s182, 0
      %s185 = sadd.s32 %s184, 1
      %s186 = scalar_select %p183, %s184, %s185
      %p189 = pneg %p183
      %p190 = scmp.eq.s32.totalorder %s26, 3
      %p191 = por %p189, %p190
      %p192 = scmp.ne.s32.totalorder %s184, %s187
      %p193 = scmp.eq.s32.totalorder %s26, 0
      %p194 = por %p192, %p193
      %p195 = scmp.ne.s32.totalorder %s184, %s187
      %p196 = scmp.eq.s32.totalorder %s31, 3
      %p197 = por %p195, %p196
      %p198 = scmp.ne.s32.totalorder %s187, %s188
      %p199 = scmp.eq.s32.totalorder %s31, 0
      %p200 = por %p198, %p199
      %p201 = scmp.ne.s32.totalorder %s187, %s188
      %p202 = scmp.eq.s32.totalorder %s32, 3
      %p203 = por %p201, %p202
      %p205 = scmp.ne.s32.totalorder %s188, %s204
      %p206 = scmp.eq.s32.totalorder %s32, 0
      %p207 = por %p205, %p206
      %s208 = ssub.s32 %s34, %s41
      %p209 = scmp.eq.s32.totalorder %s208, 0
      %s211 = sadd.s32 %s210, 1
      %s212 = scalar_select %p209, %s210, %s211
      %p215 = pneg %p209
      %p216 = scmp.eq.s32.totalorder %s26, 3
      %p217 = por %p215, %p216
      %p218 = scmp.ne.s32.totalorder %s210, %s213
      %p219 = scmp.eq.s32.totalorder %s26, 0
      %p220 = por %p218, %p219
      %p221 = scmp.ne.s32.totalorder %s210, %s213
      %p222 = scmp.eq.s32.totalorder %s31, 3
      %p223 = por %p221, %p222
      %p224 = scmp.ne.s32.totalorder %s213, %s214
      %p225 = scmp.eq.s32.totalorder %s31, 0
      %p226 = por %p224, %p225
      %p227 = scmp.ne.s32.totalorder %s213, %s214
      %p228 = scmp.eq.s32.totalorder %s32, 3
      %p229 = por %p227, %p228
      %p231 = scmp.ne.s32.totalorder %s214, %s230
      %p232 = scmp.eq.s32.totalorder %s32, 0
      %p233 = por %p231, %p232
      %s234 = ssub.s32 %s34, %s41
      %p235 = scmp.eq.s32.totalorder %s234, 0
      %s237 = sadd.s32 %s236, 1
      %s238 = scalar_select %p235, %s236, %s237
      %p241 = pneg %p235
      %p242 = scmp.eq.s32.totalorder %s26, 3
      %p243 = por %p241, %p242
      %p244 = scmp.ne.s32.totalorder %s236, %s239
      %p245 = scmp.eq.s32.totalorder %s26, 0
      %p246 = por %p244, %p245
      %p247 = scmp.ne.s32.totalorder %s236, %s239
      %p248 = scmp.eq.s32.totalorder %s31, 3
      %p249 = por %p247, %p248
      %p250 = scmp.ne.s32.totalorder %s239, %s240
      %p251 = scmp.eq.s32.totalorder %s31, 0
      %p252 = por %p250, %p251
      %p253 = scmp.ne.s32.totalorder %s239, %s240
      %p254 = scmp.eq.s32.totalorder %s32, 3
      %p255 = por %p253, %p254
      %p257 = scmp.ne.s32.totalorder %s240, %s256
      %p258 = scmp.eq.s32.totalorder %s32, 0
      %p259 = por %p257, %p258
      %s261 = sadd.s32 %s260, 1
      %p264 = scmp.eq.s32.totalorder %s26, 3
      %p265 = scmp.ne.s32.totalorder %s260, %s262
      %p266 = scmp.eq.s32.totalorder %s26, 0
      %p267 = por %p265, %p266
      %p268 = scmp.ne.s32.totalorder %s260, %s262
      %p269 = scmp.eq.s32.totalorder %s31, 3
      %p270 = por %p268, %p269
      %p271 = scmp.ne.s32.totalorder %s262, %s263
      %p272 = scmp.eq.s32.totalorder %s31, 0
      %p273 = por %p271, %p272
      %p274 = scmp.ne.s32.totalorder %s262, %s263
      %p275 = scmp.eq.s32.totalorder %s32, 3
      %p276 = por %p274, %p275
      %p278 = scmp.ne.s32.totalorder %s263, %s277
      %p279 = scmp.eq.s32.totalorder %s32, 0
      %p280 = por %p278, %p279
      %s281 = ssub.s32 %s33, %s45
      %p282 = scmp.eq.s32.totalorder %s281, 0
      %s284 = sadd.s32 %s283, 1
      %s285 = scalar_select %p282, %s283, %s284
      %p288 = pneg %p282
      %p289 = scmp.eq.s32.totalorder %s26, 3
      %p290 = por %p288, %p289
      %p291 = scmp.ne.s32.totalorder %s283, %s286
      %p292 = scmp.eq.s32.totalorder %s26, 0
      %p293 = por %p291, %p292
      %p294 = scmp.ne.s32.totalorder %s283, %s286
      %p295 = scmp.eq.s32.totalorder %s31, 3
      %p296 = por %p294, %p295
      %p297 = scmp.ne.s32.totalorder %s286, %s287
      %p298 = scmp.eq.s32.totalorder %s31, 0
      %p299 = por %p297, %p298
      %p300 = scmp.ne.s32.totalorder %s286, %s287
      %p301 = scmp.eq.s32.totalorder %s32, 3
      %p302 = por %p300, %p301
      %p304 = scmp.ne.s32.totalorder %s287, %s303
      %p305 = scmp.eq.s32.totalorder %s32, 0
      %p306 = por %p304, %p305
      %p307 = scmp.le.s32.totalorder 1, %s26
      %p308 = scmp.lt.s32.totalorder %s26, 5
      %p309 = pnand %p307, %p308
      %p310 = pneg %p309
      // Predicated region
      $region9: #{tpu_custom_call.1} parent=5 // pred_check
        _
      $region10: #{tpu_custom_call.1} parent=5 // pred_check_branch
        %312 = sbr.rel (%p309) target = $region12
      $region11: #{tpu_custom_call.1} parent=5 // pred_region
        %s313 = ssub.s32 %s26, 1
        // Predicated region
        $region13: #{tpu_custom_call.1} parent=11 // pred_check
          %p314 = pneg %p111
        $region14: #{tpu_custom_call.1} parent=11 // pred_check_branch
          %316 = sbr.rel (%p314) target = $region16
        $region15: #{tpu_custom_call.1} parent=11 // pred_region
          %s318 = ssub.s32 2048, 2048
          %319 = vsyncadd [#allocation9], %s318
          %s320 = sshll.u32 [#allocation10], 4
          %s321 = int_to_ptr.vmem [resolvable:$true] %s320
          %326 = dma.hbm_to_vmem [thread:$0]  %s2, 2048, %s321, [#allocation9], 128, 128, 8
        $region16: #{tpu_custom_call.1} parent=11 // pred_fallthru
          _
        // Predicated region
        $region17: #{tpu_custom_call.1} parent=11 // pred_check
          %p327 = pneg %p132
        $region18: #{tpu_custom_call.1} parent=11 // pred_check_branch
          %329 = sbr.rel (%p327) target = $region20
        $region19: #{tpu_custom_call.1} parent=11 // pred_region
          _
        $region20: #{tpu_custom_call.1} parent=11 // pred_fallthru
          _
        // Predicated region
        $region21: #{tpu_custom_call.1} parent=11 // pred_check
          %p330 = pneg %p153
        $region22: #{tpu_custom_call.1} parent=11 // pred_check_branch
          %332 = sbr.rel (%p330) target = $region24
        $region23: #{tpu_custom_call.1} parent=11 // pred_region
          _
        $region24: #{tpu_custom_call.1} parent=11 // pred_fallthru
          _
        // Predicated region
        $region25: #{tpu_custom_call.1} parent=11 // pred_check
          %p333 = pneg %p174
        $region26: #{tpu_custom_call.1} parent=11 // pred_check_branch
          %335 = sbr.rel (%p333) target = $region28
        $region27: #{tpu_custom_call.1} parent=11 // pred_region
          _
        $region28: #{tpu_custom_call.1} parent=11 // pred_fallthru
          _
        // Predicated region
        $region29: #{tpu_custom_call.1} parent=11 // pred_check
          %p336 = pneg %p200
        $region30: #{tpu_custom_call.1} parent=11 // pred_check_branch
          %338 = sbr.rel (%p336) target = $region32
        $region31: #{tpu_custom_call.1} parent=11 // pred_region
          %s339 = smul.u32 4, %s36
          %s341 = ssub.s32 8192, 8192
          %342 = vsyncadd [#allocation12], %s341
          %s343 = smul.addr %s339, 128
          %s344 = scalar_lea.hbm %s6, %s343
          %s345 = sshll.u32 [#allocation11], 4
          %s346 = int_to_ptr.vmem [resolvable:$true] %s345
          %351 = dma.hbm_to_vmem [thread:$0]  %s344, 8192, %s346, [#allocation12], 512, 512, 32
        $region32: #{tpu_custom_call.1} parent=11 // pred_fallthru
          _
        // Predicated region
        $region33: #{tpu_custom_call.1} parent=11 // pred_check
          %p352 = pneg %p226
        $region34: #{tpu_custom_call.1} parent=11 // pred_check_branch
          %354 = sbr.rel (%p352) target = $region36
        $region35: #{tpu_custom_call.1} parent=11 // pred_region
          %s355 = smul.u32 4, %s36
          %p356 = scmp.lt.s32.totalorder %s355, 3
          %s357 = scalar_select %p356, %s355, 3
          %s358 = scalar_lea.vmem %s7, %s357
          %s359 = smul.u32 4, %s36
        $region36: #{tpu_custom_call.1} parent=11 // pred_fallthru
          _
        // Predicated region
        $region37: #{tpu_custom_call.1} parent=11 // pred_check
          %p360 = pneg %p252
        $region38: #{tpu_custom_call.1} parent=11 // pred_check_branch
          %362 = sbr.rel (%p360) target = $region40
        $region39: #{tpu_custom_call.1} parent=11 // pred_region
          %s363 = smul.u32 64, %s36
          %s365 = ssub.s32 8192, 8192
          %366 = vsyncadd [#allocation12], %s365
          %s367 = smul.addr %s363, 128
          %s368 = scalar_lea.hbm %s8, %s367
          %s369 = sshll.u32 [#allocation13], 4
          %s370 = int_to_ptr.vmem [resolvable:$true] %s369
          %375 = dma.hbm_to_vmem [thread:$0]  %s368, 8192, %s370, [#allocation12], 128, 128, 8
        $region40: #{tpu_custom_call.1} parent=11 // pred_fallthru
          _
        // Predicated region
        $region41: #{tpu_custom_call.1} parent=11 // pred_check
          %p376 = pneg %p273
        $region42: #{tpu_custom_call.1} parent=11 // pred_check_branch
          %378 = sbr.rel (%p376) target = $region44
        $region43: #{tpu_custom_call.1} parent=11 // pred_region
          _
        $region44: #{tpu_custom_call.1} parent=11 // pred_fallthru
          _
      $region12: #{tpu_custom_call.1} parent=5 // pred_fallthru
        _
      %p379 = scmp.lt.s32.totalorder %s26, 4
      // Predicated region
      $region45: #{tpu_custom_call.1} parent=5 // pred_check
        %p380 = pneg %p379
      $region46: #{tpu_custom_call.1} parent=5 // pred_check_branch
        %382 = sbr.rel (%p380) target = $region48
      $region47: #{tpu_custom_call.1} parent=5 // pred_region
        // Predicated region
        $region49: #{tpu_custom_call.1} parent=47 // pred_check
          %p383 = pneg %p58
        $region50: #{tpu_custom_call.1} parent=47 // pred_check_branch
          %385 = sbr.rel (%p383) target = $region52
        $region51: #{tpu_custom_call.1} parent=47 // pred_region
          %s386 = sand.u32 %s48, 1
          %s387 = scalar_lea.sflag [#allocation6], %s386
          %s388 = sand.u32 %s48, 1
          %s389 = smul.addr %s388, 128
          %s390 = scalar_lea.vmem [#allocation5], %s389
          %s391 = smul.u32 16, %s33
          %s393 = ssub.s32 2048, 2048
          %394 = vsyncadd %s387, %s393
          %s395 = smul.addr %s391, 128
          %s396 = scalar_lea.hbm %s0, %s395
          %s397 = sshll.u32 %s390, 4
          %s398 = int_to_ptr.vmem [resolvable:$true] %s397
          %403 = dma.hbm_to_vmem [thread:$0]  %s396, 2048, %s398, %s387, 128, 128, 8
        $region52: #{tpu_custom_call.1} parent=47 // pred_fallthru
          _
        // Predicated region
        $region53: #{tpu_custom_call.1} parent=47 // pred_check
          %p404 = pneg %p84
        $region54: #{tpu_custom_call.1} parent=47 // pred_check_branch
          %406 = sbr.rel (%p404) target = $region56
        $region55: #{tpu_custom_call.1} parent=47 // pred_region
          %s407 = sand.u32 %s26, 1
          %s408 = scalar_lea.sflag [#allocation9], %s407
          %s409 = sand.u32 %s74, 1
          %s410 = smul.addr %s409, 128
          %s411 = scalar_lea.vmem [#allocation8], %s410
          %s412 = smul.u32 16, %s33
          %s414 = ssub.s32 2048, 2048
          %415 = vsyncadd %s408, %s414
          %s416 = smul.addr %s412, 128
          %s417 = scalar_lea.hbm %s1, %s416
          %s418 = sshll.u32 %s411, 4
          %s419 = int_to_ptr.vmem [resolvable:$true] %s418
          %424 = dma.hbm_to_vmem [thread:$0]  %s417, 2048, %s419, %s408, 128, 128, 8
        $region56: #{tpu_custom_call.1} parent=47 // pred_fallthru
          _
      $region48: #{tpu_custom_call.1} parent=5 // pred_fallthru
        _
      %p425 = scmp.le.s32.totalorder 1, %s26
      %p426 = scmp.lt.s32.totalorder %s26, 5
      %p427 = pnand %p425, %p426
      %p428 = pneg %p427
      // Predicated region
      $region57: #{tpu_custom_call.1} parent=5 // pred_check
        _
      $region58: #{tpu_custom_call.1} parent=5 // pred_check_branch
        %430 = sbr.rel (%p427) target = $region60
      $region59: #{tpu_custom_call.1} parent=5 // pred_region
        %s431 = ssub.s32 %s26, 1
        %s432 = sand.u32 %s51, 1
        %s433 = scalar_lea.sflag [#allocation6], %s432
        %s434 = sand.u32 %s51, 1
        %s435 = smul.addr %s434, 128
        %s436 = scalar_lea.vmem [#allocation5], %s435
        // Predicated region
        $region61: #{tpu_custom_call.1} parent=59 // pred_check
          %p437 = pneg %p64
        $region62: #{tpu_custom_call.1} parent=59 // pred_check_branch
          %439 = sbr.rel (%p437) target = $region64
        $region63: #{tpu_custom_call.1} parent=59 // pred_region
          %440 = dma.done %s433, 2048
        $region64: #{tpu_custom_call.1} parent=59 // pred_fallthru
          _
        %s441 = sand.u32 %s31, 1
        %s442 = scalar_lea.sflag [#allocation9], %s441
        %s443 = sand.u32 %s77, 1
        %s444 = smul.addr %s443, 128
        %s445 = scalar_lea.vmem [#allocation8], %s444
        // Predicated region
        $region65: #{tpu_custom_call.1} parent=59 // pred_check
          %p446 = pneg %p90
        $region66: #{tpu_custom_call.1} parent=59 // pred_check_branch
          %448 = sbr.rel (%p446) target = $region68
        $region67: #{tpu_custom_call.1} parent=59 // pred_region
          %449 = dma.done %s442, 2048
        $region68: #{tpu_custom_call.1} parent=59 // pred_fallthru
          _
        // Predicated region
        $region69: #{tpu_custom_call.1} parent=59 // pred_check
          %p450 = pneg %p111
        $region70: #{tpu_custom_call.1} parent=59 // pred_check_branch
          %452 = sbr.rel (%p450) target = $region72
        $region71: #{tpu_custom_call.1} parent=59 // pred_region
          %453 = dma.done [#allocation9], 2048
        $region72: #{tpu_custom_call.1} parent=59 // pred_fallthru
          _
        // Predicated region
        $region73: #{tpu_custom_call.1} parent=59 // pred_check
          %p454 = pneg %p200
        $region74: #{tpu_custom_call.1} parent=59 // pred_check_branch
          %456 = sbr.rel (%p454) target = $region76
        $region75: #{tpu_custom_call.1} parent=59 // pred_region
          %457 = dma.done [#allocation12], 8192
        $region76: #{tpu_custom_call.1} parent=59 // pred_fallthru
          _
        // Predicated region
        $region77: #{tpu_custom_call.1} parent=59 // pred_check
          %p458 = pneg %p252
        $region78: #{tpu_custom_call.1} parent=59 // pred_check_branch
          %460 = sbr.rel (%p458) target = $region80
        $region79: #{tpu_custom_call.1} parent=59 // pred_region
          %461 = dma.done [#allocation12], 8192
        $region80: #{tpu_custom_call.1} parent=59 // pred_fallthru
          _
        %s462 = sand.u32 %s51, 1
        %s463 = scalar_lea.sflag [#allocation6], %s462
        %s464 = sand.u32 %s51, 1
        %s465 = smul.addr %s464, 128
        %s466 = scalar_lea.vmem [#allocation5], %s465
        %p467 = pneg %p64
        %p468 = pneg %p61
        %s469 = sand.u32 %s31, 1
        %s470 = scalar_lea.sflag [#allocation9], %s469
        %s471 = sand.u32 %s77, 1
        %s472 = smul.addr %s471, 128
        %s473 = scalar_lea.vmem [#allocation8], %s472
        %p474 = pneg %p90
        %p475 = pneg %p87
        %p476 = pneg %p111
        %p477 = pneg %p108
        %p478 = pneg %p132
        %p479 = pneg %p129
        %p480 = pneg %p153
        %p481 = pneg %p150
        %p482 = pneg %p174
        %p483 = pneg %p171
        %p484 = pneg %p200
        %p485 = pneg %p197
        %s486 = smul.u32 4, %s36
        %p487 = scmp.lt.s32.totalorder %s486, 3
        %s488 = scalar_select %p487, %s486, 3
        %s489 = scalar_lea.vmem %s7, %s488
        %p490 = pneg %p226
        %p491 = pneg %p223
        %p492 = pneg %p252
        %p493 = pneg %p249
        %p494 = pneg %p273
        %p495 = pneg %p270
        %p496 = pneg %p299
        %p497 = pneg %p296
        %s498 = sand.u32 %s286, 1
        %s499 = scalar_lea.sflag [#allocation7], %s498
        %s500 = sand.u32 %s286, 1
        %s501 = smul.addr %s500, 128
        %s502 = scalar_lea.vmem [#allocation14], %s501
        %s503 = smul.u32 16, %s35
        %s504 = smul.u32 16, %s35
        %s505 = smul.u32 4, %s36
        %s506 = smul.u32 4, %s36
        %p507 = scmp.lt.s32.totalorder %s506, 3
        %s508 = scalar_select %p507, %s506, 3
        %s509 = scalar_lea.vmem %s7, %s508
        %s510 = smul.u32 4, %s36
        %s511 = smul.u32 64, %s36
        %s512 = smul.u32 16, %s35
        %p513 = scmp.eq.s32.totalorder %s36, 0
        // Predicated region
        $region81: #{tpu_custom_call.1} parent=59 // pred_check
          %p514 = pneg %p513
        $region82: #{tpu_custom_call.1} parent=59 // pred_check_branch
          %516 = sbr.rel (%p514) target = $region84
        $region83: #{tpu_custom_call.1} parent=59 // pred_region
          %v517 = vld [vmem:[%s436] sm:$0xff]
          %v518 = vld [vmem:[%s436 + $0x8] sm:$0xff]
          %v519 = vld [vmem:[%s436 + $0x10] sm:$0xff]
          %v520 = vld [vmem:[%s436 + $0x18] sm:$0xff]
          %v521 = vld [vmem:[%s436 + $0x20] sm:$0xff]
          %v522 = vld [vmem:[%s436 + $0x28] sm:$0xff]
          %v523 = vld [vmem:[%s436 + $0x30] sm:$0xff]
          %v524 = vld [vmem:[%s436 + $0x38] sm:$0xff]
          %v525 = vld [vmem:[%s436 + $0x40] sm:$0xff]
          %v526 = vld [vmem:[%s436 + $0x48] sm:$0xff]
          %v527 = vld [vmem:[%s436 + $0x50] sm:$0xff]
          %v528 = vld [vmem:[%s436 + $0x58] sm:$0xff]
          %v529 = vld [vmem:[%s436 + $0x60] sm:$0xff]
          %v530 = vld [vmem:[%s436 + $0x68] sm:$0xff]
          %v531 = vld [vmem:[%s436 + $0x70] sm:$0xff]
          %v532 = vld [vmem:[%s436 + $0x78] sm:$0xff]
          %v533 = vld [vmem:[%s445] sm:$0xff]
          %v534 = vld [vmem:[%s445 + $0x8] sm:$0xff]
          %v535 = vld [vmem:[%s445 + $0x10] sm:$0xff]
          %v536 = vld [vmem:[%s445 + $0x18] sm:$0xff]
          %v537 = vld [vmem:[%s445 + $0x20] sm:$0xff]
          %v538 = vld [vmem:[%s445 + $0x28] sm:$0xff]
          %v539 = vld [vmem:[%s445 + $0x30] sm:$0xff]
          %v540 = vld [vmem:[%s445 + $0x38] sm:$0xff]
          %v541 = vld [vmem:[%s445 + $0x40] sm:$0xff]
          %v542 = vld [vmem:[%s445 + $0x48] sm:$0xff]
          %v543 = vld [vmem:[%s445 + $0x50] sm:$0xff]
          %v544 = vld [vmem:[%s445 + $0x58] sm:$0xff]
          %v545 = vld [vmem:[%s445 + $0x60] sm:$0xff]
          %v546 = vld [vmem:[%s445 + $0x68] sm:$0xff]
          %v547 = vld [vmem:[%s445 + $0x70] sm:$0xff]
          %v548 = vld [vmem:[%s445 + $0x78] sm:$0xff]
          %v549 = vld [vmem:[#allocation10] sm:$0xff]
          %v550 = vld [vmem:[#allocation10 + $0x8] sm:$0xff]
          %v551 = vld [vmem:[#allocation10 + $0x10] sm:$0xff]
          %v552 = vld [vmem:[#allocation10 + $0x18] sm:$0xff]
          %v553 = vld [vmem:[#allocation10 + $0x20] sm:$0xff]
          %v554 = vld [vmem:[#allocation10 + $0x28] sm:$0xff]
          %v555 = vld [vmem:[#allocation10 + $0x30] sm:$0xff]
          %v556 = vld [vmem:[#allocation10 + $0x38] sm:$0xff]
          %v557 = vld [vmem:[#allocation10 + $0x40] sm:$0xff]
          %v558 = vld [vmem:[#allocation10 + $0x48] sm:$0xff]
          %v559 = vld [vmem:[#allocation10 + $0x50] sm:$0xff]
          %v560 = vld [vmem:[#allocation10 + $0x58] sm:$0xff]
          %v561 = vld [vmem:[#allocation10 + $0x60] sm:$0xff]
          %v562 = vld [vmem:[#allocation10 + $0x68] sm:$0xff]
          %v563 = vld [vmem:[#allocation10 + $0x70] sm:$0xff]
          %v564 = vld [vmem:[#allocation10 + $0x78] sm:$0xff]
          %565 = vmatprep.subr.mxu0 0.0
          %566 = vmatpush1.msra.mxu0 %v549
          %567 = vmatprep.subr.mxu0 0.0
          %568 = vmatpush1.msra.mxu0 %v550
          %569 = vmatprep.subr.mxu0 0.0
          %570 = vmatpush1.msra.mxu0 %v551
          %571 = vmatprep.subr.mxu0 0.0
          %572 = vmatpush1.msra.mxu0 %v552
          %573 = vmatprep.subr.mxu0 0.0
          %574 = vmatpush1.msra.mxu0 %v553
          %575 = vmatprep.subr.mxu0 0.0
          %576 = vmatpush1.msra.mxu0 %v554
          %577 = vmatprep.subr.mxu0 0.0
          %578 = vmatpush1.msra.mxu0 %v555
          %579 = vmatprep.subr.mxu0 0.0
          %580 = vmatpush1.msra.mxu0 %v556
          %581 = vmatprep.subr.mxu0 0.0
          %582 = vmatpush1.msra.mxu0 %v557
          %583 = vmatprep.subr.mxu0 0.0
          %584 = vmatpush1.msra.mxu0 %v558
          %585 = vmatprep.subr.mxu0 0.0
          %586 = vmatpush1.msra.mxu0 %v559
          %587 = vmatprep.subr.mxu0 0.0
          %588 = vmatpush1.msra.mxu0 %v560
          %589 = vmatprep.subr.mxu0 0.0
          %590 = vmatpush1.msra.mxu0 %v561
          %591 = vmatprep.subr.mxu0 0.0
          %592 = vmatpush1.msra.mxu0 %v562
          %593 = vmatprep.subr.mxu0 0.0
          %594 = vmatpush1.msra.mxu0 %v563
          %595 = vmatprep.subr.mxu0 0.0
          %596 = vmatpush1.msra.mxu0 %v564
          %597 = vmatprep.subr.mxu0 0.0
          %598 = vmatpush1.msra.mxu0 0.0
          %599 = vmatprep.subr.mxu0 0.0
          %600 = vmatpush1.msra.mxu0 0.0
          %601 = vmatprep.subr.mxu0 0.0
          %602 = vmatpush1.msra.mxu0 0.0
          %603 = vmatprep.subr.mxu0 0.0
          %604 = vmatpush1.msra.mxu0 0.0
          %605 = vmatprep.subr.mxu0 0.0
          %606 = vmatpush1.msra.mxu0 0.0
          %607 = vmatprep.subr.mxu0 0.0
          %608 = vmatpush1.msra.mxu0 0.0
          %609 = vmatprep.subr.mxu0 0.0
          %610 = vmatpush1.msra.mxu0 0.0
          %611 = vmatprep.subr.mxu0 0.0
          %612 = vmatpush1.msra.mxu0 0.0
          %613 = vmatprep.subr.mxu0 0.0
          %614 = vmatpush1.msra.mxu0 0.0
          %615 = vmatprep.subr.mxu0 0.0
          %616 = vmatpush1.msra.mxu0 0.0
          %617 = vmatprep.subr.mxu0 0.0
          %618 = vmatpush1.msra.mxu0 0.0
          %619 = vmatprep.subr.mxu0 0.0
          %620 = vmatpush1.msra.mxu0 0.0
          %621 = vmatprep.subr.mxu0 0.0
          %622 = vmatpush1.msra.mxu0 0.0
          %623 = vmatprep.subr.mxu0 0.0
          %624 = vmatpush1.msra.mxu0 0.0
          %625 = vmatprep.subr.mxu0 0.0
          %626 = vmatpush1.msra.mxu0 0.0
          %627 = vmatprep.subr.mxu0 0.0
          %628 = vmatpush1.msra.mxu0 0.0
          %629 = vmatprep.mubr.f32.mxu0 0.0
          %630 = vmatmul.mubr.f32.gmra.mrb[0].mxu0 %v533
          %v631 = vpop.f32.mrb[0].mxu0
          %v632 = vadd.f32 0.0, %v631
          %v633 = vpop.f32.mrb[0].mxu0
          %634 = vmatprep.mubr.f32.mxu0 0.0
          %635 = vmatmul.mubr.f32.gmra.mrb[0].mxu0 %v534
          %v636 = vpop.f32.mrb[0].mxu0
          %v637 = vadd.f32 0.0, %v636
          %v638 = vpop.f32.mrb[0].mxu0
          %639 = vmatprep.mubr.f32.mxu0 0.0
          %640 = vmatmul.mubr.f32.gmra.mrb[0].mxu0 %v535
          %v641 = vpop.f32.mrb[0].mxu0
          %v642 = vadd.f32 0.0, %v641
          %v643 = vpop.f32.mrb[0].mxu0
          %644 = vmatprep.mubr.f32.mxu0 0.0
          %645 = vmatmul.mubr.f32.gmra.mrb[0].mxu0 %v536
          %v646 = vpop.f32.mrb[0].mxu0
          %v647 = vadd.f32 0.0, %v646
          %v648 = vpop.f32.mrb[0].mxu0
          %649 = vmatprep.mubr.f32.mxu0 0.0
          %650 = vmatmul.mubr.f32.gmra.mrb[0].mxu0 %v537
          %v651 = vpop.f32.mrb[0].mxu0
          %v652 = vadd.f32 0.0, %v651
          %v653 = vpop.f32.mrb[0].mxu0
          %654 = vmatprep.mubr.f32.mxu0 0.0
          %655 = vmatmul.mubr.f32.gmra.mrb[0].mxu0 %v538
          %v656 = vpop.f32.mrb[0].mxu0
          %v657 = vadd.f32 0.0, %v656
          %v658 = vpop.f32.mrb[0].mxu0
          %659 = vmatprep.mubr.f32.mxu0 0.0
          %660 = vmatmul.mubr.f32.gmra.mrb[0].mxu0 %v539
          %v661 = vpop.f32.mrb[0].mxu0
          %v662 = vadd.f32 0.0, %v661
          %v663 = vpop.f32.mrb[0].mxu0
          %664 = vmatprep.mubr.f32.mxu0 0.0
          %665 = vmatmul.mubr.f32.gmra.mrb[0].mxu0 %v540
          %v666 = vpop.f32.mrb[0].mxu0
          %v667 = vadd.f32 0.0, %v666
          %v668 = vpop.f32.mrb[0].mxu0
          %669 = vmatprep.mubr.f32.mxu0 0.0
          %670 = vmatmul.mubr.f32.gmra.mrb[0].mxu0 %v541
          %v671 = vpop.f32.mrb[0].mxu0
          %v672 = vadd.f32 0.0, %v671
          %v673 = vpop.f32.mrb[0].mxu0
          %674 = vmatprep.mubr.f32.mxu0 0.0
          %675 = vmatmul.mubr.f32.gmra.mrb[0].mxu0 %v542
          %v676 = vpop.f32.mrb[0].mxu0
          %v677 = vadd.f32 0.0, %v676
          %v678 = vpop.f32.mrb[0].mxu0
          %679 = vmatprep.mubr.f32.mxu0 0.0
          %680 = vmatmul.mubr.f32.gmra.mrb[0].mxu0 %v543
          %v681 = vpop.f32.mrb[0].mxu0
          %v682 = vadd.f32 0.0, %v681
          %v683 = vpop.f32.mrb[0].mxu0
          %684 = vmatprep.mubr.f32.mxu0 0.0
          %685 = vmatmul.mubr.f32.gmra.mrb[0].mxu0 %v544
          %v686 = vpop.f32.mrb[0].mxu0
          %v687 = vadd.f32 0.0, %v686
          %v688 = vpop.f32.mrb[0].mxu0
          %689 = vmatprep.mubr.f32.mxu0 0.0
          %690 = vmatmul.mubr.f32.gmra.mrb[0].mxu0 %v545
          %v691 = vpop.f32.mrb[0].mxu0
          %v692 = vadd.f32 0.0, %v691
          %v693 = vpop.f32.mrb[0].mxu0
          %694 = vmatprep.mubr.f32.mxu0 0.0
          %695 = vmatmul.mubr.f32.gmra.mrb[0].mxu0 %v546
          %v696 = vpop.f32.mrb[0].mxu0
          %v697 = vadd.f32 0.0, %v696
          %v698 = vpop.f32.mrb[0].mxu0
          %699 = vmatprep.mubr.f32.mxu0 0.0
          %700 = vmatmul.mubr.f32.gmra.mrb[0].mxu0 %v547
          %v701 = vpop.f32.mrb[0].mxu0
          %v702 = vadd.f32 0.0, %v701
          %v703 = vpop.f32.mrb[0].mxu0
          %704 = vmatprep.mubr.f32.mxu0 0.0
          %705 = vmatmul.mubr.f32.gmra.mrb[0].mxu0 %v548
          %v706 = vpop.f32.mrb[0].mxu0
          %v707 = vadd.f32 0.0, %v706
          %v708 = vpop.f32.mrb[0].mxu0
          %709 = vdwg.mxu0
          %v710 = vadd.f32 %v517, %v632
          %v711 = vadd.f32 %v518, %v637
          %v712 = vadd.f32 %v519, %v642
          %v713 = vadd.f32 %v520, %v647
          %v714 = vadd.f32 %v521, %v652
          %v715 = vadd.f32 %v522, %v657
          %v716 = vadd.f32 %v523, %v662
          %v717 = vadd.f32 %v524, %v667
          %v718 = vadd.f32 %v525, %v672
          %v719 = vadd.f32 %v526, %v677
          %v720 = vadd.f32 %v527, %v682
          %v721 = vadd.f32 %v528, %v687
          %v722 = vadd.f32 %v529, %v692
          %v723 = vadd.f32 %v530, %v697
          %v724 = vadd.f32 %v531, %v702
          %v725 = vadd.f32 %v532, %v707
          %v726 = vld [vmem:[%s3] sm:$0x1]
          %v728 = vlaneseq
          %v729 = vshrl.u32 %v728, 7
          %v730 = vsub.s32 0, %v729
          %v731 = vrot.slane %v726, %v730
          %v733 = vadd.f32 %v710, %v731
          %v734 = vadd.f32 %v711, %v731
          %v735 = vadd.f32 %v712, %v731
          %v736 = vadd.f32 %v713, %v731
          %v737 = vadd.f32 %v714, %v731
          %v738 = vadd.f32 %v715, %v731
          %v739 = vadd.f32 %v716, %v731
          %v740 = vadd.f32 %v717, %v731
          %v741 = vadd.f32 %v718, %v731
          %v742 = vadd.f32 %v719, %v731
          %v743 = vadd.f32 %v720, %v731
          %v744 = vadd.f32 %v721, %v731
          %v745 = vadd.f32 %v722, %v731
          %v746 = vadd.f32 %v723, %v731
          %v747 = vadd.f32 %v724, %v731
          %v748 = vadd.f32 %v725, %v731
          %749 = vadd.xlane.f32.xlu0 %v733
          %v750 = vpop.xlane.xlu0 %749
          %751 = vadd.xlane.f32.xlu0 %v734
          %v752 = vpop.xlane.xlu0 %751
          %753 = vadd.xlane.f32.xlu0 %v735
          %v754 = vpop.xlane.xlu0 %753
          %755 = vadd.xlane.f32.xlu0 %v736
          %v756 = vpop.xlane.xlu0 %755
          %757 = vadd.xlane.f32.xlu0 %v737
          %v758 = vpop.xlane.xlu0 %757
          %759 = vadd.xlane.f32.xlu0 %v738
          %v760 = vpop.xlane.xlu0 %759
          %761 = vadd.xlane.f32.xlu0 %v739
          %v762 = vpop.xlane.xlu0 %761
          %763 = vadd.xlane.f32.xlu0 %v740
          %v764 = vpop.xlane.xlu0 %763
          %765 = vadd.xlane.f32.xlu0 %v741
          %v766 = vpop.xlane.xlu0 %765
          %767 = vadd.xlane.f32.xlu0 %v742
          %v768 = vpop.xlane.xlu0 %767
          %769 = vadd.xlane.f32.xlu0 %v743
          %v770 = vpop.xlane.xlu0 %769
          %771 = vadd.xlane.f32.xlu0 %v744
          %v772 = vpop.xlane.xlu0 %771
          %773 = vadd.xlane.f32.xlu0 %v745
          %v774 = vpop.xlane.xlu0 %773
          %775 = vadd.xlane.f32.xlu0 %v746
          %v776 = vpop.xlane.xlu0 %775
          %777 = vadd.xlane.f32.xlu0 %v747
          %v778 = vpop.xlane.xlu0 %777
          %779 = vadd.xlane.f32.xlu0 %v748
          %v780 = vpop.xlane.xlu0 %779
          %v781 = vmul.f32 %v750, 0.0078125
          %v782 = vmul.f32 %v752, 0.0078125
          %v783 = vmul.f32 %v754, 0.0078125
          %v784 = vmul.f32 %v756, 0.0078125
          %v785 = vmul.f32 %v758, 0.0078125
          %v786 = vmul.f32 %v760, 0.0078125
          %v787 = vmul.f32 %v762, 0.0078125
          %v788 = vmul.f32 %v764, 0.0078125
          %v789 = vmul.f32 %v766, 0.0078125
          %v790 = vmul.f32 %v768, 0.0078125
          %v791 = vmul.f32 %v770, 0.0078125
          %v792 = vmul.f32 %v772, 0.0078125
          %v793 = vmul.f32 %v774, 0.0078125
          %v794 = vmul.f32 %v776, 0.0078125
          %v795 = vmul.f32 %v778, 0.0078125
          %v796 = vmul.f32 %v780, 0.0078125
          %v797 = vmul.f32 %v733, %v733
          %v798 = vmul.f32 %v734, %v734
          %v799 = vmul.f32 %v735, %v735
          %v800 = vmul.f32 %v736, %v736
          %v801 = vmul.f32 %v737, %v737
          %v802 = vmul.f32 %v738, %v738
          %v803 = vmul.f32 %v739, %v739
          %v804 = vmul.f32 %v740, %v740
          %v805 = vmul.f32 %v741, %v741
          %v806 = vmul.f32 %v742, %v742
          %v807 = vmul.f32 %v743, %v743
          %v808 = vmul.f32 %v744, %v744
          %v809 = vmul.f32 %v745, %v745
          %v810 = vmul.f32 %v746, %v746
          %v811 = vmul.f32 %v747, %v747
          %v812 = vmul.f32 %v748, %v748
          %813 = vadd.xlane.f32.xlu0 %v797
          %v814 = vpop.xlane.xlu0 %813
          %815 = vadd.xlane.f32.xlu0 %v798
          %v816 = vpop.xlane.xlu0 %815
          %817 = vadd.xlane.f32.xlu0 %v799
          %v818 = vpop.xlane.xlu0 %817
          %819 = vadd.xlane.f32.xlu0 %v800
          %v820 = vpop.xlane.xlu0 %819
          %821 = vadd.xlane.f32.xlu0 %v801
          %v822 = vpop.xlane.xlu0 %821
          %823 = vadd.xlane.f32.xlu0 %v802
          %v824 = vpop.xlane.xlu0 %823
          %825 = vadd.xlane.f32.xlu0 %v803
          %v826 = vpop.xlane.xlu0 %825
          %827 = vadd.xlane.f32.xlu0 %v804
          %v828 = vpop.xlane.xlu0 %827
          %829 = vadd.xlane.f32.xlu0 %v805
          %v830 = vpop.xlane.xlu0 %829
          %831 = vadd.xlane.f32.xlu0 %v806
          %v832 = vpop.xlane.xlu0 %831
          %833 = vadd.xlane.f32.xlu0 %v807
          %v834 = vpop.xlane.xlu0 %833
          %835 = vadd.xlane.f32.xlu0 %v808
          %v836 = vpop.xlane.xlu0 %835
          %837 = vadd.xlane.f32.xlu0 %v809
          %v838 = vpop.xlane.xlu0 %837
          %839 = vadd.xlane.f32.xlu0 %v810
          %v840 = vpop.xlane.xlu0 %839
          %841 = vadd.xlane.f32.xlu0 %v811
          %v842 = vpop.xlane.xlu0 %841
          %843 = vadd.xlane.f32.xlu0 %v812
          %v844 = vpop.xlane.xlu0 %843
          %v845 = vmul.f32 %v814, 0.0078125
          %v846 = vmul.f32 %v816, 0.0078125
          %v847 = vmul.f32 %v818, 0.0078125
          %v848 = vmul.f32 %v820, 0.0078125
          %v849 = vmul.f32 %v822, 0.0078125
          %v850 = vmul.f32 %v824, 0.0078125
          %v851 = vmul.f32 %v826, 0.0078125
          %v852 = vmul.f32 %v828, 0.0078125
          %v853 = vmul.f32 %v830, 0.0078125
          %v854 = vmul.f32 %v832, 0.0078125
          %v855 = vmul.f32 %v834, 0.0078125
          %v856 = vmul.f32 %v836, 0.0078125
          %v857 = vmul.f32 %v838, 0.0078125
          %v858 = vmul.f32 %v840, 0.0078125
          %v859 = vmul.f32 %v842, 0.0078125
          %v860 = vmul.f32 %v844, 0.0078125
          %v861 = vmul.f32 %v781, %v781
          %v862 = vmul.f32 %v782, %v782
          %v863 = vmul.f32 %v783, %v783
          %v864 = vmul.f32 %v784, %v784
          %v865 = vmul.f32 %v785, %v785
          %v866 = vmul.f32 %v786, %v786
          %v867 = vmul.f32 %v787, %v787
          %v868 = vmul.f32 %v788, %v788
          %v869 = vmul.f32 %v789, %v789
          %v870 = vmul.f32 %v790, %v790
          %v871 = vmul.f32 %v791, %v791
          %v872 = vmul.f32 %v792, %v792
          %v873 = vmul.f32 %v793, %v793
          %v874 = vmul.f32 %v794, %v794
          %v875 = vmul.f32 %v795, %v795
          %v876 = vmul.f32 %v796, %v796
          %v877 = vsub.f32 %v845, %v861
          %v878 = vsub.f32 %v846, %v862
          %v879 = vsub.f32 %v847, %v863
          %v880 = vsub.f32 %v848, %v864
          %v881 = vsub.f32 %v849, %v865
          %v882 = vsub.f32 %v850, %v866
          %v883 = vsub.f32 %v851, %v867
          %v884 = vsub.f32 %v852, %v868
          %v885 = vsub.f32 %v853, %v869
          %v886 = vsub.f32 %v854, %v870
          %v887 = vsub.f32 %v855, %v871
          %v888 = vsub.f32 %v856, %v872
          %v889 = vsub.f32 %v857, %v873
          %v890 = vsub.f32 %v858, %v874
          %v891 = vsub.f32 %v859, %v875
          %v892 = vsub.f32 %v860, %v876
          %v893 = vsub.f32 %v733, %v781
          %v894 = vsub.f32 %v734, %v782
          %v895 = vsub.f32 %v735, %v783
          %v896 = vsub.f32 %v736, %v784
          %v897 = vsub.f32 %v737, %v785
          %v898 = vsub.f32 %v738, %v786
          %v899 = vsub.f32 %v739, %v787
          %v900 = vsub.f32 %v740, %v788
          %v901 = vsub.f32 %v741, %v789
          %v902 = vsub.f32 %v742, %v790
          %v903 = vsub.f32 %v743, %v791
          %v904 = vsub.f32 %v744, %v792
          %v905 = vsub.f32 %v745, %v793
          %v906 = vsub.f32 %v746, %v794
          %v907 = vsub.f32 %v747, %v795
          %v908 = vsub.f32 %v748, %v796
          %v909 = vadd.f32 %v877, 1e-05
          %v910 = vadd.f32 %v878, 1e-05
          %v911 = vadd.f32 %v879, 1e-05
          %v912 = vadd.f32 %v880, 1e-05
          %v913 = vadd.f32 %v881, 1e-05
          %v914 = vadd.f32 %v882, 1e-05
          %v915 = vadd.f32 %v883, 1e-05
          %v916 = vadd.f32 %v884, 1e-05
          %v917 = vadd.f32 %v885, 1e-05
          %v918 = vadd.f32 %v886, 1e-05
          %v919 = vadd.f32 %v887, 1e-05
          %v920 = vadd.f32 %v888, 1e-05
          %v921 = vadd.f32 %v889, 1e-05
          %v922 = vadd.f32 %v890, 1e-05
          %v923 = vadd.f32 %v891, 1e-05
          %v924 = vadd.f32 %v892, 1e-05
          %v925 = vrsqrt.pop %v909
          %v926 = vrsqrt.pop %v910
          %v927 = vrsqrt.pop %v911
          %v928 = vrsqrt.pop %v912
          %v929 = vrsqrt.pop %v913
          %v930 = vrsqrt.pop %v914
          %v931 = vrsqrt.pop %v915
          %v932 = vrsqrt.pop %v916
          %v933 = vrsqrt.pop %v917
          %v934 = vrsqrt.pop %v918
          %v935 = vrsqrt.pop %v919
          %v936 = vrsqrt.pop %v920
          %v937 = vrsqrt.pop %v921
          %v938 = vrsqrt.pop %v922
          %v939 = vrsqrt.pop %v923
          %v940 = vrsqrt.pop %v924
          %v941 = vmul.f32 %v893, %v925
          %v942 = vmul.f32 %v894, %v926
          %v943 = vmul.f32 %v895, %v927
          %v944 = vmul.f32 %v896, %v928
          %v945 = vmul.f32 %v897, %v929
          %v946 = vmul.f32 %v898, %v930
          %v947 = vmul.f32 %v899, %v931
          %v948 = vmul.f32 %v900, %v932
          %v949 = vmul.f32 %v901, %v933
          %v950 = vmul.f32 %v902, %v934
          %v951 = vmul.f32 %v903, %v935
          %v952 = vmul.f32 %v904, %v936
          %v953 = vmul.f32 %v905, %v937
          %v954 = vmul.f32 %v906, %v938
          %v955 = vmul.f32 %v907, %v939
          %v956 = vmul.f32 %v908, %v940
          %v957 = vld [vmem:[%s4] sm:$0x1]
          %v959 = vlaneseq
          %v960 = vshrl.u32 %v959, 7
          %v961 = vsub.s32 0, %v960
          %v962 = vrot.slane %v957, %v961
          %v964 = vmul.f32 %v941, %v962
          %v965 = vmul.f32 %v942, %v962
          %v966 = vmul.f32 %v943, %v962
          %v967 = vmul.f32 %v944, %v962
          %v968 = vmul.f32 %v945, %v962
          %v969 = vmul.f32 %v946, %v962
          %v970 = vmul.f32 %v947, %v962
          %v971 = vmul.f32 %v948, %v962
          %v972 = vmul.f32 %v949, %v962
          %v973 = vmul.f32 %v950, %v962
          %v974 = vmul.f32 %v951, %v962
          %v975 = vmul.f32 %v952, %v962
          %v976 = vmul.f32 %v953, %v962
          %v977 = vmul.f32 %v954, %v962
          %v978 = vmul.f32 %v955, %v962
          %v979 = vmul.f32 %v956, %v962
          %v980 = vld [vmem:[%s5] sm:$0x1]
          %v982 = vlaneseq
          %v983 = vshrl.u32 %v982, 7
          %v984 = vsub.s32 0, %v983
          %v985 = vrot.slane %v980, %v984
          %v987 = vadd.f32 %v964, %v985
          %v988 = vadd.f32 %v965, %v985
          %v989 = vadd.f32 %v966, %v985
          %v990 = vadd.f32 %v967, %v985
          %v991 = vadd.f32 %v968, %v985
          %v992 = vadd.f32 %v969, %v985
          %v993 = vadd.f32 %v970, %v985
          %v994 = vadd.f32 %v971, %v985
          %v995 = vadd.f32 %v972, %v985
          %v996 = vadd.f32 %v973, %v985
          %v997 = vadd.f32 %v974, %v985
          %v998 = vadd.f32 %v975, %v985
          %v999 = vadd.f32 %v976, %v985
          %v1000 = vadd.f32 %v977, %v985
          %v1001 = vadd.f32 %v978, %v985
          %v1002 = vadd.f32 %v979, %v985
          %1003 = vst [vmem:[#allocation2] sm:$0xff] %v733
          %1004 = vst [vmem:[#allocation2 + $0x8] sm:$0xff] %v734
          %1005 = vst [vmem:[#allocation2 + $0x10] sm:$0xff] %v735
          %1006 = vst [vmem:[#allocation2 + $0x18] sm:$0xff] %v736
          %1007 = vst [vmem:[#allocation2 + $0x20] sm:$0xff] %v737
          %1008 = vst [vmem:[#allocation2 + $0x28] sm:$0xff] %v738
          %1009 = vst [vmem:[#allocation2 + $0x30] sm:$0xff] %v739
          %1010 = vst [vmem:[#allocation2 + $0x38] sm:$0xff] %v740
          %1011 = vst [vmem:[#allocation2 + $0x40] sm:$0xff] %v741
          %1012 = vst [vmem:[#allocation2 + $0x48] sm:$0xff] %v742
          %1013 = vst [vmem:[#allocation2 + $0x50] sm:$0xff] %v743
          %1014 = vst [vmem:[#allocation2 + $0x58] sm:$0xff] %v744
          %1015 = vst [vmem:[#allocation2 + $0x60] sm:$0xff] %v745
          %1016 = vst [vmem:[#allocation2 + $0x68] sm:$0xff] %v746
          %1017 = vst [vmem:[#allocation2 + $0x70] sm:$0xff] %v747
          %1018 = vst [vmem:[#allocation2 + $0x78] sm:$0xff] %v748
          %1019 = vst [vmem:[#allocation3] sm:$0xff] %v987
          %1020 = vst [vmem:[#allocation3 + $0x8] sm:$0xff] %v988
          %1021 = vst [vmem:[#allocation3 + $0x10] sm:$0xff] %v989
          %1022 = vst [vmem:[#allocation3 + $0x18] sm:$0xff] %v990
          %1023 = vst [vmem:[#allocation3 + $0x20] sm:$0xff] %v991
          %1024 = vst [vmem:[#allocation3 + $0x28] sm:$0xff] %v992
          %1025 = vst [vmem:[#allocation3 + $0x30] sm:$0xff] %v993
          %1026 = vst [vmem:[#allocation3 + $0x38] sm:$0xff] %v994
          %1027 = vst [vmem:[#allocation3 + $0x40] sm:$0xff] %v995
          %1028 = vst [vmem:[#allocation3 + $0x48] sm:$0xff] %v996
          %1029 = vst [vmem:[#allocation3 + $0x50] sm:$0xff] %v997
          %1030 = vst [vmem:[#allocation3 + $0x58] sm:$0xff] %v998
          %1031 = vst [vmem:[#allocation3 + $0x60] sm:$0xff] %v999
          %1032 = vst [vmem:[#allocation3 + $0x68] sm:$0xff] %v1000
          %1033 = vst [vmem:[#allocation3 + $0x70] sm:$0xff] %v1001
          %1034 = vst [vmem:[#allocation3 + $0x78] sm:$0xff] %v1002
          %1035 = vst [vmem:[#allocation4] sm:$0xff] 0.0
          %1036 = vst [vmem:[#allocation4 + $0x8] sm:$0xff] 0.0
          %1037 = vst [vmem:[#allocation4 + $0x10] sm:$0xff] 0.0
          %1038 = vst [vmem:[#allocation4 + $0x18] sm:$0xff] 0.0
          %1039 = vst [vmem:[#allocation4 + $0x20] sm:$0xff] 0.0
          %1040 = vst [vmem:[#allocation4 + $0x28] sm:$0xff] 0.0
          %1041 = vst [vmem:[#allocation4 + $0x30] sm:$0xff] 0.0
          %1042 = vst [vmem:[#allocation4 + $0x38] sm:$0xff] 0.0
          %1043 = vst [vmem:[#allocation4 + $0x40] sm:$0xff] 0.0
          %1044 = vst [vmem:[#allocation4 + $0x48] sm:$0xff] 0.0
          %1045 = vst [vmem:[#allocation4 + $0x50] sm:$0xff] 0.0
          %1046 = vst [vmem:[#allocation4 + $0x58] sm:$0xff] 0.0
          %1047 = vst [vmem:[#allocation4 + $0x60] sm:$0xff] 0.0
          %1048 = vst [vmem:[#allocation4 + $0x68] sm:$0xff] 0.0
          %1049 = vst [vmem:[#allocation4 + $0x70] sm:$0xff] 0.0
          %1050 = vst [vmem:[#allocation4 + $0x78] sm:$0xff] 0.0
        $region84: #{tpu_custom_call.1} parent=59 // pred_fallthru
          _
        %v1051 = vld [vmem:[#allocation3] sm:$0xff]
        %v1052 = vld [vmem:[#allocation3 + $0x8] sm:$0xff]
        %v1053 = vld [vmem:[#allocation3 + $0x10] sm:$0xff]
        %v1054 = vld [vmem:[#allocation3 + $0x18] sm:$0xff]
        %v1055 = vld [vmem:[#allocation3 + $0x20] sm:$0xff]
        %v1056 = vld [vmem:[#allocation3 + $0x28] sm:$0xff]
        %v1057 = vld [vmem:[#allocation3 + $0x30] sm:$0xff]
        %v1058 = vld [vmem:[#allocation3 + $0x38] sm:$0xff]
        %v1059 = vld [vmem:[#allocation3 + $0x40] sm:$0xff]
        %v1060 = vld [vmem:[#allocation3 + $0x48] sm:$0xff]
        %v1061 = vld [vmem:[#allocation3 + $0x50] sm:$0xff]
        %v1062 = vld [vmem:[#allocation3 + $0x58] sm:$0xff]
        %v1063 = vld [vmem:[#allocation3 + $0x60] sm:$0xff]
        %v1064 = vld [vmem:[#allocation3 + $0x68] sm:$0xff]
        %v1065 = vld [vmem:[#allocation3 + $0x70] sm:$0xff]
        %v1066 = vld [vmem:[#allocation3 + $0x78] sm:$0xff]
        %v1067 = vld [vmem:[#allocation11] sm:$0xff]
        %v1068 = vld [vmem:[#allocation11 + $0x8] sm:$0xff]
        %v1069 = vld [vmem:[#allocation11 + $0x10] sm:$0xff]
        %v1070 = vld [vmem:[#allocation11 + $0x18] sm:$0xff]
        %v1071 = vld [vmem:[#allocation11 + $0x20] sm:$0xff]
        %v1072 = vld [vmem:[#allocation11 + $0x28] sm:$0xff]
        %v1073 = vld [vmem:[#allocation11 + $0x30] sm:$0xff]
        %v1074 = vld [vmem:[#allocation11 + $0x38] sm:$0xff]
        %v1075 = vld [vmem:[#allocation11 + $0x40] sm:$0xff]
        %v1076 = vld [vmem:[#allocation11 + $0x48] sm:$0xff]
        %v1077 = vld [vmem:[#allocation11 + $0x50] sm:$0xff]
        %v1078 = vld [vmem:[#allocation11 + $0x58] sm:$0xff]
        %v1079 = vld [vmem:[#allocation11 + $0x60] sm:$0xff]
        %v1080 = vld [vmem:[#allocation11 + $0x68] sm:$0xff]
        %v1081 = vld [vmem:[#allocation11 + $0x70] sm:$0xff]
        %v1082 = vld [vmem:[#allocation11 + $0x78] sm:$0xff]
        %v1083 = vld [vmem:[#allocation11 + $0x80] sm:$0xff]
        %v1084 = vld [vmem:[#allocation11 + $0x88] sm:$0xff]
        %v1085 = vld [vmem:[#allocation11 + $0x90] sm:$0xff]
        %v1086 = vld [vmem:[#allocation11 + $0x98] sm:$0xff]
        %v1087 = vld [vmem:[#allocation11 + $0xa0] sm:$0xff]
        %v1088 = vld [vmem:[#allocation11 + $0xa8] sm:$0xff]
        %v1089 = vld [vmem:[#allocation11 + $0xb0] sm:$0xff]
        %v1090 = vld [vmem:[#allocation11 + $0xb8] sm:$0xff]
        %v1091 = vld [vmem:[#allocation11 + $0xc0] sm:$0xff]
        %v1092 = vld [vmem:[#allocation11 + $0xc8] sm:$0xff]
        %v1093 = vld [vmem:[#allocation11 + $0xd0] sm:$0xff]
        %v1094 = vld [vmem:[#allocation11 + $0xd8] sm:$0xff]
        %v1095 = vld [vmem:[#allocation11 + $0xe0] sm:$0xff]
        %v1096 = vld [vmem:[#allocation11 + $0xe8] sm:$0xff]
        %v1097 = vld [vmem:[#allocation11 + $0xf0] sm:$0xff]
        %v1098 = vld [vmem:[#allocation11 + $0xf8] sm:$0xff]
        %v1099 = vld [vmem:[#allocation11 + $0x100] sm:$0xff]
        %v1100 = vld [vmem:[#allocation11 + $0x108] sm:$0xff]
        %v1101 = vld [vmem:[#allocation11 + $0x110] sm:$0xff]
        %v1102 = vld [vmem:[#allocation11 + $0x118] sm:$0xff]
        %v1103 = vld [vmem:[#allocation11 + $0x120] sm:$0xff]
        %v1104 = vld [vmem:[#allocation11 + $0x128] sm:$0xff]
        %v1105 = vld [vmem:[#allocation11 + $0x130] sm:$0xff]
        %v1106 = vld [vmem:[#allocation11 + $0x138] sm:$0xff]
        %v1107 = vld [vmem:[#allocation11 + $0x140] sm:$0xff]
        %v1108 = vld [vmem:[#allocation11 + $0x148] sm:$0xff]
        %v1109 = vld [vmem:[#allocation11 + $0x150] sm:$0xff]
        %v1110 = vld [vmem:[#allocation11 + $0x158] sm:$0xff]
        %v1111 = vld [vmem:[#allocation11 + $0x160] sm:$0xff]
        %v1112 = vld [vmem:[#allocation11 + $0x168] sm:$0xff]
        %v1113 = vld [vmem:[#allocation11 + $0x170] sm:$0xff]
        %v1114 = vld [vmem:[#allocation11 + $0x178] sm:$0xff]
        %v1115 = vld [vmem:[#allocation11 + $0x180] sm:$0xff]
        %v1116 = vld [vmem:[#allocation11 + $0x188] sm:$0xff]
        %v1117 = vld [vmem:[#allocation11 + $0x190] sm:$0xff]
        %v1118 = vld [vmem:[#allocation11 + $0x198] sm:$0xff]
        %v1119 = vld [vmem:[#allocation11 + $0x1a0] sm:$0xff]
        %v1120 = vld [vmem:[#allocation11 + $0x1a8] sm:$0xff]
        %v1121 = vld [vmem:[#allocation11 + $0x1b0] sm:$0xff]
        %v1122 = vld [vmem:[#allocation11 + $0x1b8] sm:$0xff]
        %v1123 = vld [vmem:[#allocation11 + $0x1c0] sm:$0xff]
        %v1124 = vld [vmem:[#allocation11 + $0x1c8] sm:$0xff]
        %v1125 = vld [vmem:[#allocation11 + $0x1d0] sm:$0xff]
        %v1126 = vld [vmem:[#allocation11 + $0x1d8] sm:$0xff]
        %v1127 = vld [vmem:[#allocation11 + $0x1e0] sm:$0xff]
        %v1128 = vld [vmem:[#allocation11 + $0x1e8] sm:$0xff]
        %v1129 = vld [vmem:[#allocation11 + $0x1f0] sm:$0xff]
        %v1130 = vld [vmem:[#allocation11 + $0x1f8] sm:$0xff]
        %v1131 = vld [vmem:[%s509] sm:$0xf]
        %v1133 = vlaneseq
        %v1134 = vshrl.u32 %v1133, 7
        %v1135 = vsub.s32 0, %v1134
        %v1136 = vrot.slane %v1131, %v1135
        %v1137 = vlaneseq
        %v1138 = vshrl.u32 %v1137, 7
        %v1139 = vsub.s32 1, %v1138
        %v1140 = vrot.slane %v1131, %v1139
        %v1141 = vlaneseq
        %v1142 = vshrl.u32 %v1141, 7
        %v1143 = vsub.s32 2, %v1142
        %v1144 = vrot.slane %v1131, %v1143
        %v1145 = vlaneseq
        %v1146 = vshrl.u32 %v1145, 7
        %v1147 = vsub.s32 3, %v1146
        %v1148 = vrot.slane %v1131, %v1147
        %1153 = vmatprep.subr.mxu0 %v1068
        %1154 = vmatpush1.msra.mxu0 %v1067
        %1155 = vmatprep.subr.mxu0 %v1072
        %1156 = vmatpush1.msra.mxu0 %v1071
        %1157 = vmatprep.subr.mxu0 %v1076
        %1158 = vmatpush1.msra.mxu0 %v1075
        %1159 = vmatprep.subr.mxu0 %v1080
        %1160 = vmatpush1.msra.mxu0 %v1079
        %1161 = vmatprep.subr.mxu0 %v1084
        %1162 = vmatpush1.msra.mxu0 %v1083
        %1163 = vmatprep.subr.mxu0 %v1088
        %1164 = vmatpush1.msra.mxu0 %v1087
        %1165 = vmatprep.subr.mxu0 %v1092
        %1166 = vmatpush1.msra.mxu0 %v1091
        %1167 = vmatprep.subr.mxu0 %v1096
        %1168 = vmatpush1.msra.mxu0 %v1095
        %1169 = vmatprep.subr.mxu0 %v1100
        %1170 = vmatpush1.msra.mxu0 %v1099
        %1171 = vmatprep.subr.mxu0 %v1104
        %1172 = vmatpush1.msra.mxu0 %v1103
        %1173 = vmatprep.subr.mxu0 %v1108
        %1174 = vmatpush1.msra.mxu0 %v1107
        %1175 = vmatprep.subr.mxu0 %v1112
        %1176 = vmatpush1.msra.mxu0 %v1111
        %1177 = vmatprep.subr.mxu0 %v1116
        %1178 = vmatpush1.msra.mxu0 %v1115
        %1179 = vmatprep.subr.mxu0 %v1120
        %1180 = vmatpush1.msra.mxu0 %v1119
        %1181 = vmatprep.subr.mxu0 %v1124
        %1182 = vmatpush1.msra.mxu0 %v1123
        %1183 = vmatprep.subr.mxu0 %v1128
        %1184 = vmatpush1.msra.mxu0 %v1127
        %1185 = vmatprep.subr.mxu0 0.0
        %1186 = vmatpush1.msra.mxu0 0.0
        %1187 = vmatprep.subr.mxu0 0.0
        %1188 = vmatpush1.msra.mxu0 0.0
        %1189 = vmatprep.subr.mxu0 0.0
        %1190 = vmatpush1.msra.mxu0 0.0
        %1191 = vmatprep.subr.mxu0 0.0
        %1192 = vmatpush1.msra.mxu0 0.0
        %1193 = vmatprep.subr.mxu0 0.0
        %1194 = vmatpush1.msra.mxu0 0.0
        %1195 = vmatprep.subr.mxu0 0.0
        %1196 = vmatpush1.msra.mxu0 0.0
        %1197 = vmatprep.subr.mxu0 0.0
        %1198 = vmatpush1.msra.mxu0 0.0
        %1199 = vmatprep.subr.mxu0 0.0
        %1200 = vmatpush1.msra.mxu0 0.0
        %1201 = vmatprep.subr.mxu0 0.0
        %1202 = vmatpush1.msra.mxu0 0.0
        %1203 = vmatprep.subr.mxu0 0.0
        %1204 = vmatpush1.msra.mxu0 0.0
        %1205 = vmatprep.subr.mxu0 0.0
        %1206 = vmatpush1.msra.mxu0 0.0
        %1207 = vmatprep.subr.mxu0 0.0
        %1208 = vmatpush1.msra.mxu0 0.0
        %1209 = vmatprep.subr.mxu0 0.0
        %1210 = vmatpush1.msra.mxu0 0.0
        %1211 = vmatprep.subr.mxu0 0.0
        %1212 = vmatpush1.msra.mxu0 0.0
        %1213 = vmatprep.subr.mxu0 0.0
        %1214 = vmatpush1.msra.mxu0 0.0
        %1215 = vmatprep.subr.mxu0 0.0
        %1216 = vmatpush1.msra.mxu0 0.0
        %1217 = vmatprep.mubr.f32.mxu0 0.0
        %1218 = vmatmul.mubr.f32.gmra.mrb[0].mxu0 %v1051
        %v1219 = vpop.f32.mrb[0].mxu0
        %v1220 = vadd.f32 %v1136, %v1219
        %v1221 = vpop.f32.mrb[0].mxu0
        %v1222 = vadd.f32 %v1140, %v1221
        %1223 = vmatprep.mubr.f32.mxu0 0.0
        %1224 = vmatmul.mubr.f32.gmra.mrb[0].mxu0 %v1052
        %v1225 = vpop.f32.mrb[0].mxu0
        %v1226 = vadd.f32 %v1136, %v1225
        %v1227 = vpop.f32.mrb[0].mxu0
        %v1228 = vadd.f32 %v1140, %v1227
        %1229 = vmatprep.mubr.f32.mxu0 0.0
        %1230 = vmatmul.mubr.f32.gmra.mrb[0].mxu0 %v1053
        %v1231 = vpop.f32.mrb[0].mxu0
        %v1232 = vadd.f32 %v1136, %v1231
        %v1233 = vpop.f32.mrb[0].mxu0
        %v1234 = vadd.f32 %v1140, %v1233
        %1235 = vmatprep.mubr.f32.mxu0 0.0
        %1236 = vmatmul.mubr.f32.gmra.mrb[0].mxu0 %v1054
        %v1237 = vpop.f32.mrb[0].mxu0
        %v1238 = vadd.f32 %v1136, %v1237
        %v1239 = vpop.f32.mrb[0].mxu0
        %v1240 = vadd.f32 %v1140, %v1239
        %1241 = vmatprep.mubr.f32.mxu0 0.0
        %1242 = vmatmul.mubr.f32.gmra.mrb[0].mxu0 %v1055
        %v1243 = vpop.f32.mrb[0].mxu0
        %v1244 = vadd.f32 %v1136, %v1243
        %v1245 = vpop.f32.mrb[0].mxu0
        %v1246 = vadd.f32 %v1140, %v1245
        %1247 = vmatprep.mubr.f32.mxu0 0.0
        %1248 = vmatmul.mubr.f32.gmra.mrb[0].mxu0 %v1056
        %v1249 = vpop.f32.mrb[0].mxu0
        %v1250 = vadd.f32 %v1136, %v1249
        %v1251 = vpop.f32.mrb[0].mxu0
        %v1252 = vadd.f32 %v1140, %v1251
        %1253 = vmatprep.mubr.f32.mxu0 0.0
        %1254 = vmatmul.mubr.f32.gmra.mrb[0].mxu0 %v1057
        %v1255 = vpop.f32.mrb[0].mxu0
        %v1256 = vadd.f32 %v1136, %v1255
        %v1257 = vpop.f32.mrb[0].mxu0
        %v1258 = vadd.f32 %v1140, %v1257
        %1259 = vmatprep.mubr.f32.mxu0 0.0
        %1260 = vmatmul.mubr.f32.gmra.mrb[0].mxu0 %v1058
        %v1261 = vpop.f32.mrb[0].mxu0
        %v1262 = vadd.f32 %v1136, %v1261
        %v1263 = vpop.f32.mrb[0].mxu0
        %v1264 = vadd.f32 %v1140, %v1263
        %1265 = vmatprep.mubr.f32.mxu0 0.0
        %1266 = vmatmul.mubr.f32.gmra.mrb[0].mxu0 %v1059
        %v1267 = vpop.f32.mrb[0].mxu0
        %v1268 = vadd.f32 %v1136, %v1267
        %v1269 = vpop.f32.mrb[0].mxu0
        %v1270 = vadd.f32 %v1140, %v1269
        %1271 = vmatprep.mubr.f32.mxu0 0.0
        %1272 = vmatmul.mubr.f32.gmra.mrb[0].mxu0 %v1060
        %v1273 = vpop.f32.mrb[0].mxu0
        %v1274 = vadd.f32 %v1136, %v1273
        %v1275 = vpop.f32.mrb[0].mxu0
        %v1276 = vadd.f32 %v1140, %v1275
        %1277 = vmatprep.mubr.f32.mxu0 0.0
        %1278 = vmatmul.mubr.f32.gmra.mrb[0].mxu0 %v1061
        %v1279 = vpop.f32.mrb[0].mxu0
        %v1280 = vadd.f32 %v1136, %v1279
        %v1281 = vpop.f32.mrb[0].mxu0
        %v1282 = vadd.f32 %v1140, %v1281
        %1283 = vmatprep.mubr.f32.mxu0 0.0
        %1284 = vmatmul.mubr.f32.gmra.mrb[0].mxu0 %v1062
        %v1285 = vpop.f32.mrb[0].mxu0
        %v1286 = vadd.f32 %v1136, %v1285
        %v1287 = vpop.f32.mrb[0].mxu0
        %v1288 = vadd.f32 %v1140, %v1287
        %1289 = vmatprep.mubr.f32.mxu0 0.0
        %1290 = vmatmul.mubr.f32.gmra.mrb[0].mxu0 %v1063
        %v1291 = vpop.f32.mrb[0].mxu0
        %v1292 = vadd.f32 %v1136, %v1291
        %v1293 = vpop.f32.mrb[0].mxu0
        %v1294 = vadd.f32 %v1140, %v1293
        %1295 = vmatprep.mubr.f32.mxu0 0.0
        %1296 = vmatmul.mubr.f32.gmra.mrb[0].mxu0 %v1064
        %v1297 = vpop.f32.mrb[0].mxu0
        %v1298 = vadd.f32 %v1136, %v1297
        %v1299 = vpop.f32.mrb[0].mxu0
        %v1300 = vadd.f32 %v1140, %v1299
        %1301 = vmatprep.mubr.f32.mxu0 0.0
        %1302 = vmatmul.mubr.f32.gmra.mrb[0].mxu0 %v1065
        %v1303 = vpop.f32.mrb[0].mxu0
        %v1304 = vadd.f32 %v1136, %v1303
        %v1305 = vpop.f32.mrb[0].mxu0
        %v1306 = vadd.f32 %v1140, %v1305
        %1307 = vmatprep.mubr.f32.mxu0 0.0
        %1308 = vmatmul.mubr.f32.gmra.mrb[0].mxu0 %v1066
        %v1309 = vpop.f32.mrb[0].mxu0
        %v1310 = vadd.f32 %v1136, %v1309
        %v1311 = vpop.f32.mrb[0].mxu0
        %v1312 = vadd.f32 %v1140, %v1311
        %1313 = vdwg.mxu0
        %1314 = vmatprep.subr.mxu0 %v1070
        %1315 = vmatpush1.msra.mxu0 %v1069
        %1316 = vmatprep.subr.mxu0 %v1074
        %1317 = vmatpush1.msra.mxu0 %v1073
        %1318 = vmatprep.subr.mxu0 %v1078
        %1319 = vmatpush1.msra.mxu0 %v1077
        %1320 = vmatprep.subr.mxu0 %v1082
        %1321 = vmatpush1.msra.mxu0 %v1081
        %1322 = vmatprep.subr.mxu0 %v1086
        %1323 = vmatpush1.msra.mxu0 %v1085
        %1324 = vmatprep.subr.mxu0 %v1090
        %1325 = vmatpush1.msra.mxu0 %v1089
        %1326 = vmatprep.subr.mxu0 %v1094
        %1327 = vmatpush1.msra.mxu0 %v1093
        %1328 = vmatprep.subr.mxu0 %v1098
        %1329 = vmatpush1.msra.mxu0 %v1097
        %1330 = vmatprep.subr.mxu0 %v1102
        %1331 = vmatpush1.msra.mxu0 %v1101
        %1332 = vmatprep.subr.mxu0 %v1106
        %1333 = vmatpush1.msra.mxu0 %v1105
        %1334 = vmatprep.subr.mxu0 %v1110
        %1335 = vmatpush1.msra.mxu0 %v1109
        %1336 = vmatprep.subr.mxu0 %v1114
        %1337 = vmatpush1.msra.mxu0 %v1113
        %1338 = vmatprep.subr.mxu0 %v1118
        %1339 = vmatpush1.msra.mxu0 %v1117
        %1340 = vmatprep.subr.mxu0 %v1122
        %1341 = vmatpush1.msra.mxu0 %v1121
        %1342 = vmatprep.subr.mxu0 %v1126
        %1343 = vmatpush1.msra.mxu0 %v1125
        %1344 = vmatprep.subr.mxu0 %v1130
        %1345 = vmatpush1.msra.mxu0 %v1129
        %1346 = vmatprep.subr.mxu0 0.0
        %1347 = vmatpush1.msra.mxu0 0.0
        %1348 = vmatprep.subr.mxu0 0.0
        %1349 = vmatpush1.msra.mxu0 0.0
        %1350 = vmatprep.subr.mxu0 0.0
        %1351 = vmatpush1.msra.mxu0 0.0
        %1352 = vmatprep.subr.mxu0 0.0
        %1353 = vmatpush1.msra.mxu0 0.0
        %1354 = vmatprep.subr.mxu0 0.0
        %1355 = vmatpush1.msra.mxu0 0.0
        %1356 = vmatprep.subr.mxu0 0.0
        %1357 = vmatpush1.msra.mxu0 0.0
        %1358 = vmatprep.subr.mxu0 0.0
        %1359 = vmatpush1.msra.mxu0 0.0
        %1360 = vmatprep.subr.mxu0 0.0
        %1361 = vmatpush1.msra.mxu0 0.0
        %1362 = vmatprep.subr.mxu0 0.0
        %1363 = vmatpush1.msra.mxu0 0.0
        %1364 = vmatprep.subr.mxu0 0.0
        %1365 = vmatpush1.msra.mxu0 0.0
        %1366 = vmatprep.subr.mxu0 0.0
        %1367 = vmatpush1.msra.mxu0 0.0
        %1368 = vmatprep.subr.mxu0 0.0
        %1369 = vmatpush1.msra.mxu0 0.0
        %1370 = vmatprep.subr.mxu0 0.0
        %1371 = vmatpush1.msra.mxu0 0.0
        %1372 = vmatprep.subr.mxu0 0.0
        %1373 = vmatpush1.msra.mxu0 0.0
        %1374 = vmatprep.subr.mxu0 0.0
        %1375 = vmatpush1.msra.mxu0 0.0
        %1376 = vmatprep.subr.mxu0 0.0
        %1377 = vmatpush1.msra.mxu0 0.0
        %1378 = vmatprep.mubr.f32.mxu0 0.0
        %1379 = vmatmul.mubr.f32.gmra.mrb[0].mxu0 %v1051
        %v1380 = vpop.f32.mrb[0].mxu0
        %v1381 = vadd.f32 %v1144, %v1380
        %v1382 = vpop.f32.mrb[0].mxu0
        %v1383 = vadd.f32 %v1148, %v1382
        %1384 = vmatprep.mubr.f32.mxu0 0.0
        %1385 = vmatmul.mubr.f32.gmra.mrb[0].mxu0 %v1052
        %v1386 = vpop.f32.mrb[0].mxu0
        %v1387 = vadd.f32 %v1144, %v1386
        %v1388 = vpop.f32.mrb[0].mxu0
        %v1389 = vadd.f32 %v1148, %v1388
        %1390 = vmatprep.mubr.f32.mxu0 0.0
        %1391 = vmatmul.mubr.f32.gmra.mrb[0].mxu0 %v1053
        %v1392 = vpop.f32.mrb[0].mxu0
        %v1393 = vadd.f32 %v1144, %v1392
        %v1394 = vpop.f32.mrb[0].mxu0
        %v1395 = vadd.f32 %v1148, %v1394
        %1396 = vmatprep.mubr.f32.mxu0 0.0
        %1397 = vmatmul.mubr.f32.gmra.mrb[0].mxu0 %v1054
        %v1398 = vpop.f32.mrb[0].mxu0
        %v1399 = vadd.f32 %v1144, %v1398
        %v1400 = vpop.f32.mrb[0].mxu0
        %v1401 = vadd.f32 %v1148, %v1400
        %1402 = vmatprep.mubr.f32.mxu0 0.0
        %1403 = vmatmul.mubr.f32.gmra.mrb[0].mxu0 %v1055
        %v1404 = vpop.f32.mrb[0].mxu0
        %v1405 = vadd.f32 %v1144, %v1404
        %v1406 = vpop.f32.mrb[0].mxu0
        %v1407 = vadd.f32 %v1148, %v1406
        %1408 = vmatprep.mubr.f32.mxu0 0.0
        %1409 = vmatmul.mubr.f32.gmra.mrb[0].mxu0 %v1056
        %v1410 = vpop.f32.mrb[0].mxu0
        %v1411 = vadd.f32 %v1144, %v1410
        %v1412 = vpop.f32.mrb[0].mxu0
        %v1413 = vadd.f32 %v1148, %v1412
        %1414 = vmatprep.mubr.f32.mxu0 0.0
        %1415 = vmatmul.mubr.f32.gmra.mrb[0].mxu0 %v1057
        %v1416 = vpop.f32.mrb[0].mxu0
        %v1417 = vadd.f32 %v1144, %v1416
        %v1418 = vpop.f32.mrb[0].mxu0
        %v1419 = vadd.f32 %v1148, %v1418
        %1420 = vmatprep.mubr.f32.mxu0 0.0
        %1421 = vmatmul.mubr.f32.gmra.mrb[0].mxu0 %v1058
        %v1422 = vpop.f32.mrb[0].mxu0
        %v1423 = vadd.f32 %v1144, %v1422
        %v1424 = vpop.f32.mrb[0].mxu0
        %v1425 = vadd.f32 %v1148, %v1424
        %1426 = vmatprep.mubr.f32.mxu0 0.0
        %1427 = vmatmul.mubr.f32.gmra.mrb[0].mxu0 %v1059
        %v1428 = vpop.f32.mrb[0].mxu0
        %v1429 = vadd.f32 %v1144, %v1428
        %v1430 = vpop.f32.mrb[0].mxu0
        %v1431 = vadd.f32 %v1148, %v1430
        %1432 = vmatprep.mubr.f32.mxu0 0.0
        %1433 = vmatmul.mubr.f32.gmra.mrb[0].mxu0 %v1060
        %v1434 = vpop.f32.mrb[0].mxu0
        %v1435 = vadd.f32 %v1144, %v1434
        %v1436 = vpop.f32.mrb[0].mxu0
        %v1437 = vadd.f32 %v1148, %v1436
        %1438 = vmatprep.mubr.f32.mxu0 0.0
        %1439 = vmatmul.mubr.f32.gmra.mrb[0].mxu0 %v1061
        %v1440 = vpop.f32.mrb[0].mxu0
        %v1441 = vadd.f32 %v1144, %v1440
        %v1442 = vpop.f32.mrb[0].mxu0
        %v1443 = vadd.f32 %v1148, %v1442
        %1444 = vmatprep.mubr.f32.mxu0 0.0
        %1445 = vmatmul.mubr.f32.gmra.mrb[0].mxu0 %v1062
        %v1446 = vpop.f32.mrb[0].mxu0
        %v1447 = vadd.f32 %v1144, %v1446
        %v1448 = vpop.f32.mrb[0].mxu0
        %v1449 = vadd.f32 %v1148, %v1448
        %1450 = vmatprep.mubr.f32.mxu0 0.0
        %1451 = vmatmul.mubr.f32.gmra.mrb[0].mxu0 %v1063
        %v1452 = vpop.f32.mrb[0].mxu0
        %v1453 = vadd.f32 %v1144, %v1452
        %v1454 = vpop.f32.mrb[0].mxu0
        %v1455 = vadd.f32 %v1148, %v1454
        %1456 = vmatprep.mubr.f32.mxu0 0.0
        %1457 = vmatmul.mubr.f32.gmra.mrb[0].mxu0 %v1064
        %v1458 = vpop.f32.mrb[0].mxu0
        %v1459 = vadd.f32 %v1144, %v1458
        %v1460 = vpop.f32.mrb[0].mxu0
        %v1461 = vadd.f32 %v1148, %v1460
        %1462 = vmatprep.mubr.f32.mxu0 0.0
        %1463 = vmatmul.mubr.f32.gmra.mrb[0].mxu0 %v1065
        %v1464 = vpop.f32.mrb[0].mxu0
        %v1465 = vadd.f32 %v1144, %v1464
        %v1466 = vpop.f32.mrb[0].mxu0
        %v1467 = vadd.f32 %v1148, %v1466
        %1468 = vmatprep.mubr.f32.mxu0 0.0
        %1469 = vmatmul.mubr.f32.gmra.mrb[0].mxu0 %v1066
        %v1470 = vpop.f32.mrb[0].mxu0
        %v1471 = vadd.f32 %v1144, %v1470
        %v1472 = vpop.f32.mrb[0].mxu0
        %v1473 = vadd.f32 %v1148, %v1472
        %1474 = vdwg.mxu0
        %v1475 = vmax.f32 %v1220, 0.0
        %v1476 = vmax.f32 %v1222, 0.0
        %v1477 = vmax.f32 %v1381, 0.0
        %v1478 = vmax.f32 %v1383, 0.0
        %v1479 = vmax.f32 %v1226, 0.0
        %v1480 = vmax.f32 %v1228, 0.0
        %v1481 = vmax.f32 %v1387, 0.0
        %v1482 = vmax.f32 %v1389, 0.0
        %v1483 = vmax.f32 %v1232, 0.0
        %v1484 = vmax.f32 %v1234, 0.0
        %v1485 = vmax.f32 %v1393, 0.0
        %v1486 = vmax.f32 %v1395, 0.0
        %v1487 = vmax.f32 %v1238, 0.0
        %v1488 = vmax.f32 %v1240, 0.0
        %v1489 = vmax.f32 %v1399, 0.0
        %v1490 = vmax.f32 %v1401, 0.0
        %v1491 = vmax.f32 %v1244, 0.0
        %v1492 = vmax.f32 %v1246, 0.0
        %v1493 = vmax.f32 %v1405, 0.0
        %v1494 = vmax.f32 %v1407, 0.0
        %v1495 = vmax.f32 %v1250, 0.0
        %v1496 = vmax.f32 %v1252, 0.0
        %v1497 = vmax.f32 %v1411, 0.0
        %v1498 = vmax.f32 %v1413, 0.0
        %v1499 = vmax.f32 %v1256, 0.0
        %v1500 = vmax.f32 %v1258, 0.0
        %v1501 = vmax.f32 %v1417, 0.0
        %v1502 = vmax.f32 %v1419, 0.0
        %v1503 = vmax.f32 %v1262, 0.0
        %v1504 = vmax.f32 %v1264, 0.0
        %v1505 = vmax.f32 %v1423, 0.0
        %v1506 = vmax.f32 %v1425, 0.0
        %v1507 = vmax.f32 %v1268, 0.0
        %v1508 = vmax.f32 %v1270, 0.0
        %v1509 = vmax.f32 %v1429, 0.0
        %v1510 = vmax.f32 %v1431, 0.0
        %v1511 = vmax.f32 %v1274, 0.0
        %v1512 = vmax.f32 %v1276, 0.0
        %v1513 = vmax.f32 %v1435, 0.0
        %v1514 = vmax.f32 %v1437, 0.0
        %v1515 = vmax.f32 %v1280, 0.0
        %v1516 = vmax.f32 %v1282, 0.0
        %v1517 = vmax.f32 %v1441, 0.0
        %v1518 = vmax.f32 %v1443, 0.0
        %v1519 = vmax.f32 %v1286, 0.0
        %v1520 = vmax.f32 %v1288, 0.0
        %v1521 = vmax.f32 %v1447, 0.0
        %v1522 = vmax.f32 %v1449, 0.0
        %v1523 = vmax.f32 %v1292, 0.0
        %v1524 = vmax.f32 %v1294, 0.0
        %v1525 = vmax.f32 %v1453, 0.0
        %v1526 = vmax.f32 %v1455, 0.0
        %v1527 = vmax.f32 %v1298, 0.0
        %v1528 = vmax.f32 %v1300, 0.0
        %v1529 = vmax.f32 %v1459, 0.0
        %v1530 = vmax.f32 %v1461, 0.0
        %v1531 = vmax.f32 %v1304, 0.0
        %v1532 = vmax.f32 %v1306, 0.0
        %v1533 = vmax.f32 %v1465, 0.0
        %v1534 = vmax.f32 %v1467, 0.0
        %v1535 = vmax.f32 %v1310, 0.0
        %v1536 = vmax.f32 %v1312, 0.0
        %v1537 = vmax.f32 %v1471, 0.0
        %v1538 = vmax.f32 %v1473, 0.0
        %v1539 = vld [vmem:[#allocation4] sm:$0xff]
        %v1540 = vld [vmem:[#allocation4 + $0x8] sm:$0xff]
        %v1541 = vld [vmem:[#allocation4 + $0x10] sm:$0xff]
        %v1542 = vld [vmem:[#allocation4 + $0x18] sm:$0xff]
        %v1543 = vld [vmem:[#allocation4 + $0x20] sm:$0xff]
        %v1544 = vld [vmem:[#allocation4 + $0x28] sm:$0xff]
        %v1545 = vld [vmem:[#allocation4 + $0x30] sm:$0xff]
        %v1546 = vld [vmem:[#allocation4 + $0x38] sm:$0xff]
        %v1547 = vld [vmem:[#allocation4 + $0x40] sm:$0xff]
        %v1548 = vld [vmem:[#allocation4 + $0x48] sm:$0xff]
        %v1549 = vld [vmem:[#allocation4 + $0x50] sm:$0xff]
        %v1550 = vld [vmem:[#allocation4 + $0x58] sm:$0xff]
        %v1551 = vld [vmem:[#allocation4 + $0x60] sm:$0xff]
        %v1552 = vld [vmem:[#allocation4 + $0x68] sm:$0xff]
        %v1553 = vld [vmem:[#allocation4 + $0x70] sm:$0xff]
        %v1554 = vld [vmem:[#allocation4 + $0x78] sm:$0xff]
        %v1555 = vld [vmem:[#allocation13] sm:$0xff]
        %v1556 = vld [vmem:[#allocation13 + $0x8] sm:$0xff]
        %v1557 = vld [vmem:[#allocation13 + $0x10] sm:$0xff]
        %v1558 = vld [vmem:[#allocation13 + $0x18] sm:$0xff]
        %v1559 = vld [vmem:[#allocation13 + $0x20] sm:$0xff]
        %v1560 = vld [vmem:[#allocation13 + $0x28] sm:$0xff]
        %v1561 = vld [vmem:[#allocation13 + $0x30] sm:$0xff]
        %v1562 = vld [vmem:[#allocation13 + $0x38] sm:$0xff]
        %v1563 = vld [vmem:[#allocation13 + $0x40] sm:$0xff]
        %v1564 = vld [vmem:[#allocation13 + $0x48] sm:$0xff]
        %v1565 = vld [vmem:[#allocation13 + $0x50] sm:$0xff]
        %v1566 = vld [vmem:[#allocation13 + $0x58] sm:$0xff]
        %v1567 = vld [vmem:[#allocation13 + $0x60] sm:$0xff]
        %v1568 = vld [vmem:[#allocation13 + $0x68] sm:$0xff]
        %v1569 = vld [vmem:[#allocation13 + $0x70] sm:$0xff]
        %v1570 = vld [vmem:[#allocation13 + $0x78] sm:$0xff]
        %v1571 = vld [vmem:[#allocation13 + $0x80] sm:$0xff]
        %v1572 = vld [vmem:[#allocation13 + $0x88] sm:$0xff]
        %v1573 = vld [vmem:[#allocation13 + $0x90] sm:$0xff]
        %v1574 = vld [vmem:[#allocation13 + $0x98] sm:$0xff]
        %v1575 = vld [vmem:[#allocation13 + $0xa0] sm:$0xff]
        %v1576 = vld [vmem:[#allocation13 + $0xa8] sm:$0xff]
        %v1577 = vld [vmem:[#allocation13 + $0xb0] sm:$0xff]
        %v1578 = vld [vmem:[#allocation13 + $0xb8] sm:$0xff]
        %v1579 = vld [vmem:[#allocation13 + $0xc0] sm:$0xff]
        %v1580 = vld [vmem:[#allocation13 + $0xc8] sm:$0xff]
        %v1581 = vld [vmem:[#allocation13 + $0xd0] sm:$0xff]
        %v1582 = vld [vmem:[#allocation13 + $0xd8] sm:$0xff]
        %v1583 = vld [vmem:[#allocation13 + $0xe0] sm:$0xff]
        %v1584 = vld [vmem:[#allocation13 + $0xe8] sm:$0xff]
        %v1585 = vld [vmem:[#allocation13 + $0xf0] sm:$0xff]
        %v1586 = vld [vmem:[#allocation13 + $0xf8] sm:$0xff]
        %v1587 = vld [vmem:[#allocation13 + $0x100] sm:$0xff]
        %v1588 = vld [vmem:[#allocation13 + $0x108] sm:$0xff]
        %v1589 = vld [vmem:[#allocation13 + $0x110] sm:$0xff]
        %v1590 = vld [vmem:[#allocation13 + $0x118] sm:$0xff]
        %v1591 = vld [vmem:[#allocation13 + $0x120] sm:$0xff]
        %v1592 = vld [vmem:[#allocation13 + $0x128] sm:$0xff]
        %v1593 = vld [vmem:[#allocation13 + $0x130] sm:$0xff]
        %v1594 = vld [vmem:[#allocation13 + $0x138] sm:$0xff]
        %v1595 = vld [vmem:[#allocation13 + $0x140] sm:$0xff]
        %v1596 = vld [vmem:[#allocation13 + $0x148] sm:$0xff]
        %v1597 = vld [vmem:[#allocation13 + $0x150] sm:$0xff]
        %v1598 = vld [vmem:[#allocation13 + $0x158] sm:$0xff]
        %v1599 = vld [vmem:[#allocation13 + $0x160] sm:$0xff]
        %v1600 = vld [vmem:[#allocation13 + $0x168] sm:$0xff]
        %v1601 = vld [vmem:[#allocation13 + $0x170] sm:$0xff]
        %v1602 = vld [vmem:[#allocation13 + $0x178] sm:$0xff]
        %v1603 = vld [vmem:[#allocation13 + $0x180] sm:$0xff]
        %v1604 = vld [vmem:[#allocation13 + $0x188] sm:$0xff]
        %v1605 = vld [vmem:[#allocation13 + $0x190] sm:$0xff]
        %v1606 = vld [vmem:[#allocation13 + $0x198] sm:$0xff]
        %v1607 = vld [vmem:[#allocation13 + $0x1a0] sm:$0xff]
        %v1608 = vld [vmem:[#allocation13 + $0x1a8] sm:$0xff]
        %v1609 = vld [vmem:[#allocation13 + $0x1b0] sm:$0xff]
        %v1610 = vld [vmem:[#allocation13 + $0x1b8] sm:$0xff]
        %v1611 = vld [vmem:[#allocation13 + $0x1c0] sm:$0xff]
        %v1612 = vld [vmem:[#allocation13 + $0x1c8] sm:$0xff]
        %v1613 = vld [vmem:[#allocation13 + $0x1d0] sm:$0xff]
        %v1614 = vld [vmem:[#allocation13 + $0x1d8] sm:$0xff]
        %v1615 = vld [vmem:[#allocation13 + $0x1e0] sm:$0xff]
        %v1616 = vld [vmem:[#allocation13 + $0x1e8] sm:$0xff]
        %v1617 = vld [vmem:[#allocation13 + $0x1f0] sm:$0xff]
        %v1618 = vld [vmem:[#allocation13 + $0x1f8] sm:$0xff]
        %1619 = vmatprep.subr.mxu0 0.0
        %1620 = vmatpush1.msra.mxu0 %v1555
        %1621 = vmatprep.subr.mxu0 0.0
        %1622 = vmatpush1.msra.mxu0 %v1556
        %1623 = vmatprep.subr.mxu0 0.0
        %1624 = vmatpush1.msra.mxu0 %v1557
        %1625 = vmatprep.subr.mxu0 0.0
        %1626 = vmatpush1.msra.mxu0 %v1558
        %1627 = vmatprep.subr.mxu0 0.0
        %1628 = vmatpush1.msra.mxu0 %v1559
        %1629 = vmatprep.subr.mxu0 0.0
        %1630 = vmatpush1.msra.mxu0 %v1560
        %1631 = vmatprep.subr.mxu0 0.0
        %1632 = vmatpush1.msra.mxu0 %v1561
        %1633 = vmatprep.subr.mxu0 0.0
        %1634 = vmatpush1.msra.mxu0 %v1562
        %1635 = vmatprep.subr.mxu0 0.0
        %1636 = vmatpush1.msra.mxu0 %v1563
        %1637 = vmatprep.subr.mxu0 0.0
        %1638 = vmatpush1.msra.mxu0 %v1564
        %1639 = vmatprep.subr.mxu0 0.0
        %1640 = vmatpush1.msra.mxu0 %v1565
        %1641 = vmatprep.subr.mxu0 0.0
        %1642 = vmatpush1.msra.mxu0 %v1566
        %1643 = vmatprep.subr.mxu0 0.0
        %1644 = vmatpush1.msra.mxu0 %v1567
        %1645 = vmatprep.subr.mxu0 0.0
        %1646 = vmatpush1.msra.mxu0 %v1568
        %1647 = vmatprep.subr.mxu0 0.0
        %1648 = vmatpush1.msra.mxu0 %v1569
        %1649 = vmatprep.subr.mxu0 0.0
        %1650 = vmatpush1.msra.mxu0 %v1570
        %1651 = vmatprep.subr.mxu0 0.0
        %1652 = vmatpush1.msra.mxu0 %v1571
        %1653 = vmatprep.subr.mxu0 0.0
        %1654 = vmatpush1.msra.mxu0 %v1572
        %1655 = vmatprep.subr.mxu0 0.0
        %1656 = vmatpush1.msra.mxu0 %v1573
        %1657 = vmatprep.subr.mxu0 0.0
        %1658 = vmatpush1.msra.mxu0 %v1574
        %1659 = vmatprep.subr.mxu0 0.0
        %1660 = vmatpush1.msra.mxu0 %v1575
        %1661 = vmatprep.subr.mxu0 0.0
        %1662 = vmatpush1.msra.mxu0 %v1576
        %1663 = vmatprep.subr.mxu0 0.0
        %1664 = vmatpush1.msra.mxu0 %v1577
        %1665 = vmatprep.subr.mxu0 0.0
        %1666 = vmatpush1.msra.mxu0 %v1578
        %1667 = vmatprep.subr.mxu0 0.0
        %1668 = vmatpush1.msra.mxu0 %v1579
        %1669 = vmatprep.subr.mxu0 0.0
        %1670 = vmatpush1.msra.mxu0 %v1580
        %1671 = vmatprep.subr.mxu0 0.0
        %1672 = vmatpush1.msra.mxu0 %v1581
        %1673 = vmatprep.subr.mxu0 0.0
        %1674 = vmatpush1.msra.mxu0 %v1582
        %1675 = vmatprep.subr.mxu0 0.0
        %1676 = vmatpush1.msra.mxu0 %v1583
        %1677 = vmatprep.subr.mxu0 0.0
        %1678 = vmatpush1.msra.mxu0 %v1584
        %1679 = vmatprep.subr.mxu0 0.0
        %1680 = vmatpush1.msra.mxu0 %v1585
        %1681 = vmatprep.subr.mxu0 0.0
        %1682 = vmatpush1.msra.mxu0 %v1586
        %1683 = vmatprep.mubr.f32.mxu0 %v1476
        %1684 = vmatmul.mubr.f32.gmra.mrb[0].mxu0 %v1475
        %v1685 = vpop.f32.mrb[0].mxu0
        %v1686 = vadd.f32 0.0, %v1685
        %v1687 = vpop.f32.mrb[0].mxu0
        %1688 = vmatprep.mubr.f32.mxu0 %v1480
        %1689 = vmatmul.mubr.f32.gmra.mrb[0].mxu0 %v1479
        %v1690 = vpop.f32.mrb[0].mxu0
        %v1691 = vadd.f32 0.0, %v1690
        %v1692 = vpop.f32.mrb[0].mxu0
        %1693 = vmatprep.mubr.f32.mxu0 %v1484
        %1694 = vmatmul.mubr.f32.gmra.mrb[0].mxu0 %v1483
        %v1695 = vpop.f32.mrb[0].mxu0
        %v1696 = vadd.f32 0.0, %v1695
        %v1697 = vpop.f32.mrb[0].mxu0
        %1698 = vmatprep.mubr.f32.mxu0 %v1488
        %1699 = vmatmul.mubr.f32.gmra.mrb[0].mxu0 %v1487
        %v1700 = vpop.f32.mrb[0].mxu0
        %v1701 = vadd.f32 0.0, %v1700
        %v1702 = vpop.f32.mrb[0].mxu0
        %1703 = vmatprep.mubr.f32.mxu0 %v1492
        %1704 = vmatmul.mubr.f32.gmra.mrb[0].mxu0 %v1491
        %v1705 = vpop.f32.mrb[0].mxu0
        %v1706 = vadd.f32 0.0, %v1705
        %v1707 = vpop.f32.mrb[0].mxu0
        %1708 = vmatprep.mubr.f32.mxu0 %v1496
        %1709 = vmatmul.mubr.f32.gmra.mrb[0].mxu0 %v1495
        %v1710 = vpop.f32.mrb[0].mxu0
        %v1711 = vadd.f32 0.0, %v1710
        %v1712 = vpop.f32.mrb[0].mxu0
        %1713 = vmatprep.mubr.f32.mxu0 %v1500
        %1714 = vmatmul.mubr.f32.gmra.mrb[0].mxu0 %v1499
        %v1715 = vpop.f32.mrb[0].mxu0
        %v1716 = vadd.f32 0.0, %v1715
        %v1717 = vpop.f32.mrb[0].mxu0
        %1718 = vmatprep.mubr.f32.mxu0 %v1504
        %1719 = vmatmul.mubr.f32.gmra.mrb[0].mxu0 %v1503
        %v1720 = vpop.f32.mrb[0].mxu0
        %v1721 = vadd.f32 0.0, %v1720
        %v1722 = vpop.f32.mrb[0].mxu0
        %1723 = vmatprep.mubr.f32.mxu0 %v1508
        %1724 = vmatmul.mubr.f32.gmra.mrb[0].mxu0 %v1507
        %v1725 = vpop.f32.mrb[0].mxu0
        %v1726 = vadd.f32 0.0, %v1725
        %v1727 = vpop.f32.mrb[0].mxu0
        %1728 = vmatprep.mubr.f32.mxu0 %v1512
        %1729 = vmatmul.mubr.f32.gmra.mrb[0].mxu0 %v1511
        %v1730 = vpop.f32.mrb[0].mxu0
        %v1731 = vadd.f32 0.0, %v1730
        %v1732 = vpop.f32.mrb[0].mxu0
        %1733 = vmatprep.mubr.f32.mxu0 %v1516
        %1734 = vmatmul.mubr.f32.gmra.mrb[0].mxu0 %v1515
        %v1735 = vpop.f32.mrb[0].mxu0
        %v1736 = vadd.f32 0.0, %v1735
        %v1737 = vpop.f32.mrb[0].mxu0
        %1738 = vmatprep.mubr.f32.mxu0 %v1520
        %1739 = vmatmul.mubr.f32.gmra.mrb[0].mxu0 %v1519
        %v1740 = vpop.f32.mrb[0].mxu0
        %v1741 = vadd.f32 0.0, %v1740
        %v1742 = vpop.f32.mrb[0].mxu0
        %1743 = vmatprep.mubr.f32.mxu0 %v1524
        %1744 = vmatmul.mubr.f32.gmra.mrb[0].mxu0 %v1523
        %v1745 = vpop.f32.mrb[0].mxu0
        %v1746 = vadd.f32 0.0, %v1745
        %v1747 = vpop.f32.mrb[0].mxu0
        %1748 = vmatprep.mubr.f32.mxu0 %v1528
        %1749 = vmatmul.mubr.f32.gmra.mrb[0].mxu0 %v1527
        %v1750 = vpop.f32.mrb[0].mxu0
        %v1751 = vadd.f32 0.0, %v1750
        %v1752 = vpop.f32.mrb[0].mxu0
        %1753 = vmatprep.mubr.f32.mxu0 %v1532
        %1754 = vmatmul.mubr.f32.gmra.mrb[0].mxu0 %v1531
        %v1755 = vpop.f32.mrb[0].mxu0
        %v1756 = vadd.f32 0.0, %v1755
        %v1757 = vpop.f32.mrb[0].mxu0
        %1758 = vmatprep.mubr.f32.mxu0 %v1536
        %1759 = vmatmul.mubr.f32.gmra.mrb[0].mxu0 %v1535
        %v1760 = vpop.f32.mrb[0].mxu0
        %v1761 = vadd.f32 0.0, %v1760
        %v1762 = vpop.f32.mrb[0].mxu0
        %1763 = vdwg.mxu0
        %1764 = vmatprep.subr.mxu0 0.0
        %1765 = vmatpush1.msra.mxu0 %v1587
        %1766 = vmatprep.subr.mxu0 0.0
        %1767 = vmatpush1.msra.mxu0 %v1588
        %1768 = vmatprep.subr.mxu0 0.0
        %1769 = vmatpush1.msra.mxu0 %v1589
        %1770 = vmatprep.subr.mxu0 0.0
        %1771 = vmatpush1.msra.mxu0 %v1590
        %1772 = vmatprep.subr.mxu0 0.0
        %1773 = vmatpush1.msra.mxu0 %v1591
        %1774 = vmatprep.subr.mxu0 0.0
        %1775 = vmatpush1.msra.mxu0 %v1592
        %1776 = vmatprep.subr.mxu0 0.0
        %1777 = vmatpush1.msra.mxu0 %v1593
        %1778 = vmatprep.subr.mxu0 0.0
        %1779 = vmatpush1.msra.mxu0 %v1594
        %1780 = vmatprep.subr.mxu0 0.0
        %1781 = vmatpush1.msra.mxu0 %v1595
        %1782 = vmatprep.subr.mxu0 0.0
        %1783 = vmatpush1.msra.mxu0 %v1596
        %1784 = vmatprep.subr.mxu0 0.0
        %1785 = vmatpush1.msra.mxu0 %v1597
        %1786 = vmatprep.subr.mxu0 0.0
        %1787 = vmatpush1.msra.mxu0 %v1598
        %1788 = vmatprep.subr.mxu0 0.0
        %1789 = vmatpush1.msra.mxu0 %v1599
        %1790 = vmatprep.subr.mxu0 0.0
        %1791 = vmatpush1.msra.mxu0 %v1600
        %1792 = vmatprep.subr.mxu0 0.0
        %1793 = vmatpush1.msra.mxu0 %v1601
        %1794 = vmatprep.subr.mxu0 0.0
        %1795 = vmatpush1.msra.mxu0 %v1602
        %1796 = vmatprep.subr.mxu0 0.0
        %1797 = vmatpush1.msra.mxu0 %v1603
        %1798 = vmatprep.subr.mxu0 0.0
        %1799 = vmatpush1.msra.mxu0 %v1604
        %1800 = vmatprep.subr.mxu0 0.0
        %1801 = vmatpush1.msra.mxu0 %v1605
        %1802 = vmatprep.subr.mxu0 0.0
        %1803 = vmatpush1.msra.mxu0 %v1606
        %1804 = vmatprep.subr.mxu0 0.0
        %1805 = vmatpush1.msra.mxu0 %v1607
        %1806 = vmatprep.subr.mxu0 0.0
        %1807 = vmatpush1.msra.mxu0 %v1608
        %1808 = vmatprep.subr.mxu0 0.0
        %1809 = vmatpush1.msra.mxu0 %v1609
        %1810 = vmatprep.subr.mxu0 0.0
        %1811 = vmatpush1.msra.mxu0 %v1610
        %1812 = vmatprep.subr.mxu0 0.0
        %1813 = vmatpush1.msra.mxu0 %v1611
        %1814 = vmatprep.subr.mxu0 0.0
        %1815 = vmatpush1.msra.mxu0 %v1612
        %1816 = vmatprep.subr.mxu0 0.0
        %1817 = vmatpush1.msra.mxu0 %v1613
        %1818 = vmatprep.subr.mxu0 0.0
        %1819 = vmatpush1.msra.mxu0 %v1614
        %1820 = vmatprep.subr.mxu0 0.0
        %1821 = vmatpush1.msra.mxu0 %v1615
        %1822 = vmatprep.subr.mxu0 0.0
        %1823 = vmatpush1.msra.mxu0 %v1616
        %1824 = vmatprep.subr.mxu0 0.0
        %1825 = vmatpush1.msra.mxu0 %v1617
        %1826 = vmatprep.subr.mxu0 0.0
        %1827 = vmatpush1.msra.mxu0 %v1618
        %1828 = vmatprep.mubr.f32.mxu0 %v1478
        %1829 = vmatmul.mubr.f32.gmra.mrb[0].mxu0 %v1477
        %v1830 = vpop.f32.mrb[0].mxu0
        %v1831 = vadd.f32 %v1686, %v1830
        %v1832 = vpop.f32.mrb[0].mxu0
        %1833 = vmatprep.mubr.f32.mxu0 %v1482
        %1834 = vmatmul.mubr.f32.gmra.mrb[0].mxu0 %v1481
        %v1835 = vpop.f32.mrb[0].mxu0
        %v1836 = vadd.f32 %v1691, %v1835
        %v1837 = vpop.f32.mrb[0].mxu0
        %1838 = vmatprep.mubr.f32.mxu0 %v1486
        %1839 = vmatmul.mubr.f32.gmra.mrb[0].mxu0 %v1485
        %v1840 = vpop.f32.mrb[0].mxu0
        %v1841 = vadd.f32 %v1696, %v1840
        %v1842 = vpop.f32.mrb[0].mxu0
        %1843 = vmatprep.mubr.f32.mxu0 %v1490
        %1844 = vmatmul.mubr.f32.gmra.mrb[0].mxu0 %v1489
        %v1845 = vpop.f32.mrb[0].mxu0
        %v1846 = vadd.f32 %v1701, %v1845
        %v1847 = vpop.f32.mrb[0].mxu0
        %1848 = vmatprep.mubr.f32.mxu0 %v1494
        %1849 = vmatmul.mubr.f32.gmra.mrb[0].mxu0 %v1493
        %v1850 = vpop.f32.mrb[0].mxu0
        %v1851 = vadd.f32 %v1706, %v1850
        %v1852 = vpop.f32.mrb[0].mxu0
        %1853 = vmatprep.mubr.f32.mxu0 %v1498
        %1854 = vmatmul.mubr.f32.gmra.mrb[0].mxu0 %v1497
        %v1855 = vpop.f32.mrb[0].mxu0
        %v1856 = vadd.f32 %v1711, %v1855
        %v1857 = vpop.f32.mrb[0].mxu0
        %1858 = vmatprep.mubr.f32.mxu0 %v1502
        %1859 = vmatmul.mubr.f32.gmra.mrb[0].mxu0 %v1501
        %v1860 = vpop.f32.mrb[0].mxu0
        %v1861 = vadd.f32 %v1716, %v1860
        %v1862 = vpop.f32.mrb[0].mxu0
        %1863 = vmatprep.mubr.f32.mxu0 %v1506
        %1864 = vmatmul.mubr.f32.gmra.mrb[0].mxu0 %v1505
        %v1865 = vpop.f32.mrb[0].mxu0
        %v1866 = vadd.f32 %v1721, %v1865
        %v1867 = vpop.f32.mrb[0].mxu0
        %1868 = vmatprep.mubr.f32.mxu0 %v1510
        %1869 = vmatmul.mubr.f32.gmra.mrb[0].mxu0 %v1509
        %v1870 = vpop.f32.mrb[0].mxu0
        %v1871 = vadd.f32 %v1726, %v1870
        %v1872 = vpop.f32.mrb[0].mxu0
        %1873 = vmatprep.mubr.f32.mxu0 %v1514
        %1874 = vmatmul.mubr.f32.gmra.mrb[0].mxu0 %v1513
        %v1875 = vpop.f32.mrb[0].mxu0
        %v1876 = vadd.f32 %v1731, %v1875
        %v1877 = vpop.f32.mrb[0].mxu0
        %1878 = vmatprep.mubr.f32.mxu0 %v1518
        %1879 = vmatmul.mubr.f32.gmra.mrb[0].mxu0 %v1517
        %v1880 = vpop.f32.mrb[0].mxu0
        %v1881 = vadd.f32 %v1736, %v1880
        %v1882 = vpop.f32.mrb[0].mxu0
        %1883 = vmatprep.mubr.f32.mxu0 %v1522
        %1884 = vmatmul.mubr.f32.gmra.mrb[0].mxu0 %v1521
        %v1885 = vpop.f32.mrb[0].mxu0
        %v1886 = vadd.f32 %v1741, %v1885
        %v1887 = vpop.f32.mrb[0].mxu0
        %1888 = vmatprep.mubr.f32.mxu0 %v1526
        %1889 = vmatmul.mubr.f32.gmra.mrb[0].mxu0 %v1525
        %v1890 = vpop.f32.mrb[0].mxu0
        %v1891 = vadd.f32 %v1746, %v1890
        %v1892 = vpop.f32.mrb[0].mxu0
        %1893 = vmatprep.mubr.f32.mxu0 %v1530
        %1894 = vmatmul.mubr.f32.gmra.mrb[0].mxu0 %v1529
        %v1895 = vpop.f32.mrb[0].mxu0
        %v1896 = vadd.f32 %v1751, %v1895
        %v1897 = vpop.f32.mrb[0].mxu0
        %1898 = vmatprep.mubr.f32.mxu0 %v1534
        %1899 = vmatmul.mubr.f32.gmra.mrb[0].mxu0 %v1533
        %v1900 = vpop.f32.mrb[0].mxu0
        %v1901 = vadd.f32 %v1756, %v1900
        %v1902 = vpop.f32.mrb[0].mxu0
        %1903 = vmatprep.mubr.f32.mxu0 %v1538
        %1904 = vmatmul.mubr.f32.gmra.mrb[0].mxu0 %v1537
        %v1905 = vpop.f32.mrb[0].mxu0
        %v1906 = vadd.f32 %v1761, %v1905
        %v1907 = vpop.f32.mrb[0].mxu0
        %1908 = vdwg.mxu0
        %v1909 = vadd.f32 %v1539, %v1831
        %v1910 = vadd.f32 %v1540, %v1836
        %v1911 = vadd.f32 %v1541, %v1841
        %v1912 = vadd.f32 %v1542, %v1846
        %v1913 = vadd.f32 %v1543, %v1851
        %v1914 = vadd.f32 %v1544, %v1856
        %v1915 = vadd.f32 %v1545, %v1861
        %v1916 = vadd.f32 %v1546, %v1866
        %v1917 = vadd.f32 %v1547, %v1871
        %v1918 = vadd.f32 %v1548, %v1876
        %v1919 = vadd.f32 %v1549, %v1881
        %v1920 = vadd.f32 %v1550, %v1886
        %v1921 = vadd.f32 %v1551, %v1891
        %v1922 = vadd.f32 %v1552, %v1896
        %v1923 = vadd.f32 %v1553, %v1901
        %v1924 = vadd.f32 %v1554, %v1906
        %1925 = vst [vmem:[#allocation4] sm:$0xff] %v1909
        %1926 = vst [vmem:[#allocation4 + $0x8] sm:$0xff] %v1910
        %1927 = vst [vmem:[#allocation4 + $0x10] sm:$0xff] %v1911
        %1928 = vst [vmem:[#allocation4 + $0x18] sm:$0xff] %v1912
        %1929 = vst [vmem:[#allocation4 + $0x20] sm:$0xff] %v1913
        %1930 = vst [vmem:[#allocation4 + $0x28] sm:$0xff] %v1914
        %1931 = vst [vmem:[#allocation4 + $0x30] sm:$0xff] %v1915
        %1932 = vst [vmem:[#allocation4 + $0x38] sm:$0xff] %v1916
        %1933 = vst [vmem:[#allocation4 + $0x40] sm:$0xff] %v1917
        %1934 = vst [vmem:[#allocation4 + $0x48] sm:$0xff] %v1918
        %1935 = vst [vmem:[#allocation4 + $0x50] sm:$0xff] %v1919
        %1936 = vst [vmem:[#allocation4 + $0x58] sm:$0xff] %v1920
        %1937 = vst [vmem:[#allocation4 + $0x60] sm:$0xff] %v1921
        %1938 = vst [vmem:[#allocation4 + $0x68] sm:$0xff] %v1922
        %1939 = vst [vmem:[#allocation4 + $0x70] sm:$0xff] %v1923
        %1940 = vst [vmem:[#allocation4 + $0x78] sm:$0xff] %v1924
        // Predicated region
        $region85: #{tpu_custom_call.1} parent=59 // pred_check
          %p1941 = pneg %p513
        $region86: #{tpu_custom_call.1} parent=59 // pred_check_branch
          %1943 = sbr.rel (%p1941) target = $region88
        $region87: #{tpu_custom_call.1} parent=59 // pred_region
          %v1944 = vld [vmem:[#allocation2] sm:$0xff]
          %v1945 = vld [vmem:[#allocation2 + $0x8] sm:$0xff]
          %v1946 = vld [vmem:[#allocation2 + $0x10] sm:$0xff]
          %v1947 = vld [vmem:[#allocation2 + $0x18] sm:$0xff]
          %v1948 = vld [vmem:[#allocation2 + $0x20] sm:$0xff]
          %v1949 = vld [vmem:[#allocation2 + $0x28] sm:$0xff]
          %v1950 = vld [vmem:[#allocation2 + $0x30] sm:$0xff]
          %v1951 = vld [vmem:[#allocation2 + $0x38] sm:$0xff]
          %v1952 = vld [vmem:[#allocation2 + $0x40] sm:$0xff]
          %v1953 = vld [vmem:[#allocation2 + $0x48] sm:$0xff]
          %v1954 = vld [vmem:[#allocation2 + $0x50] sm:$0xff]
          %v1955 = vld [vmem:[#allocation2 + $0x58] sm:$0xff]
          %v1956 = vld [vmem:[#allocation2 + $0x60] sm:$0xff]
          %v1957 = vld [vmem:[#allocation2 + $0x68] sm:$0xff]
          %v1958 = vld [vmem:[#allocation2 + $0x70] sm:$0xff]
          %v1959 = vld [vmem:[#allocation2 + $0x78] sm:$0xff]
          %v1960 = vld [vmem:[#allocation4] sm:$0xff]
          %v1961 = vld [vmem:[#allocation4 + $0x8] sm:$0xff]
          %v1962 = vld [vmem:[#allocation4 + $0x10] sm:$0xff]
          %v1963 = vld [vmem:[#allocation4 + $0x18] sm:$0xff]
          %v1964 = vld [vmem:[#allocation4 + $0x20] sm:$0xff]
          %v1965 = vld [vmem:[#allocation4 + $0x28] sm:$0xff]
          %v1966 = vld [vmem:[#allocation4 + $0x30] sm:$0xff]
          %v1967 = vld [vmem:[#allocation4 + $0x38] sm:$0xff]
          %v1968 = vld [vmem:[#allocation4 + $0x40] sm:$0xff]
          %v1969 = vld [vmem:[#allocation4 + $0x48] sm:$0xff]
          %v1970 = vld [vmem:[#allocation4 + $0x50] sm:$0xff]
          %v1971 = vld [vmem:[#allocation4 + $0x58] sm:$0xff]
          %v1972 = vld [vmem:[#allocation4 + $0x60] sm:$0xff]
          %v1973 = vld [vmem:[#allocation4 + $0x68] sm:$0xff]
          %v1974 = vld [vmem:[#allocation4 + $0x70] sm:$0xff]
          %v1975 = vld [vmem:[#allocation4 + $0x78] sm:$0xff]
          %v1976 = vadd.f32 %v1944, %v1960
          %v1977 = vadd.f32 %v1945, %v1961
          %v1978 = vadd.f32 %v1946, %v1962
          %v1979 = vadd.f32 %v1947, %v1963
          %v1980 = vadd.f32 %v1948, %v1964
          %v1981 = vadd.f32 %v1949, %v1965
          %v1982 = vadd.f32 %v1950, %v1966
          %v1983 = vadd.f32 %v1951, %v1967
          %v1984 = vadd.f32 %v1952, %v1968
          %v1985 = vadd.f32 %v1953, %v1969
          %v1986 = vadd.f32 %v1954, %v1970
          %v1987 = vadd.f32 %v1955, %v1971
          %v1988 = vadd.f32 %v1956, %v1972
          %v1989 = vadd.f32 %v1957, %v1973
          %v1990 = vadd.f32 %v1958, %v1974
          %v1991 = vadd.f32 %v1959, %v1975
          %v1992 = vld [vmem:[%s9] sm:$0x1]
          %v1994 = vlaneseq
          %v1995 = vshrl.u32 %v1994, 7
          %v1996 = vsub.s32 0, %v1995
          %v1997 = vrot.slane %v1992, %v1996
          %v1999 = vadd.f32 %v1976, %v1997
          %v2000 = vadd.f32 %v1977, %v1997
          %v2001 = vadd.f32 %v1978, %v1997
          %v2002 = vadd.f32 %v1979, %v1997
          %v2003 = vadd.f32 %v1980, %v1997
          %v2004 = vadd.f32 %v1981, %v1997
          %v2005 = vadd.f32 %v1982, %v1997
          %v2006 = vadd.f32 %v1983, %v1997
          %v2007 = vadd.f32 %v1984, %v1997
          %v2008 = vadd.f32 %v1985, %v1997
          %v2009 = vadd.f32 %v1986, %v1997
          %v2010 = vadd.f32 %v1987, %v1997
          %v2011 = vadd.f32 %v1988, %v1997
          %v2012 = vadd.f32 %v1989, %v1997
          %v2013 = vadd.f32 %v1990, %v1997
          %v2014 = vadd.f32 %v1991, %v1997
          %2015 = vst [vmem:[%s502] sm:$0xff] %v1999
          %2016 = vst [vmem:[%s502 + $0x8] sm:$0xff] %v2000
          %2017 = vst [vmem:[%s502 + $0x10] sm:$0xff] %v2001
          %2018 = vst [vmem:[%s502 + $0x18] sm:$0xff] %v2002
          %2019 = vst [vmem:[%s502 + $0x20] sm:$0xff] %v2003
          %2020 = vst [vmem:[%s502 + $0x28] sm:$0xff] %v2004
          %2021 = vst [vmem:[%s502 + $0x30] sm:$0xff] %v2005
          %2022 = vst [vmem:[%s502 + $0x38] sm:$0xff] %v2006
          %2023 = vst [vmem:[%s502 + $0x40] sm:$0xff] %v2007
          %2024 = vst [vmem:[%s502 + $0x48] sm:$0xff] %v2008
          %2025 = vst [vmem:[%s502 + $0x50] sm:$0xff] %v2009
          %2026 = vst [vmem:[%s502 + $0x58] sm:$0xff] %v2010
          %2027 = vst [vmem:[%s502 + $0x60] sm:$0xff] %v2011
          %2028 = vst [vmem:[%s502 + $0x68] sm:$0xff] %v2012
          %2029 = vst [vmem:[%s502 + $0x70] sm:$0xff] %v2013
          %2030 = vst [vmem:[%s502 + $0x78] sm:$0xff] %v2014
        $region88: #{tpu_custom_call.1} parent=59 // pred_fallthru
          _
        %s2031 = sand.u32 %s286, 1
        %s2032 = scalar_lea.sflag [#allocation7], %s2031
        %s2033 = sand.u32 %s286, 1
        %s2034 = smul.addr %s2033, 128
        %s2035 = scalar_lea.vmem [#allocation14], %s2034
        // Predicated region
        $region89: #{tpu_custom_call.1} parent=59 // pred_check
          %p2036 = pneg %p296
        $region90: #{tpu_custom_call.1} parent=59 // pred_check_branch
          %2038 = sbr.rel (%p2036) target = $region92
        $region91: #{tpu_custom_call.1} parent=59 // pred_region
          %s2039 = smul.u32 16, %s35
          %s2041 = ssub.s32 2048, 2048
          %2042 = vsyncadd %s2032, %s2041
          %s2043 = smul.addr %s2039, 128
          %s2044 = scalar_lea.hbm %s10, %s2043
          %s2045 = sshll.u32 %s2035, 4
          %s2046 = int_to_ptr.vmem [resolvable:$true] %s2045
          %2051 = dma.vmem_to_hbm [thread:$0]  %s2046, 2048, %s2044, %s2032, 128, 128, 8
        $region92: #{tpu_custom_call.1} parent=59 // pred_fallthru
          _
      $region60: #{tpu_custom_call.1} parent=5 // pred_fallthru
        _
      %p2052 = scmp.le.s32.totalorder 2, %s26
      // Predicated region
      $region93: #{tpu_custom_call.1} parent=5 // pred_check
        %p2053 = pneg %p2052
      $region94: #{tpu_custom_call.1} parent=5 // pred_check_branch
        %2055 = sbr.rel (%p2053) target = $region96
      $region95: #{tpu_custom_call.1} parent=5 // pred_region
        %s2056 = ssub.s32 %s26, 2
        // Predicated region
        $region97: #{tpu_custom_call.1} parent=95 // pred_check
          %p2057 = pneg %p302
        $region98: #{tpu_custom_call.1} parent=95 // pred_check_branch
          %2059 = sbr.rel (%p2057) target = $region100
        $region99: #{tpu_custom_call.1} parent=95 // pred_region
          %s2060 = sand.u32 %s287, 1
          %s2061 = scalar_lea.sflag [#allocation7], %s2060
          %s2062 = sand.u32 %s287, 1
          %s2063 = smul.addr %s2062, 128
          %s2064 = scalar_lea.vmem [#allocation14], %s2063
          %2065 = dma.done %s2061, 2048
        $region100: #{tpu_custom_call.1} parent=95 // pred_fallthru
          _
      $region96: #{tpu_custom_call.1} parent=5 // pred_fallthru
        _
    $region6: #{tpu_custom_call.1} parent=1 // loop_footer
      %s30 = sadd.s32 1, %s26
    $region7: #{tpu_custom_call.1} parent=1 // loop_footer_branch
      %25 = sbr.rel target = $region3
    $region8: #{tpu_custom_call.1} parent=1 // loop_exit
      _
    %2066 = vsyncpa [#allocation6], 1
    %s2067 = scalar_lea.sflag [#allocation6], 1
    %2068 = vsyncpa %s2067, 1
    %2069 = vsyncpa [#allocation9], 1
    %s2070 = scalar_lea.sflag [#allocation9], 1
    %2071 = vsyncpa %s2070, 1
    %2072 = vsyncpa [#allocation12], 1
    %2073 = vsyncpa [#allocation7], 1
    %s2074 = scalar_lea.sflag [#allocation7], 1
    %2075 = vsyncpa %s2074, 1

</llo_original>
